<compile_context>
chip_gen: v6e
topology: v6e:2x2x1
jax: 0.10.0
libtpu: 0.0.40
codegen_flags: <defaults>
</compile_context>

<pallas_src>
import math
from functools import partial

import jax
import jax.numpy as jnp
import numpy as np
from jax import lax
from jax.experimental import pallas as pl
from jax.experimental.pallas import tpu as pltpu

# ---------------- config ----------------
VOCAB = 64
EMB = 32
N_HEAD = 4
HEAD_DIM = EMB // N_HEAD
FFN = 64
SEQ_LEN = 16          # max sequence length (positional embedding / causal mask)
POS_DIM = 16          # positional embedding added to the first POS_DIM channels
N_LAYER = 2
EPS = 1e-5
V_PAD = 128           # vocab padded to a full 128-lane tile for unmasked stores


def _layernorm(x, gamma, beta):
    # nn.LayerNorm semantics: biased variance over last axis, affine.
    mean = jnp.mean(x, axis=-1, keepdims=True)
    var = jnp.mean(jnp.square(x - mean), axis=-1, keepdims=True)
    return (x - mean) * lax.rsqrt(var + EPS) * gamma + beta


# ---------------- fused Pallas kernel ----------------
def fused_transformer_kernel(
    x_ref,            # (R, E)      activations, R = B * L (batch collapsed to rows)
    mask_ref,         # (R, R)      additive mask: 0 where attend allowed, -1e30 otherwise
    ln1_g_ref, ln1_b_ref,           # (N_LAYER, 1, E)
    wqkv_ref, bqkv_ref,             # (N_LAYER, E, 3E), (N_LAYER, 1, 3E)
    wo_ref, bo_ref,                 # (N_LAYER, H, D, E), (N_LAYER, 1, E)
    ln2_g_ref, ln2_b_ref,           # (N_LAYER, 1, E)
    w1_ref, b1_ref,                 # (N_LAYER, E, F), (N_LAYER, 1, F)
    w2_ref, b2_ref,                 # (N_LAYER, F, E), (N_LAYER, 1, E)
    outg_ref, outb_ref,             # (1, E)
    wv_ref,                         # (E, V_PAD)  weight-tied vocab proj, zero-padded
    out_ref,                        # (R, V_PAD)
):
    x = x_ref[...]                              # (R, E)
    neg_mask = mask_ref[...]                    # (R, R), hoisted out of the layer loop
    scale = 1.0 / math.sqrt(HEAD_DIM)

    for l in range(N_LAYER):                    # static loop: all layers in one launch
        # --- pre-norm (module semantics: x <- norm_1(x); residual from normed x) ---
        xn = _layernorm(x, ln1_g_ref[l], ln1_b_ref[l])

        # --- fused QKV projection (single MXU push) ---
        qkv = jnp.dot(xn, wqkv_ref[l], preferred_element_type=jnp.float32) + bqkv_ref[l]
        q = qkv[:, :EMB] * scale                # fold 1/sqrt(d) into q (E lanes, not L*L)
        k = qkv[:, EMB:2 * EMB]
        v = qkv[:, 2 * EMB:]

        # --- heads batched into single contractions (no per-head matmul loop) ---
        qh = jnp.stack([q[:, h * HEAD_DIM:(h + 1) * HEAD_DIM] for h in range(N_HEAD)])
        kh = jnp.stack([k[:, h * HEAD_DIM:(h + 1) * HEAD_DIM] for h in range(N_HEAD)])
        vh = jnp.stack([v[:, h * HEAD_DIM:(h + 1) * HEAD_DIM] for h in range(N_HEAD)])
        s = jnp.einsum('hld,hmd->hlm', qh, kh,
                       preferred_element_type=jnp.float32)          # (H, R, R)
        s = s + neg_mask                          # block-diag causal mask (broadcast over H)
        s = s - jnp.max(s, axis=-1, keepdims=True)
        p = jnp.exp(s)
        p = p * pl.reciprocal(jnp.sum(p, axis=-1, keepdims=True), approx=True)
        z = jnp.einsum('hlm,hmd->hld', p, vh,
                       preferred_element_type=jnp.float32)          # (H, R, D)

        # --- output projection per head, summed over heads (no lane concat) ---
        att = jnp.einsum('hld,hde->hle', z, wo_ref[l],
                         preferred_element_type=jnp.float32)        # (H, R, E)
        att = jnp.sum(att, axis=0) + bo_ref[l]                      # (R, E)

        res = xn + att

        # --- feed-forward (relu) + residual ---
        h1 = _layernorm(res, ln2_g_ref[l], ln2_b_ref[l])
        h1 = jnp.dot(h1, w1_ref[l], preferred_element_type=jnp.float32) + b1_ref[l]
        h1 = jnp.maximum(h1, 0.0)
        h2 = jnp.dot(h1, w2_ref[l], preferred_element_type=jnp.float32) + b2_ref[l]
        x = res + h2

    # --- output norm + weight-tied vocab projection (lane-dense, padded to 128) ---
    xn = _layernorm(x, outg_ref[...], outb_ref[...])
    out_ref[...] = jnp.dot(xn, wv_ref[...], preferred_element_type=jnp.float32)


# ---------------- wrapper ----------------
def transformer_forward(tokens, params):
    """Full forward pass. Token-embedding gather + positional add are JAX glue;
    everything else (2 blocks + output head) is a single fused Pallas kernel."""
    B, L = tokens.shape
    assert L <= SEQ_LEN

    # Embedding: token lookup + positional embedding on the first POS_DIM channels.
    emb = params["token_emb"][tokens]                                  # (B, L, E)
    emb = emb.at[..., :POS_DIM].add(params["pos_emb"][:L])
    x2d = emb.reshape(B * L, EMB)                                      # collapse (B, L) -> rows

    # Block-diagonal causal additive mask over flattened rows (built once per call).
    idx = jnp.arange(B * L, dtype=jnp.int32)
    bi, si = idx // L, idx % L
    allow = (bi[:, None] == bi[None, :]) & (si[None, :] <= si[:, None])
    neg_mask = jnp.where(allow, 0.0, -1e30).astype(jnp.float32)        # (R, R)

    # Weight-tied vocab projection, zero-padded to 128 lanes for dense stores.
    wv = jnp.zeros((EMB, V_PAD), jnp.float32).at[:, :VOCAB].set(params["token_emb"].T)

    # Single fused pallas_call; whole working set fits in VMEM, so no grid.
    # TODO(synk): for large batches, add a 'parallel' batch-chunk grid axis so both
    # v7x TensorCores get work; unnecessary at this problem size.
    logits = pl.pallas_call(
        fused_transformer_kernel,
        out_shape=jax.ShapeDtypeStruct((B * L, V_PAD), jnp.float32),
        compiler_params=pltpu.CompilerParams(vmem_limit_bytes=32 * 1024 * 1024),
    )(
        x2d, neg_mask,
        params["ln1_g"], params["ln1_b"], params["wqkv"], params["bqkv"],
        params["wo_h"], params["bo"], params["ln2_g"], params["ln2_b"],
        params["w1"], params["b1"], params["w2"], params["b2"],
        params["out_ln_g"], params["out_ln_b"], wv,
    )
    return logits[:, :VOCAB].reshape(B, L, VOCAB)


def init_params(key):
    ks = jax.random.split(key, 12)
    it = iter(ks)
    scale = 0.02

    def rand(shape):
        return scale * jax.random.normal(next(it), shape, jnp.float32)

    p = {}
    p["token_emb"] = rand((VOCAB, EMB))
    p["pos_emb"] = rand((SEQ_LEN, POS_DIM))
    p["out_ln_g"] = jnp.ones((1, EMB), jnp.float32)
    p["out_ln_b"] = jnp.zeros((1, EMB), jnp.float32)
    # per-layer params stacked along a leading N_LAYER axis
    p["ln1_g"] = jnp.ones((N_LAYER, 1, EMB), jnp.float32)
    p["ln1_b"] = jnp.zeros((N_LAYER, 1, EMB), jnp.float32)
    p["wqkv"] = rand((N_LAYER, EMB, 3 * EMB))
    p["bqkv"] = rand((N_LAYER, 1, 3 * EMB))
    p["wo_h"] = rand((N_LAYER, N_HEAD, HEAD_DIM, EMB))   # (E,E) weight split by head rows
    p["bo"] = rand((N_LAYER, 1, EMB))
    p["ln2_g"] = jnp.ones((N_LAYER, 1, EMB), jnp.float32)
    p["ln2_b"] = jnp.zeros((N_LAYER, 1, EMB), jnp.float32)
    p["w1"] = rand((N_LAYER, EMB, FFN))
    p["b1"] = rand((N_LAYER, 1, FFN))
    p["w2"] = rand((N_LAYER, FFN, EMB))
    p["b2"] = rand((N_LAYER, 1, EMB))
    return p


# ---------------- pure-JAX reference (for correctness check) ----------------
def reference_forward(tokens, params):
    B, L = tokens.shape
    out = params["token_emb"][tokens]
    out = out.at[..., :POS_DIM].add(params["pos_emb"][:L])
    causal = jnp.tril(jnp.ones((L, L), bool))
    for l in range(N_LAYER):
        xn = _layernorm(out, params["ln1_g"][l, 0], params["ln1_b"][l, 0])
        qkv = xn @ params["wqkv"][l] + params["bqkv"][l, 0]
        q, k, v = qkv[..., :EMB], qkv[..., EMB:2 * EMB], qkv[..., 2 * EMB:]
        q = q.reshape(B, L, N_HEAD, HEAD_DIM).transpose(0, 2, 1, 3)
        k = k.reshape(B, L, N_HEAD, HEAD_DIM).transpose(0, 2, 1, 3)
        v = v.reshape(B, L, N_HEAD, HEAD_DIM).transpose(0, 2, 1, 3)
        s = jnp.einsum("bhld,bhmd->bhlm", q, k) / math.sqrt(HEAD_DIM)
        s = jnp.where(causal, s, -jnp.inf)
        p_att = jax.nn.softmax(s, axis=-1)
        z = jnp.einsum("bhlm,bhmd->bhld", p_att, v)
        z = z.transpose(0, 2, 1, 3).reshape(B, L, EMB)
        wo = params["wo_h"][l].reshape(EMB, EMB)
        z = z @ wo + params["bo"][l, 0]
        res = xn + z
        h = _layernorm(res, params["ln2_g"][l, 0], params["ln2_b"][l, 0])
        h = jnp.maximum(h @ params["w1"][l] + params["b1"][l, 0], 0.0)
        out = res + h @ params["w2"][l] + params["b2"][l, 0]
    out = _layernorm(out, params["out_ln_g"][0], params["out_ln_b"][0])
    return out @ params["token_emb"].T


if __name__ == "__main__":
    key = jax.random.PRNGKey(0)
    k_tok, k_par = jax.random.split(key)
    B, L = 2, SEQ_LEN
    tokens = jax.random.randint(k_tok, (B, L), 0, VOCAB, dtype=jnp.int32)
    params = init_params(k_par)

    logits = jax.block_until_ready(jax.jit(transformer_forward)(tokens, params))

    ref = jax.block_until_ready(reference_forward(tokens, params))
    # tolerance accounts for the EUP approximate reciprocal in the softmax
    np.testing.assert_allclose(np.asarray(logits), np.asarray(ref), rtol=1e-2, atol=1e-3)
    assert logits.shape == (B, L, VOCAB)
    print("KERNEL_OK")
</pallas_src>

<mosaic_0001>
module attributes {stable_mosaic.version = 11 : i64} {
  func.func @fused_transformer_kernel(%arg0: memref<32x32xf32, #tpu.memory_space<vmem>>, %arg1: memref<32x32xf32, #tpu.memory_space<vmem>>, %arg2: memref<2x1x32xf32, #tpu.memory_space<vmem>>, %arg3: memref<2x1x32xf32, #tpu.memory_space<vmem>>, %arg4: memref<2x32x96xf32, #tpu.memory_space<vmem>>, %arg5: memref<2x1x96xf32, #tpu.memory_space<vmem>>, %arg6: memref<2x4x8x32xf32, #tpu.memory_space<vmem>>, %arg7: memref<2x1x32xf32, #tpu.memory_space<vmem>>, %arg8: memref<2x1x32xf32, #tpu.memory_space<vmem>>, %arg9: memref<2x1x32xf32, #tpu.memory_space<vmem>>, %arg10: memref<2x32x64xf32, #tpu.memory_space<vmem>>, %arg11: memref<2x1x64xf32, #tpu.memory_space<vmem>>, %arg12: memref<2x64x32xf32, #tpu.memory_space<vmem>>, %arg13: memref<2x1x32xf32, #tpu.memory_space<vmem>>, %arg14: memref<1x32xf32, #tpu.memory_space<vmem>>, %arg15: memref<1x32xf32, #tpu.memory_space<vmem>>, %arg16: memref<32x128xf32, #tpu.memory_space<vmem>>, %arg17: memref<32x128xf32, #tpu.memory_space<vmem>>) attributes {dimension_semantics = [], scalar_prefetch = 0 : i64, scratch_operands = 0 : i64, tpu.core_type = #tpu.core_type<tc>} {
    %c0 = arith.constant 0 : index
    %c0_0 = arith.constant 0 : index
    %0 = vector.load %arg0[%c0, %c0_0] : memref<32x32xf32, #tpu.memory_space<vmem>>, vector<32x32xf32>
    %c0_1 = arith.constant 0 : index
    %c0_2 = arith.constant 0 : index
    %1 = vector.load %arg1[%c0_1, %c0_2] : memref<32x32xf32, #tpu.memory_space<vmem>>, vector<32x32xf32>
    %c0_3 = arith.constant 0 : index
    %c0_4 = arith.constant 0 : index
    %c0_5 = arith.constant 0 : index
    %2 = vector.load %arg2[%c0_3, %c0_4, %c0_5] : memref<2x1x32xf32, #tpu.memory_space<vmem>>, vector<1x1x32xf32>
    %3 = vector.shape_cast %2 : vector<1x1x32xf32> to vector<1x32xf32>
    %c0_6 = arith.constant 0 : index
    %c0_7 = arith.constant 0 : index
    %c0_8 = arith.constant 0 : index
    %4 = vector.load %arg3[%c0_6, %c0_7, %c0_8] : memref<2x1x32xf32, #tpu.memory_space<vmem>>, vector<1x1x32xf32>
    %5 = vector.shape_cast %4 : vector<1x1x32xf32> to vector<1x32xf32>
    %cst = arith.constant dense<0.000000e+00> : vector<32xf32>
    %6 = vector.multi_reduction <add>, %0, %cst [1] : vector<32x32xf32> to vector<32xf32>
    %7 = vector.shape_cast %6 : vector<32xf32> to vector<32x1xf32>
    %cst_9 = arith.constant 3.200000e+01 : f32
    %8 = vector.broadcast %cst_9 : f32 to vector<32x1xf32>
    %9 = arith.divf %7, %8 : vector<32x1xf32>
    %10 = vector.broadcast %9 : vector<32x1xf32> to vector<32x32xf32>
    %11 = arith.subf %0, %10 : vector<32x32xf32>
    %12 = arith.mulf %11, %11 : vector<32x32xf32>
    %cst_10 = arith.constant dense<0.000000e+00> : vector<32xf32>
    %13 = vector.multi_reduction <add>, %12, %cst_10 [1] : vector<32x32xf32> to vector<32xf32>
    %14 = vector.shape_cast %13 : vector<32xf32> to vector<32x1xf32>
    %cst_11 = arith.constant 3.200000e+01 : f32
    %15 = vector.broadcast %cst_11 : f32 to vector<32x1xf32>
    %16 = arith.divf %14, %15 : vector<32x1xf32>
    %17 = vector.broadcast %9 : vector<32x1xf32> to vector<32x32xf32>
    %18 = arith.subf %0, %17 : vector<32x32xf32>
    %cst_12 = arith.constant 9.99999974E-6 : f32
    %19 = vector.broadcast %cst_12 : f32 to vector<32x1xf32>
    %20 = arith.addf %16, %19 : vector<32x1xf32>
    %21 = math.rsqrt %20 : vector<32x1xf32>
    %22 = vector.broadcast %21 : vector<32x1xf32> to vector<32x32xf32>
    %23 = arith.mulf %18, %22 : vector<32x32xf32>
    %24 = vector.broadcast %3 : vector<1x32xf32> to vector<32x32xf32>
    %25 = arith.mulf %23, %24 : vector<32x32xf32>
    %26 = vector.broadcast %5 : vector<1x32xf32> to vector<32x32xf32>
    %27 = arith.addf %25, %26 : vector<32x32xf32>
    %c0_13 = arith.constant 0 : index
    %c0_14 = arith.constant 0 : index
    %c0_15 = arith.constant 0 : index
    %28 = vector.load %arg4[%c0_13, %c0_14, %c0_15] : memref<2x32x96xf32, #tpu.memory_space<vmem>>, vector<1x32x96xf32>
    %29 = vector.shape_cast %28 : vector<1x32x96xf32> to vector<32x96xf32>
    %cst_16 = arith.constant dense<0.000000e+00> : vector<32x96xf32>
    %30 = tpu.matmul %27, %29, %cst_16 {dimension_numbers = #tpu.dot_dimension_numbers<[1], [0], [0], [1], [0, 0, 1, 1], [], []>} : vector<32x32xf32>, vector<32x96xf32>, vector<32x96xf32> -> vector<32x96xf32>
    %c0_17 = arith.constant 0 : index
    %c0_18 = arith.constant 0 : index
    %c0_19 = arith.constant 0 : index
    %31 = vector.load %arg5[%c0_17, %c0_18, %c0_19] : memref<2x1x96xf32, #tpu.memory_space<vmem>>, vector<1x1x96xf32>
    %32 = vector.shape_cast %31 : vector<1x1x96xf32> to vector<1x96xf32>
    %33 = vector.broadcast %32 : vector<1x96xf32> to vector<32x96xf32>
    %34 = arith.addf %30, %33 : vector<32x96xf32>
    %35 = vector.extract_strided_slice %34 {offsets = [0, 0], sizes = [32, 32], strides = [1, 1]} : vector<32x96xf32> to vector<32x32xf32>
    %cst_20 = arith.constant 0.353553385 : f32
    %36 = vector.broadcast %cst_20 : f32 to vector<32x32xf32>
    %37 = arith.mulf %35, %36 : vector<32x32xf32>
    %38 = vector.extract_strided_slice %34 {offsets = [0, 32], sizes = [32, 32], strides = [1, 1]} : vector<32x96xf32> to vector<32x32xf32>
    %39 = vector.extract_strided_slice %34 {offsets = [0, 64], sizes = [32, 32], strides = [1, 1]} : vector<32x96xf32> to vector<32x32xf32>
    %40 = vector.extract_strided_slice %37 {offsets = [0, 0], sizes = [32, 8], strides = [1, 1]} : vector<32x32xf32> to vector<32x8xf32>
    %41 = vector.extract_strided_slice %37 {offsets = [0, 8], sizes = [32, 8], strides = [1, 1]} : vector<32x32xf32> to vector<32x8xf32>
    %42 = vector.extract_strided_slice %37 {offsets = [0, 16], sizes = [32, 8], strides = [1, 1]} : vector<32x32xf32> to vector<32x8xf32>
    %43 = vector.extract_strided_slice %37 {offsets = [0, 24], sizes = [32, 8], strides = [1, 1]} : vector<32x32xf32> to vector<32x8xf32>
    %44 = vector.shape_cast %40 : vector<32x8xf32> to vector<1x32x8xf32>
    %45 = vector.shape_cast %41 : vector<32x8xf32> to vector<1x32x8xf32>
    %46 = vector.shape_cast %42 : vector<32x8xf32> to vector<1x32x8xf32>
    %47 = vector.shape_cast %43 : vector<32x8xf32> to vector<1x32x8xf32>
    %48 = tpu.concatenate %44, %45, %46, %47 in 0 : vector<1x32x8xf32>, vector<1x32x8xf32>, vector<1x32x8xf32>, vector<1x32x8xf32> -> vector<4x32x8xf32>
    %49 = vector.extract_strided_slice %38 {offsets = [0, 0], sizes = [32, 8], strides = [1, 1]} : vector<32x32xf32> to vector<32x8xf32>
    %50 = vector.extract_strided_slice %38 {offsets = [0, 8], sizes = [32, 8], strides = [1, 1]} : vector<32x32xf32> to vector<32x8xf32>
    %51 = vector.extract_strided_slice %38 {offsets = [0, 16], sizes = [32, 8], strides = [1, 1]} : vector<32x32xf32> to vector<32x8xf32>
    %52 = vector.extract_strided_slice %38 {offsets = [0, 24], sizes = [32, 8], strides = [1, 1]} : vector<32x32xf32> to vector<32x8xf32>
    %53 = vector.shape_cast %49 : vector<32x8xf32> to vector<1x32x8xf32>
    %54 = vector.shape_cast %50 : vector<32x8xf32> to vector<1x32x8xf32>
    %55 = vector.shape_cast %51 : vector<32x8xf32> to vector<1x32x8xf32>
    %56 = vector.shape_cast %52 : vector<32x8xf32> to vector<1x32x8xf32>
    %57 = tpu.concatenate %53, %54, %55, %56 in 0 : vector<1x32x8xf32>, vector<1x32x8xf32>, vector<1x32x8xf32>, vector<1x32x8xf32> -> vector<4x32x8xf32>
    %58 = vector.extract_strided_slice %39 {offsets = [0, 0], sizes = [32, 8], strides = [1, 1]} : vector<32x32xf32> to vector<32x8xf32>
    %59 = vector.extract_strided_slice %39 {offsets = [0, 8], sizes = [32, 8], strides = [1, 1]} : vector<32x32xf32> to vector<32x8xf32>
    %60 = vector.extract_strided_slice %39 {offsets = [0, 16], sizes = [32, 8], strides = [1, 1]} : vector<32x32xf32> to vector<32x8xf32>
    %61 = vector.extract_strided_slice %39 {offsets = [0, 24], sizes = [32, 8], strides = [1, 1]} : vector<32x32xf32> to vector<32x8xf32>
    %62 = vector.shape_cast %58 : vector<32x8xf32> to vector<1x32x8xf32>
    %63 = vector.shape_cast %59 : vector<32x8xf32> to vector<1x32x8xf32>
    %64 = vector.shape_cast %60 : vector<32x8xf32> to vector<1x32x8xf32>
    %65 = vector.shape_cast %61 : vector<32x8xf32> to vector<1x32x8xf32>
    %66 = tpu.concatenate %62, %63, %64, %65 in 0 : vector<1x32x8xf32>, vector<1x32x8xf32>, vector<1x32x8xf32>, vector<1x32x8xf32> -> vector<4x32x8xf32>
    "tpu.trace_start"() <{level = 10 : i32, message = "hld,hmd->hlm"}> : () -> ()
    %cst_21 = arith.constant dense<0.000000e+00> : vector<4x32x32xf32>
    %67 = tpu.matmul %48, %57, %cst_21 {dimension_numbers = #tpu.dot_dimension_numbers<[2], [2], [1], [1], [0, 0, 0, 1, 1, 1], [0], [0]>} : vector<4x32x8xf32>, vector<4x32x8xf32>, vector<4x32x32xf32> -> vector<4x32x32xf32>
    "tpu.trace_stop"() : () -> ()
    %68 = vector.shape_cast %1 : vector<32x32xf32> to vector<1x32x32xf32>
    %69 = vector.broadcast %68 : vector<1x32x32xf32> to vector<4x32x32xf32>
    %70 = arith.addf %67, %69 : vector<4x32x32xf32>
    %cst_22 = arith.constant dense<0xFF800000> : vector<4x32xf32>
    %71 = vector.multi_reduction <maximumf>, %70, %cst_22 [2] : vector<4x32x32xf32> to vector<4x32xf32>
    %72 = vector.shape_cast %71 : vector<4x32xf32> to vector<4x32x1xf32>
    %73 = vector.broadcast %72 : vector<4x32x1xf32> to vector<4x32x32xf32>
    %74 = arith.subf %70, %73 : vector<4x32x32xf32>
    %75 = math.exp %74 : vector<4x32x32xf32>
    %cst_23 = arith.constant dense<0.000000e+00> : vector<4x32xf32>
    %76 = vector.multi_reduction <add>, %75, %cst_23 [2] : vector<4x32x32xf32> to vector<4x32xf32>
    %77 = vector.shape_cast %76 : vector<4x32xf32> to vector<4x32x1xf32>
    %78 = tpu.reciprocal %77 {approx = true} : vector<4x32x1xf32> -> vector<4x32x1xf32>
    %79 = vector.broadcast %78 : vector<4x32x1xf32> to vector<4x32x32xf32>
    %80 = arith.mulf %75, %79 : vector<4x32x32xf32>
    "tpu.trace_start"() <{level = 10 : i32, message = "hlm,hmd->hld"}> : () -> ()
    %cst_24 = arith.constant dense<0.000000e+00> : vector<4x32x8xf32>
    %81 = tpu.matmul %80, %66, %cst_24 {dimension_numbers = #tpu.dot_dimension_numbers<[2], [1], [1], [2], [0, 0, 0, 1, 1, 2], [0], [0]>} : vector<4x32x32xf32>, vector<4x32x8xf32>, vector<4x32x8xf32> -> vector<4x32x8xf32>
    "tpu.trace_stop"() : () -> ()
    %c0_25 = arith.constant 0 : index
    %c0_26 = arith.constant 0 : index
    %c0_27 = arith.constant 0 : index
    %c0_28 = arith.constant 0 : index
    %82 = vector.load %arg6[%c0_25, %c0_26, %c0_27, %c0_28] : memref<2x4x8x32xf32, #tpu.memory_space<vmem>>, vector<1x4x8x32xf32>
    %83 = vector.shape_cast %82 : vector<1x4x8x32xf32> to vector<4x8x32xf32>
    "tpu.trace_start"() <{level = 10 : i32, message = "hld,hde->hle"}> : () -> ()
    %cst_29 = arith.constant dense<0.000000e+00> : vector<4x32x32xf32>
    %84 = tpu.matmul %81, %83, %cst_29 {dimension_numbers = #tpu.dot_dimension_numbers<[2], [1], [1], [2], [0, 0, 0, 1, 1, 2], [0], [0]>} : vector<4x32x8xf32>, vector<4x8x32xf32>, vector<4x32x32xf32> -> vector<4x32x32xf32>
    "tpu.trace_stop"() : () -> ()
    %cst_30 = arith.constant dense<0.000000e+00> : vector<32x32xf32>
    %85 = vector.multi_reduction <add>, %84, %cst_30 [0] : vector<4x32x32xf32> to vector<32x32xf32>
    %c0_31 = arith.constant 0 : index
    %c0_32 = arith.constant 0 : index
    %c0_33 = arith.constant 0 : index
    %86 = vector.load %arg7[%c0_31, %c0_32, %c0_33] : memref<2x1x32xf32, #tpu.memory_space<vmem>>, vector<1x1x32xf32>
    %87 = vector.shape_cast %86 : vector<1x1x32xf32> to vector<1x32xf32>
    %88 = vector.broadcast %87 : vector<1x32xf32> to vector<32x32xf32>
    %89 = arith.addf %85, %88 : vector<32x32xf32>
    %90 = arith.addf %27, %89 : vector<32x32xf32>
    %c0_34 = arith.constant 0 : index
    %c0_35 = arith.constant 0 : index
    %c0_36 = arith.constant 0 : index
    %91 = vector.load %arg8[%c0_34, %c0_35, %c0_36] : memref<2x1x32xf32, #tpu.memory_space<vmem>>, vector<1x1x32xf32>
    %92 = vector.shape_cast %91 : vector<1x1x32xf32> to vector<1x32xf32>
    %c0_37 = arith.constant 0 : index
    %c0_38 = arith.constant 0 : index
    %c0_39 = arith.constant 0 : index
    %93 = vector.load %arg9[%c0_37, %c0_38, %c0_39] : memref<2x1x32xf32, #tpu.memory_space<vmem>>, vector<1x1x32xf32>
    %94 = vector.shape_cast %93 : vector<1x1x32xf32> to vector<1x32xf32>
    %cst_40 = arith.constant dense<0.000000e+00> : vector<32xf32>
    %95 = vector.multi_reduction <add>, %90, %cst_40 [1] : vector<32x32xf32> to vector<32xf32>
    %96 = vector.shape_cast %95 : vector<32xf32> to vector<32x1xf32>
    %cst_41 = arith.constant 3.200000e+01 : f32
    %97 = vector.broadcast %cst_41 : f32 to vector<32x1xf32>
    %98 = arith.divf %96, %97 : vector<32x1xf32>
    %99 = vector.broadcast %98 : vector<32x1xf32> to vector<32x32xf32>
    %100 = arith.subf %90, %99 : vector<32x32xf32>
    %101 = arith.mulf %100, %100 : vector<32x32xf32>
    %cst_42 = arith.constant dense<0.000000e+00> : vector<32xf32>
    %102 = vector.multi_reduction <add>, %101, %cst_42 [1] : vector<32x32xf32> to vector<32xf32>
    %103 = vector.shape_cast %102 : vector<32xf32> to vector<32x1xf32>
    %cst_43 = arith.constant 3.200000e+01 : f32
    %104 = vector.broadcast %cst_43 : f32 to vector<32x1xf32>
    %105 = arith.divf %103, %104 : vector<32x1xf32>
    %106 = vector.broadcast %98 : vector<32x1xf32> to vector<32x32xf32>
    %107 = arith.subf %90, %106 : vector<32x32xf32>
    %cst_44 = arith.constant 9.99999974E-6 : f32
    %108 = vector.broadcast %cst_44 : f32 to vector<32x1xf32>
    %109 = arith.addf %105, %108 : vector<32x1xf32>
    %110 = math.rsqrt %109 : vector<32x1xf32>
    %111 = vector.broadcast %110 : vector<32x1xf32> to vector<32x32xf32>
    %112 = arith.mulf %107, %111 : vector<32x32xf32>
    %113 = vector.broadcast %92 : vector<1x32xf32> to vector<32x32xf32>
    %114 = arith.mulf %112, %113 : vector<32x32xf32>
    %115 = vector.broadcast %94 : vector<1x32xf32> to vector<32x32xf32>
    %116 = arith.addf %114, %115 : vector<32x32xf32>
    %c0_45 = arith.constant 0 : index
    %c0_46 = arith.constant 0 : index
    %c0_47 = arith.constant 0 : index
    %117 = vector.load %arg10[%c0_45, %c0_46, %c0_47] : memref<2x32x64xf32, #tpu.memory_space<vmem>>, vector<1x32x64xf32>
    %118 = vector.shape_cast %117 : vector<1x32x64xf32> to vector<32x64xf32>
    %cst_48 = arith.constant dense<0.000000e+00> : vector<32x64xf32>
    %119 = tpu.matmul %116, %118, %cst_48 {dimension_numbers = #tpu.dot_dimension_numbers<[1], [0], [0], [1], [0, 0, 1, 1], [], []>} : vector<32x32xf32>, vector<32x64xf32>, vector<32x64xf32> -> vector<32x64xf32>
    %c0_49 = arith.constant 0 : index
    %c0_50 = arith.constant 0 : index
    %c0_51 = arith.constant 0 : index
    %120 = vector.load %arg11[%c0_49, %c0_50, %c0_51] : memref<2x1x64xf32, #tpu.memory_space<vmem>>, vector<1x1x64xf32>
    %121 = vector.shape_cast %120 : vector<1x1x64xf32> to vector<1x64xf32>
    %122 = vector.broadcast %121 : vector<1x64xf32> to vector<32x64xf32>
    %123 = arith.addf %119, %122 : vector<32x64xf32>
    %cst_52 = arith.constant 0.000000e+00 : f32
    %124 = vector.broadcast %cst_52 : f32 to vector<32x64xf32>
    %125 = arith.maximumf %123, %124 : vector<32x64xf32>
    %c0_53 = arith.constant 0 : index
    %c0_54 = arith.constant 0 : index
    %c0_55 = arith.constant 0 : index
    %126 = vector.load %arg12[%c0_53, %c0_54, %c0_55] : memref<2x64x32xf32, #tpu.memory_space<vmem>>, vector<1x64x32xf32>
    %127 = vector.shape_cast %126 : vector<1x64x32xf32> to vector<64x32xf32>
    %cst_56 = arith.constant dense<0.000000e+00> : vector<32x32xf32>
    %128 = tpu.matmul %125, %127, %cst_56 {dimension_numbers = #tpu.dot_dimension_numbers<[1], [0], [0], [1], [0, 0, 1, 1], [], []>} : vector<32x64xf32>, vector<64x32xf32>, vector<32x32xf32> -> vector<32x32xf32>
    %c0_57 = arith.constant 0 : index
    %c0_58 = arith.constant 0 : index
    %c0_59 = arith.constant 0 : index
    %129 = vector.load %arg13[%c0_57, %c0_58, %c0_59] : memref<2x1x32xf32, #tpu.memory_space<vmem>>, vector<1x1x32xf32>
    %130 = vector.shape_cast %129 : vector<1x1x32xf32> to vector<1x32xf32>
    %131 = vector.broadcast %130 : vector<1x32xf32> to vector<32x32xf32>
    %132 = arith.addf %128, %131 : vector<32x32xf32>
    %133 = arith.addf %90, %132 : vector<32x32xf32>
    %c1 = arith.constant 1 : index
    %c0_60 = arith.constant 0 : index
    %c0_61 = arith.constant 0 : index
    %134 = vector.load %arg2[%c1, %c0_60, %c0_61] : memref<2x1x32xf32, #tpu.memory_space<vmem>>, vector<1x1x32xf32>
    %135 = vector.shape_cast %134 : vector<1x1x32xf32> to vector<1x32xf32>
    %c1_62 = arith.constant 1 : index
    %c0_63 = arith.constant 0 : index
    %c0_64 = arith.constant 0 : index
    %136 = vector.load %arg3[%c1_62, %c0_63, %c0_64] : memref<2x1x32xf32, #tpu.memory_space<vmem>>, vector<1x1x32xf32>
    %137 = vector.shape_cast %136 : vector<1x1x32xf32> to vector<1x32xf32>
    %cst_65 = arith.constant dense<0.000000e+00> : vector<32xf32>
    %138 = vector.multi_reduction <add>, %133, %cst_65 [1] : vector<32x32xf32> to vector<32xf32>
    %139 = vector.shape_cast %138 : vector<32xf32> to vector<32x1xf32>
    %cst_66 = arith.constant 3.200000e+01 : f32
    %140 = vector.broadcast %cst_66 : f32 to vector<32x1xf32>
    %141 = arith.divf %139, %140 : vector<32x1xf32>
    %142 = vector.broadcast %141 : vector<32x1xf32> to vector<32x32xf32>
    %143 = arith.subf %133, %142 : vector<32x32xf32>
    %144 = arith.mulf %143, %143 : vector<32x32xf32>
    %cst_67 = arith.constant dense<0.000000e+00> : vector<32xf32>
    %145 = vector.multi_reduction <add>, %144, %cst_67 [1] : vector<32x32xf32> to vector<32xf32>
    %146 = vector.shape_cast %145 : vector<32xf32> to vector<32x1xf32>
    %cst_68 = arith.constant 3.200000e+01 : f32
    %147 = vector.broadcast %cst_68 : f32 to vector<32x1xf32>
    %148 = arith.divf %146, %147 : vector<32x1xf32>
    %149 = vector.broadcast %141 : vector<32x1xf32> to vector<32x32xf32>
    %150 = arith.subf %133, %149 : vector<32x32xf32>
    %cst_69 = arith.constant 9.99999974E-6 : f32
    %151 = vector.broadcast %cst_69 : f32 to vector<32x1xf32>
    %152 = arith.addf %148, %151 : vector<32x1xf32>
    %153 = math.rsqrt %152 : vector<32x1xf32>
    %154 = vector.broadcast %153 : vector<32x1xf32> to vector<32x32xf32>
    %155 = arith.mulf %150, %154 : vector<32x32xf32>
    %156 = vector.broadcast %135 : vector<1x32xf32> to vector<32x32xf32>
    %157 = arith.mulf %155, %156 : vector<32x32xf32>
    %158 = vector.broadcast %137 : vector<1x32xf32> to vector<32x32xf32>
    %159 = arith.addf %157, %158 : vector<32x32xf32>
    %c1_70 = arith.constant 1 : index
    %c0_71 = arith.constant 0 : index
    %c0_72 = arith.constant 0 : index
    %160 = vector.load %arg4[%c1_70, %c0_71, %c0_72] : memref<2x32x96xf32, #tpu.memory_space<vmem>>, vector<1x32x96xf32>
    %161 = vector.shape_cast %160 : vector<1x32x96xf32> to vector<32x96xf32>
    %cst_73 = arith.constant dense<0.000000e+00> : vector<32x96xf32>
    %162 = tpu.matmul %159, %161, %cst_73 {dimension_numbers = #tpu.dot_dimension_numbers<[1], [0], [0], [1], [0, 0, 1, 1], [], []>} : vector<32x32xf32>, vector<32x96xf32>, vector<32x96xf32> -> vector<32x96xf32>
    %c1_74 = arith.constant 1 : index
    %c0_75 = arith.constant 0 : index
    %c0_76 = arith.constant 0 : index
    %163 = vector.load %arg5[%c1_74, %c0_75, %c0_76] : memref<2x1x96xf32, #tpu.memory_space<vmem>>, vector<1x1x96xf32>
    %164 = vector.shape_cast %163 : vector<1x1x96xf32> to vector<1x96xf32>
    %165 = vector.broadcast %164 : vector<1x96xf32> to vector<32x96xf32>
    %166 = arith.addf %162, %165 : vector<32x96xf32>
    %167 = vector.extract_strided_slice %166 {offsets = [0, 0], sizes = [32, 32], strides = [1, 1]} : vector<32x96xf32> to vector<32x32xf32>
    %cst_77 = arith.constant 0.353553385 : f32
    %168 = vector.broadcast %cst_77 : f32 to vector<32x32xf32>
    %169 = arith.mulf %167, %168 : vector<32x32xf32>
    %170 = vector.extract_strided_slice %166 {offsets = [0, 32], sizes = [32, 32], strides = [1, 1]} : vector<32x96xf32> to vector<32x32xf32>
    %171 = vector.extract_strided_slice %166 {offsets = [0, 64], sizes = [32, 32], strides = [1, 1]} : vector<32x96xf32> to vector<32x32xf32>
    %172 = vector.extract_strided_slice %169 {offsets = [0, 0], sizes = [32, 8], strides = [1, 1]} : vector<32x32xf32> to vector<32x8xf32>
    %173 = vector.extract_strided_slice %169 {offsets = [0, 8], sizes = [32, 8], strides = [1, 1]} : vector<32x32xf32> to vector<32x8xf32>
    %174 = vector.extract_strided_slice %169 {offsets = [0, 16], sizes = [32, 8], strides = [1, 1]} : vector<32x32xf32> to vector<32x8xf32>
    %175 = vector.extract_strided_slice %169 {offsets = [0, 24], sizes = [32, 8], strides = [1, 1]} : vector<32x32xf32> to vector<32x8xf32>
    %176 = vector.shape_cast %172 : vector<32x8xf32> to vector<1x32x8xf32>
    %177 = vector.shape_cast %173 : vector<32x8xf32> to vector<1x32x8xf32>
    %178 = vector.shape_cast %174 : vector<32x8xf32> to vector<1x32x8xf32>
    %179 = vector.shape_cast %175 : vector<32x8xf32> to vector<1x32x8xf32>
    %180 = tpu.concatenate %176, %177, %178, %179 in 0 : vector<1x32x8xf32>, vector<1x32x8xf32>, vector<1x32x8xf32>, vector<1x32x8xf32> -> vector<4x32x8xf32>
    %181 = vector.extract_strided_slice %170 {offsets = [0, 0], sizes = [32, 8], strides = [1, 1]} : vector<32x32xf32> to vector<32x8xf32>
    %182 = vector.extract_strided_slice %170 {offsets = [0, 8], sizes = [32, 8], strides = [1, 1]} : vector<32x32xf32> to vector<32x8xf32>
    %183 = vector.extract_strided_slice %170 {offsets = [0, 16], sizes = [32, 8], strides = [1, 1]} : vector<32x32xf32> to vector<32x8xf32>
    %184 = vector.extract_strided_slice %170 {offsets = [0, 24], sizes = [32, 8], strides = [1, 1]} : vector<32x32xf32> to vector<32x8xf32>
    %185 = vector.shape_cast %181 : vector<32x8xf32> to vector<1x32x8xf32>
    %186 = vector.shape_cast %182 : vector<32x8xf32> to vector<1x32x8xf32>
    %187 = vector.shape_cast %183 : vector<32x8xf32> to vector<1x32x8xf32>
    %188 = vector.shape_cast %184 : vector<32x8xf32> to vector<1x32x8xf32>
    %189 = tpu.concatenate %185, %186, %187, %188 in 0 : vector<1x32x8xf32>, vector<1x32x8xf32>, vector<1x32x8xf32>, vector<1x32x8xf32> -> vector<4x32x8xf32>
    %190 = vector.extract_strided_slice %171 {offsets = [0, 0], sizes = [32, 8], strides = [1, 1]} : vector<32x32xf32> to vector<32x8xf32>
    %191 = vector.extract_strided_slice %171 {offsets = [0, 8], sizes = [32, 8], strides = [1, 1]} : vector<32x32xf32> to vector<32x8xf32>
    %192 = vector.extract_strided_slice %171 {offsets = [0, 16], sizes = [32, 8], strides = [1, 1]} : vector<32x32xf32> to vector<32x8xf32>
    %193 = vector.extract_strided_slice %171 {offsets = [0, 24], sizes = [32, 8], strides = [1, 1]} : vector<32x32xf32> to vector<32x8xf32>
    %194 = vector.shape_cast %190 : vector<32x8xf32> to vector<1x32x8xf32>
    %195 = vector.shape_cast %191 : vector<32x8xf32> to vector<1x32x8xf32>
    %196 = vector.shape_cast %192 : vector<32x8xf32> to vector<1x32x8xf32>
    %197 = vector.shape_cast %193 : vector<32x8xf32> to vector<1x32x8xf32>
    %198 = tpu.concatenate %194, %195, %196, %197 in 0 : vector<1x32x8xf32>, vector<1x32x8xf32>, vector<1x32x8xf32>, vector<1x32x8xf32> -> vector<4x32x8xf32>
    "tpu.trace_start"() <{level = 10 : i32, message = "hld,hmd->hlm"}> : () -> ()
    %cst_78 = arith.constant dense<0.000000e+00> : vector<4x32x32xf32>
    %199 = tpu.matmul %180, %189, %cst_78 {dimension_numbers = #tpu.dot_dimension_numbers<[2], [2], [1], [1], [0, 0, 0, 1, 1, 1], [0], [0]>} : vector<4x32x8xf32>, vector<4x32x8xf32>, vector<4x32x32xf32> -> vector<4x32x32xf32>
    "tpu.trace_stop"() : () -> ()
    %200 = vector.shape_cast %1 : vector<32x32xf32> to vector<1x32x32xf32>
    %201 = vector.broadcast %200 : vector<1x32x32xf32> to vector<4x32x32xf32>
    %202 = arith.addf %199, %201 : vector<4x32x32xf32>
    %cst_79 = arith.constant dense<0xFF800000> : vector<4x32xf32>
    %203 = vector.multi_reduction <maximumf>, %202, %cst_79 [2] : vector<4x32x32xf32> to vector<4x32xf32>
    %204 = vector.shape_cast %203 : vector<4x32xf32> to vector<4x32x1xf32>
    %205 = vector.broadcast %204 : vector<4x32x1xf32> to vector<4x32x32xf32>
    %206 = arith.subf %202, %205 : vector<4x32x32xf32>
    %207 = math.exp %206 : vector<4x32x32xf32>
    %cst_80 = arith.constant dense<0.000000e+00> : vector<4x32xf32>
    %208 = vector.multi_reduction <add>, %207, %cst_80 [2] : vector<4x32x32xf32> to vector<4x32xf32>
    %209 = vector.shape_cast %208 : vector<4x32xf32> to vector<4x32x1xf32>
    %210 = tpu.reciprocal %209 {approx = true} : vector<4x32x1xf32> -> vector<4x32x1xf32>
    %211 = vector.broadcast %210 : vector<4x32x1xf32> to vector<4x32x32xf32>
    %212 = arith.mulf %207, %211 : vector<4x32x32xf32>
    "tpu.trace_start"() <{level = 10 : i32, message = "hlm,hmd->hld"}> : () -> ()
    %cst_81 = arith.constant dense<0.000000e+00> : vector<4x32x8xf32>
    %213 = tpu.matmul %212, %198, %cst_81 {dimension_numbers = #tpu.dot_dimension_numbers<[2], [1], [1], [2], [0, 0, 0, 1, 1, 2], [0], [0]>} : vector<4x32x32xf32>, vector<4x32x8xf32>, vector<4x32x8xf32> -> vector<4x32x8xf32>
    "tpu.trace_stop"() : () -> ()
    %c1_82 = arith.constant 1 : index
    %c0_83 = arith.constant 0 : index
    %c0_84 = arith.constant 0 : index
    %c0_85 = arith.constant 0 : index
    %214 = vector.load %arg6[%c1_82, %c0_83, %c0_84, %c0_85] : memref<2x4x8x32xf32, #tpu.memory_space<vmem>>, vector<1x4x8x32xf32>
    %215 = vector.shape_cast %214 : vector<1x4x8x32xf32> to vector<4x8x32xf32>
    "tpu.trace_start"() <{level = 10 : i32, message = "hld,hde->hle"}> : () -> ()
    %cst_86 = arith.constant dense<0.000000e+00> : vector<4x32x32xf32>
    %216 = tpu.matmul %213, %215, %cst_86 {dimension_numbers = #tpu.dot_dimension_numbers<[2], [1], [1], [2], [0, 0, 0, 1, 1, 2], [0], [0]>} : vector<4x32x8xf32>, vector<4x8x32xf32>, vector<4x32x32xf32> -> vector<4x32x32xf32>
    "tpu.trace_stop"() : () -> ()
    %cst_87 = arith.constant dense<0.000000e+00> : vector<32x32xf32>
    %217 = vector.multi_reduction <add>, %216, %cst_87 [0] : vector<4x32x32xf32> to vector<32x32xf32>
    %c1_88 = arith.constant 1 : index
    %c0_89 = arith.constant 0 : index
    %c0_90 = arith.constant 0 : index
    %218 = vector.load %arg7[%c1_88, %c0_89, %c0_90] : memref<2x1x32xf32, #tpu.memory_space<vmem>>, vector<1x1x32xf32>
    %219 = vector.shape_cast %218 : vector<1x1x32xf32> to vector<1x32xf32>
    %220 = vector.broadcast %219 : vector<1x32xf32> to vector<32x32xf32>
    %221 = arith.addf %217, %220 : vector<32x32xf32>
    %222 = arith.addf %159, %221 : vector<32x32xf32>
    %c1_91 = arith.constant 1 : index
    %c0_92 = arith.constant 0 : index
    %c0_93 = arith.constant 0 : index
    %223 = vector.load %arg8[%c1_91, %c0_92, %c0_93] : memref<2x1x32xf32, #tpu.memory_space<vmem>>, vector<1x1x32xf32>
    %224 = vector.shape_cast %223 : vector<1x1x32xf32> to vector<1x32xf32>
    %c1_94 = arith.constant 1 : index
    %c0_95 = arith.constant 0 : index
    %c0_96 = arith.constant 0 : index
    %225 = vector.load %arg9[%c1_94, %c0_95, %c0_96] : memref<2x1x32xf32, #tpu.memory_space<vmem>>, vector<1x1x32xf32>
    %226 = vector.shape_cast %225 : vector<1x1x32xf32> to vector<1x32xf32>
    %cst_97 = arith.constant dense<0.000000e+00> : vector<32xf32>
    %227 = vector.multi_reduction <add>, %222, %cst_97 [1] : vector<32x32xf32> to vector<32xf32>
    %228 = vector.shape_cast %227 : vector<32xf32> to vector<32x1xf32>
    %cst_98 = arith.constant 3.200000e+01 : f32
    %229 = vector.broadcast %cst_98 : f32 to vector<32x1xf32>
    %230 = arith.divf %228, %229 : vector<32x1xf32>
    %231 = vector.broadcast %230 : vector<32x1xf32> to vector<32x32xf32>
    %232 = arith.subf %222, %231 : vector<32x32xf32>
    %233 = arith.mulf %232, %232 : vector<32x32xf32>
    %cst_99 = arith.constant dense<0.000000e+00> : vector<32xf32>
    %234 = vector.multi_reduction <add>, %233, %cst_99 [1] : vector<32x32xf32> to vector<32xf32>
    %235 = vector.shape_cast %234 : vector<32xf32> to vector<32x1xf32>
    %cst_100 = arith.constant 3.200000e+01 : f32
    %236 = vector.broadcast %cst_100 : f32 to vector<32x1xf32>
    %237 = arith.divf %235, %236 : vector<32x1xf32>
    %238 = vector.broadcast %230 : vector<32x1xf32> to vector<32x32xf32>
    %239 = arith.subf %222, %238 : vector<32x32xf32>
    %cst_101 = arith.constant 9.99999974E-6 : f32
    %240 = vector.broadcast %cst_101 : f32 to vector<32x1xf32>
    %241 = arith.addf %237, %240 : vector<32x1xf32>
    %242 = math.rsqrt %241 : vector<32x1xf32>
    %243 = vector.broadcast %242 : vector<32x1xf32> to vector<32x32xf32>
    %244 = arith.mulf %239, %243 : vector<32x32xf32>
    %245 = vector.broadcast %224 : vector<1x32xf32> to vector<32x32xf32>
    %246 = arith.mulf %244, %245 : vector<32x32xf32>
    %247 = vector.broadcast %226 : vector<1x32xf32> to vector<32x32xf32>
    %248 = arith.addf %246, %247 : vector<32x32xf32>
    %c1_102 = arith.constant 1 : index
    %c0_103 = arith.constant 0 : index
    %c0_104 = arith.constant 0 : index
    %249 = vector.load %arg10[%c1_102, %c0_103, %c0_104] : memref<2x32x64xf32, #tpu.memory_space<vmem>>, vector<1x32x64xf32>
    %250 = vector.shape_cast %249 : vector<1x32x64xf32> to vector<32x64xf32>
    %cst_105 = arith.constant dense<0.000000e+00> : vector<32x64xf32>
    %251 = tpu.matmul %248, %250, %cst_105 {dimension_numbers = #tpu.dot_dimension_numbers<[1], [0], [0], [1], [0, 0, 1, 1], [], []>} : vector<32x32xf32>, vector<32x64xf32>, vector<32x64xf32> -> vector<32x64xf32>
    %c1_106 = arith.constant 1 : index
    %c0_107 = arith.constant 0 : index
    %c0_108 = arith.constant 0 : index
    %252 = vector.load %arg11[%c1_106, %c0_107, %c0_108] : memref<2x1x64xf32, #tpu.memory_space<vmem>>, vector<1x1x64xf32>
    %253 = vector.shape_cast %252 : vector<1x1x64xf32> to vector<1x64xf32>
    %254 = vector.broadcast %253 : vector<1x64xf32> to vector<32x64xf32>
    %255 = arith.addf %251, %254 : vector<32x64xf32>
    %cst_109 = arith.constant 0.000000e+00 : f32
    %256 = vector.broadcast %cst_109 : f32 to vector<32x64xf32>
    %257 = arith.maximumf %255, %256 : vector<32x64xf32>
    %c1_110 = arith.constant 1 : index
    %c0_111 = arith.constant 0 : index
    %c0_112 = arith.constant 0 : index
    %258 = vector.load %arg12[%c1_110, %c0_111, %c0_112] : memref<2x64x32xf32, #tpu.memory_space<vmem>>, vector<1x64x32xf32>
    %259 = vector.shape_cast %258 : vector<1x64x32xf32> to vector<64x32xf32>
    %cst_113 = arith.constant dense<0.000000e+00> : vector<32x32xf32>
    %260 = tpu.matmul %257, %259, %cst_113 {dimension_numbers = #tpu.dot_dimension_numbers<[1], [0], [0], [1], [0, 0, 1, 1], [], []>} : vector<32x64xf32>, vector<64x32xf32>, vector<32x32xf32> -> vector<32x32xf32>
    %c1_114 = arith.constant 1 : index
    %c0_115 = arith.constant 0 : index
    %c0_116 = arith.constant 0 : index
    %261 = vector.load %arg13[%c1_114, %c0_115, %c0_116] : memref<2x1x32xf32, #tpu.memory_space<vmem>>, vector<1x1x32xf32>
    %262 = vector.shape_cast %261 : vector<1x1x32xf32> to vector<1x32xf32>
    %263 = vector.broadcast %262 : vector<1x32xf32> to vector<32x32xf32>
    %264 = arith.addf %260, %263 : vector<32x32xf32>
    %265 = arith.addf %222, %264 : vector<32x32xf32>
    %c0_117 = arith.constant 0 : index
    %c0_118 = arith.constant 0 : index
    %266 = vector.load %arg14[%c0_117, %c0_118] : memref<1x32xf32, #tpu.memory_space<vmem>>, vector<1x32xf32>
    %c0_119 = arith.constant 0 : index
    %c0_120 = arith.constant 0 : index
    %267 = vector.load %arg15[%c0_119, %c0_120] : memref<1x32xf32, #tpu.memory_space<vmem>>, vector<1x32xf32>
    %cst_121 = arith.constant dense<0.000000e+00> : vector<32xf32>
    %268 = vector.multi_reduction <add>, %265, %cst_121 [1] : vector<32x32xf32> to vector<32xf32>
    %269 = vector.shape_cast %268 : vector<32xf32> to vector<32x1xf32>
    %cst_122 = arith.constant 3.200000e+01 : f32
    %270 = vector.broadcast %cst_122 : f32 to vector<32x1xf32>
    %271 = arith.divf %269, %270 : vector<32x1xf32>
    %272 = vector.broadcast %271 : vector<32x1xf32> to vector<32x32xf32>
    %273 = arith.subf %265, %272 : vector<32x32xf32>
    %274 = arith.mulf %273, %273 : vector<32x32xf32>
    %cst_123 = arith.constant dense<0.000000e+00> : vector<32xf32>
    %275 = vector.multi_reduction <add>, %274, %cst_123 [1] : vector<32x32xf32> to vector<32xf32>
    %276 = vector.shape_cast %275 : vector<32xf32> to vector<32x1xf32>
    %cst_124 = arith.constant 3.200000e+01 : f32
    %277 = vector.broadcast %cst_124 : f32 to vector<32x1xf32>
    %278 = arith.divf %276, %277 : vector<32x1xf32>
    %279 = vector.broadcast %271 : vector<32x1xf32> to vector<32x32xf32>
    %280 = arith.subf %265, %279 : vector<32x32xf32>
    %cst_125 = arith.constant 9.99999974E-6 : f32
    %281 = vector.broadcast %cst_125 : f32 to vector<32x1xf32>
    %282 = arith.addf %278, %281 : vector<32x1xf32>
    %283 = math.rsqrt %282 : vector<32x1xf32>
    %284 = vector.broadcast %283 : vector<32x1xf32> to vector<32x32xf32>
    %285 = arith.mulf %280, %284 : vector<32x32xf32>
    %286 = vector.broadcast %266 : vector<1x32xf32> to vector<32x32xf32>
    %287 = arith.mulf %285, %286 : vector<32x32xf32>
    %288 = vector.broadcast %267 : vector<1x32xf32> to vector<32x32xf32>
    %289 = arith.addf %287, %288 : vector<32x32xf32>
    %c0_126 = arith.constant 0 : index
    %c0_127 = arith.constant 0 : index
    %290 = vector.load %arg16[%c0_126, %c0_127] : memref<32x128xf32, #tpu.memory_space<vmem>>, vector<32x128xf32>
    %cst_128 = arith.constant dense<0.000000e+00> : vector<32x128xf32>
    %291 = tpu.matmul %289, %290, %cst_128 {dimension_numbers = #tpu.dot_dimension_numbers<[1], [0], [0], [1], [0, 0, 1, 1], [], []>} : vector<32x32xf32>, vector<32x128xf32>, vector<32x128xf32> -> vector<32x128xf32>
    %c0_129 = arith.constant 0 : index
    %c0_130 = arith.constant 0 : index
    %292 = vector.load %arg17[%c0_129, %c0_130] : memref<32x128xf32, #tpu.memory_space<vmem>>, vector<32x128xf32>
    tpu.vector_store %arg17[%c0_129, %c0_130], %291 {strides = array<i32>} : memref<32x128xf32, #tpu.memory_space<vmem>>, vector<32x128xf32>,
    return
  }
}

</mosaic_0001>

<llo_original>
// kernel: transformer_forward.1
$region0: #{transformer_forward.1}
  #allocation0 [shape = 'u32[]', space=smem, size = 0x4, offset = 0x4, fixed_abs, tag = 'smem constant byte address 0x4 - core index']
  #allocation1 [shape = 'u32[144,128]{1,0:T(1,128)}', space=vmem, size = 0x12000, scoped, tag = 'internal scratch']
  %s0 = inlined_call_operand.vmem [shape: f32[32,32], index: 0, kind: input, shape index: {}]
  %s1 = inlined_call_operand.vmem [shape: f32[32,32], index: 1, kind: input, shape index: {}]
  %s2 = inlined_call_operand.vmem [shape: f32[2,1,32], index: 2, kind: input, shape index: {}]
  %s3 = inlined_call_operand.vmem [shape: f32[2,1,32], index: 3, kind: input, shape index: {}]
  %s4 = inlined_call_operand.vmem [shape: f32[2,32,96], index: 4, kind: input, shape index: {}]
  %s5 = inlined_call_operand.vmem [shape: f32[2,1,96], index: 5, kind: input, shape index: {}]
  %s6 = inlined_call_operand.vmem [shape: f32[2,4,8,32], index: 6, kind: input, shape index: {}]
  %s7 = inlined_call_operand.vmem [shape: f32[2,1,32], index: 7, kind: input, shape index: {}]
  %s8 = inlined_call_operand.vmem [shape: f32[2,1,32], index: 8, kind: input, shape index: {}]
  %s9 = inlined_call_operand.vmem [shape: f32[2,1,32], index: 9, kind: input, shape index: {}]
  %s10 = inlined_call_operand.vmem [shape: f32[2,32,64], index: 10, kind: input, shape index: {}]
  %s11 = inlined_call_operand.vmem [shape: f32[2,1,64], index: 11, kind: input, shape index: {}]
  %s12 = inlined_call_operand.vmem [shape: f32[2,64,32], index: 12, kind: input, shape index: {}]
  %s13 = inlined_call_operand.vmem [shape: f32[2,1,32], index: 13, kind: input, shape index: {}]
  %s14 = inlined_call_operand.vmem [shape: f32[1,32], index: 14, kind: input, shape index: {}]
  %s15 = inlined_call_operand.vmem [shape: f32[1,32], index: 15, kind: input, shape index: {}]
  %s16 = inlined_call_operand.vmem [shape: f32[32,128], index: 16, kind: input, shape index: {}]
  %s17 = inlined_call_operand.hbm [shape: f32[32,128], index: 17, kind: output, shape index: {}]
  %s18 = sld [smem:[#allocation0]]
  $region78: #{transformer_forward.1} parent=0
    _
  %s20 = ssub.s32 1, %s18
  %s21 = scalar_select 0, %s20, %s18
  $region1: #{transformer_forward.1} parent=0
    #allocation2 [shape = 'u8[16384]{0}', space=vmem, size = 0x4000, scoped, tag = 'output window, operand 0, single buffered']
    #allocation3 [shape = 's32[1]{0}', space=sflag, size = 0x4, scoped, tag = 'scoped memory for transformer_forward.1']
    %22 = vsyncpa [#allocation3], 0
    // Predicated region
    $region2: #{transformer_forward.1} parent=1 // pred_check
      _
    $region3: #{transformer_forward.1} parent=1 // pred_check_branch
      %24 = sbr.rel (0) target = $region5
    $region4: #{transformer_forward.1} parent=1 // pred_region
      _
    $region5: #{transformer_forward.1} parent=1 // pred_fallthru
      _
    // Predicated region
    $region6: #{transformer_forward.1} parent=1 // pred_check
      _
    $region7: #{transformer_forward.1} parent=1 // pred_check_branch
      %26 = sbr.rel (0) target = $region9
    $region8: #{transformer_forward.1} parent=1 // pred_region
      _
    $region9: #{transformer_forward.1} parent=1 // pred_fallthru
      _
    // Predicated region
    $region10: #{transformer_forward.1} parent=1 // pred_check
      _
    $region11: #{transformer_forward.1} parent=1 // pred_check_branch
      %28 = sbr.rel (0) target = $region13
    $region12: #{transformer_forward.1} parent=1 // pred_region
      _
    $region13: #{transformer_forward.1} parent=1 // pred_fallthru
      _
    // Predicated region
    $region14: #{transformer_forward.1} parent=1 // pred_check
      _
    $region15: #{transformer_forward.1} parent=1 // pred_check_branch
      %30 = sbr.rel (0) target = $region17
    $region16: #{transformer_forward.1} parent=1 // pred_region
      _
    $region17: #{transformer_forward.1} parent=1 // pred_fallthru
      _
    // Predicated region
    $region18: #{transformer_forward.1} parent=1 // pred_check
      _
    $region19: #{transformer_forward.1} parent=1 // pred_check_branch
      %32 = sbr.rel (0) target = $region21
    $region20: #{transformer_forward.1} parent=1 // pred_region
      _
    $region21: #{transformer_forward.1} parent=1 // pred_fallthru
      _
    // Predicated region
    $region22: #{transformer_forward.1} parent=1 // pred_check
      _
    $region23: #{transformer_forward.1} parent=1 // pred_check_branch
      %34 = sbr.rel (0) target = $region25
    $region24: #{transformer_forward.1} parent=1 // pred_region
      _
    $region25: #{transformer_forward.1} parent=1 // pred_fallthru
      _
    // Predicated region
    $region26: #{transformer_forward.1} parent=1 // pred_check
      _
    $region27: #{transformer_forward.1} parent=1 // pred_check_branch
      %36 = sbr.rel (0) target = $region29
    $region28: #{transformer_forward.1} parent=1 // pred_region
      _
    $region29: #{transformer_forward.1} parent=1 // pred_fallthru
      _
    // Predicated region
    $region30: #{transformer_forward.1} parent=1 // pred_check
      _
    $region31: #{transformer_forward.1} parent=1 // pred_check_branch
      %38 = sbr.rel (0) target = $region33
    $region32: #{transformer_forward.1} parent=1 // pred_region
      _
    $region33: #{transformer_forward.1} parent=1 // pred_fallthru
      _
    // Predicated region
    $region34: #{transformer_forward.1} parent=1 // pred_check
      _
    $region35: #{transformer_forward.1} parent=1 // pred_check_branch
      %40 = sbr.rel (0) target = $region37
    $region36: #{transformer_forward.1} parent=1 // pred_region
      _
    $region37: #{transformer_forward.1} parent=1 // pred_fallthru
      _
    // Predicated region
    $region38: #{transformer_forward.1} parent=1 // pred_check
      _
    $region39: #{transformer_forward.1} parent=1 // pred_check_branch
      %42 = sbr.rel (0) target = $region41
    $region40: #{transformer_forward.1} parent=1 // pred_region
      _
    $region41: #{transformer_forward.1} parent=1 // pred_fallthru
      _
    // Predicated region
    $region42: #{transformer_forward.1} parent=1 // pred_check
      _
    $region43: #{transformer_forward.1} parent=1 // pred_check_branch
      %44 = sbr.rel (0) target = $region45
    $region44: #{transformer_forward.1} parent=1 // pred_region
      _
    $region45: #{transformer_forward.1} parent=1 // pred_fallthru
      _
    // Predicated region
    $region46: #{transformer_forward.1} parent=1 // pred_check
      _
    $region47: #{transformer_forward.1} parent=1 // pred_check_branch
      %46 = sbr.rel (0) target = $region49
    $region48: #{transformer_forward.1} parent=1 // pred_region
      _
    $region49: #{transformer_forward.1} parent=1 // pred_fallthru
      _
    // Predicated region
    $region50: #{transformer_forward.1} parent=1 // pred_check
      _
    $region51: #{transformer_forward.1} parent=1 // pred_check_branch
      %48 = sbr.rel (0) target = $region53
    $region52: #{transformer_forward.1} parent=1 // pred_region
      _
    $region53: #{transformer_forward.1} parent=1 // pred_fallthru
      _
    // Predicated region
    $region54: #{transformer_forward.1} parent=1 // pred_check
      _
    $region55: #{transformer_forward.1} parent=1 // pred_check_branch
      %50 = sbr.rel (0) target = $region57
    $region56: #{transformer_forward.1} parent=1 // pred_region
      _
    $region57: #{transformer_forward.1} parent=1 // pred_fallthru
      _
    // Predicated region
    $region58: #{transformer_forward.1} parent=1 // pred_check
      _
    $region59: #{transformer_forward.1} parent=1 // pred_check_branch
      %52 = sbr.rel (0) target = $region61
    $region60: #{transformer_forward.1} parent=1 // pred_region
      _
    $region61: #{transformer_forward.1} parent=1 // pred_fallthru
      _
    // Predicated region
    $region62: #{transformer_forward.1} parent=1 // pred_check
      _
    $region63: #{transformer_forward.1} parent=1 // pred_check_branch
      %54 = sbr.rel (0) target = $region65
    $region64: #{transformer_forward.1} parent=1 // pred_region
      _
    $region65: #{transformer_forward.1} parent=1 // pred_fallthru
      _
    // Predicated region
    $region66: #{transformer_forward.1} parent=1 // pred_check
      _
    $region67: #{transformer_forward.1} parent=1 // pred_check_branch
      %56 = sbr.rel (0) target = $region69
    $region68: #{transformer_forward.1} parent=1 // pred_region
      _
    $region69: #{transformer_forward.1} parent=1 // pred_fallthru
      _
    %v57 = vld [vmem:[%s0] sm:$0xff]
    %v58 = vld [vmem:[%s0 + $0x8] sm:$0xff]
    %v59 = vld [vmem:[%s0 + $0x10] sm:$0xff]
    %v60 = vld [vmem:[%s0 + $0x18] sm:$0xff]
    %v61 = vld [vmem:[%s1] sm:$0xff]
    %v62 = vld [vmem:[%s1 + $0x8] sm:$0xff]
    %v63 = vld [vmem:[%s1 + $0x10] sm:$0xff]
    %v64 = vld [vmem:[%s1 + $0x18] sm:$0xff]
    %v65 = vld [vmem:[%s2] sm:$0x1]
    %v66 = vld [vmem:[%s3] sm:$0x1]
    %vm67 = vcmask 261120
    %v68 = vsel %vm67, %v57, 0.0
    %69 = vadd.xlane.f32.xlu0 %v68
    %v70 = vpop.xlane.xlu0 %69
    %v71 = vsel %vm67, %v58, 0.0
    %72 = vadd.xlane.f32.xlu0 %v71
    %v73 = vpop.xlane.xlu0 %72
    %v74 = vsel %vm67, %v59, 0.0
    %75 = vadd.xlane.f32.xlu0 %v74
    %v76 = vpop.xlane.xlu0 %75
    %v77 = vsel %vm67, %v60, 0.0
    %78 = vadd.xlane.f32.xlu0 %v77
    %v79 = vpop.xlane.xlu0 %78
    %v80 = vrcp.pop 32.0
    %v81 = vmul.f32 %v70, %v80
    %v82 = vmul.f32 %v73, %v80
    %v83 = vmul.f32 %v76, %v80
    %v84 = vmul.f32 %v79, %v80
    %v85 = vsub.f32 %v57, %v81
    %v86 = vsub.f32 %v58, %v82
    %v87 = vsub.f32 %v59, %v83
    %v88 = vsub.f32 %v60, %v84
    %v89 = vmul.f32 %v85, %v85
    %v90 = vmul.f32 %v86, %v86
    %v91 = vmul.f32 %v87, %v87
    %v92 = vmul.f32 %v88, %v88
    %v93 = vsel %vm67, %v89, 0.0
    %94 = vadd.xlane.f32.xlu0 %v93
    %v95 = vpop.xlane.xlu0 %94
    %v96 = vsel %vm67, %v90, 0.0
    %97 = vadd.xlane.f32.xlu0 %v96
    %v98 = vpop.xlane.xlu0 %97
    %v99 = vsel %vm67, %v91, 0.0
    %100 = vadd.xlane.f32.xlu0 %v99
    %v101 = vpop.xlane.xlu0 %100
    %v102 = vsel %vm67, %v92, 0.0
    %103 = vadd.xlane.f32.xlu0 %v102
    %v104 = vpop.xlane.xlu0 %103
    %v105 = vmul.f32 %v95, %v80
    %v106 = vmul.f32 %v98, %v80
    %v107 = vmul.f32 %v101, %v80
    %v108 = vmul.f32 %v104, %v80
    %v109 = vadd.f32 %v105, 1e-05
    %v110 = vadd.f32 %v106, 1e-05
    %v111 = vadd.f32 %v107, 1e-05
    %v112 = vadd.f32 %v108, 1e-05
    %v113 = vrsqrt.pop %v109
    %v114 = vrsqrt.pop %v110
    %v115 = vrsqrt.pop %v111
    %v116 = vrsqrt.pop %v112
    %v117 = vmul.f32 %v85, %v113
    %v118 = vmul.f32 %v86, %v114
    %v119 = vmul.f32 %v87, %v115
    %v120 = vmul.f32 %v88, %v116
    %v122 = vlaneseq
    %v123 = vshrl.u32 %v122, 7
    %v124 = vsub.s32 0, %v123
    %v125 = vrot.slane %v65, %v124
    %v127 = vmul.f32 %v117, %v125
    %v128 = vmul.f32 %v118, %v125
    %v129 = vmul.f32 %v119, %v125
    %v130 = vmul.f32 %v120, %v125
    %v132 = vlaneseq
    %v133 = vshrl.u32 %v132, 7
    %v134 = vsub.s32 0, %v133
    %v135 = vrot.slane %v66, %v134
    %v137 = vadd.f32 %v127, %v135
    %v138 = vadd.f32 %v128, %v135
    %v139 = vadd.f32 %v129, %v135
    %v140 = vadd.f32 %v130, %v135
    %v141 = vld [vmem:[%s4] sm:$0xff]
    %v142 = vld [vmem:[%s4 + $0x8] sm:$0xff]
    %v143 = vld [vmem:[%s4 + $0x10] sm:$0xff]
    %v144 = vld [vmem:[%s4 + $0x18] sm:$0xff]
    %v145 = vld [vmem:[%s5] sm:$0x1]
    %v147 = vlaneseq
    %v148 = vshrl.u32 %v147, 7
    %v149 = vsub.s32 0, %v148
    %v150 = vrot.slane %v145, %v149
    %v153 = vsel %vm67, %v137, 0
    %v156 = vsel %vm67, %v138, 0
    %v159 = vsel %vm67, %v139, 0
    %v162 = vsel %vm67, %v140, 0
    %164 = vmatprep.subr.mxu0 0.0
    %165 = vmatpush1.msra.mxu0 0.0
    %166 = vmatprep.subr.mxu0 0.0
    %167 = vmatpush1.msra.mxu0 0.0
    %168 = vmatprep.subr.mxu0 0.0
    %169 = vmatpush1.msra.mxu0 0.0
    %170 = vmatprep.subr.mxu0 0.0
    %171 = vmatpush1.msra.mxu0 0.0
    %172 = vmatprep.subr.mxu0 0.0
    %173 = vmatpush1.msra.mxu0 0.0
    %174 = vmatprep.subr.mxu0 0.0
    %175 = vmatpush1.msra.mxu0 0.0
    %176 = vmatprep.subr.mxu0 0.0
    %177 = vmatpush1.msra.mxu0 0.0
    %178 = vmatprep.subr.mxu0 0.0
    %179 = vmatpush1.msra.mxu0 0.0
    %180 = vmatprep.subr.mxu0 0.0
    %181 = vmatpush1.msra.mxu0 0.0
    %182 = vmatprep.subr.mxu0 0.0
    %183 = vmatpush1.msra.mxu0 0.0
    %184 = vmatprep.subr.mxu0 0.0
    %185 = vmatpush1.msra.mxu0 0.0
    %186 = vmatprep.subr.mxu0 0.0
    %187 = vmatpush1.msra.mxu0 0.0
    %188 = vmatprep.subr.mxu0 0.0
    %189 = vmatpush1.msra.mxu0 %v144
    %190 = vmatprep.subr.mxu0 0.0
    %191 = vmatpush1.msra.mxu0 %v143
    %192 = vmatprep.subr.mxu0 0.0
    %193 = vmatpush1.msra.mxu0 %v142
    %194 = vmatprep.subr.mxu0 0.0
    %195 = vmatpush1.msra.mxu0 %v141
    %196 = vmatprep.subr.mxu0 0.0
    %197 = vmatpush2.msra.mxu0 0.0
    %198 = vmatprep.subr.mxu0 0.0
    %199 = vmatpush2.msra.mxu0 0.0
    %200 = vmatprep.subr.mxu0 0.0
    %201 = vmatpush2.msra.mxu0 0.0
    %202 = vmatprep.subr.mxu0 0.0
    %203 = vmatpush2.msra.mxu0 0.0
    %204 = vmatprep.subr.mxu0 0.0
    %205 = vmatpush2.msra.mxu0 0.0
    %206 = vmatprep.subr.mxu0 0.0
    %207 = vmatpush2.msra.mxu0 0.0
    %208 = vmatprep.subr.mxu0 0.0
    %209 = vmatpush2.msra.mxu0 0.0
    %210 = vmatprep.subr.mxu0 0.0
    %211 = vmatpush2.msra.mxu0 0.0
    %212 = vmatprep.subr.mxu0 0.0
    %213 = vmatpush2.msra.mxu0 0.0
    %214 = vmatprep.subr.mxu0 0.0
    %215 = vmatpush2.msra.mxu0 0.0
    %216 = vmatprep.subr.mxu0 0.0
    %217 = vmatpush2.msra.mxu0 0.0
    %218 = vmatprep.subr.mxu0 0.0
    %219 = vmatpush2.msra.mxu0 0.0
    %220 = vmatprep.subr.mxu0 0.0
    %221 = vmatpush2.msra.mxu0 0.0
    %222 = vmatprep.subr.mxu0 0.0
    %223 = vmatpush2.msra.mxu0 0.0
    %224 = vmatprep.subr.mxu0 0.0
    %225 = vmatpush2.msra.mxu0 0.0
    %226 = vmatprep.subr.mxu0 0.0
    %227 = vmatpush2.msra.mxu0 0.0
    %228 = vmatprep.mubr.f32.mxu0 0.0
    %229 = vmatmul.mubr.f32.gmra.mxu0 %v153
    %v230 = vpop.f32.mrf.mxu0
    %v231 = vadd.f32 %v150, %v230
    %v232 = vpop.f32.mrf.mxu0
    %233 = vmatprep.mubr.f32.mxu0 0.0
    %234 = vmatmul.mubr.f32.gmra.mxu0 %v156
    %v235 = vpop.f32.mrf.mxu0
    %v236 = vadd.f32 %v150, %v235
    %v237 = vpop.f32.mrf.mxu0
    %238 = vmatprep.mubr.f32.mxu0 0.0
    %239 = vmatmul.mubr.f32.gmra.mxu0 %v159
    %v240 = vpop.f32.mrf.mxu0
    %v241 = vadd.f32 %v150, %v240
    %v242 = vpop.f32.mrf.mxu0
    %243 = vmatprep.mubr.f32.mxu0 0.0
    %244 = vmatmul.mubr.f32.gmra.mxu0 %v162
    %v245 = vpop.f32.mrf.mxu0
    %v246 = vadd.f32 %v150, %v245
    %v247 = vpop.f32.mrf.mxu0
    %248 = vdwg.mxu0
    %v249 = vmul.f32 %v231, 0.35355338
    %v250 = vmul.f32 %v236, 0.35355338
    %v251 = vmul.f32 %v241, 0.35355338
    %v252 = vmul.f32 %v246, 0.35355338
    %257 = vrot.lane.b32.xlu0 %v249, 120
    %v258 = vpop.permute.xlu0 %257
    %259 = vrot.lane.b32.xlu0 %v250, 120
    %v260 = vpop.permute.xlu0 %259
    %261 = vrot.lane.b32.xlu0 %v251, 120
    %v262 = vpop.permute.xlu0 %261
    %263 = vrot.lane.b32.xlu0 %v252, 120
    %v264 = vpop.permute.xlu0 %263
    %265 = vrot.lane.b32.xlu0 %v249, 112
    %v266 = vpop.permute.xlu0 %265
    %267 = vrot.lane.b32.xlu0 %v250, 112
    %v268 = vpop.permute.xlu0 %267
    %269 = vrot.lane.b32.xlu0 %v251, 112
    %v270 = vpop.permute.xlu0 %269
    %271 = vrot.lane.b32.xlu0 %v252, 112
    %v272 = vpop.permute.xlu0 %271
    %273 = vrot.lane.b32.xlu0 %v249, 104
    %v274 = vpop.permute.xlu0 %273
    %275 = vrot.lane.b32.xlu0 %v250, 104
    %v276 = vpop.permute.xlu0 %275
    %277 = vrot.lane.b32.xlu0 %v251, 104
    %v278 = vpop.permute.xlu0 %277
    %279 = vrot.lane.b32.xlu0 %v252, 104
    %v280 = vpop.permute.xlu0 %279
    %285 = vrot.lane.b32.xlu0 %v231, 120
    %v286 = vpop.permute.xlu0 %285
    %287 = vrot.lane.b32.xlu0 %v236, 120
    %v288 = vpop.permute.xlu0 %287
    %289 = vrot.lane.b32.xlu0 %v241, 120
    %v290 = vpop.permute.xlu0 %289
    %291 = vrot.lane.b32.xlu0 %v246, 120
    %v292 = vpop.permute.xlu0 %291
    %293 = vrot.lane.b32.xlu0 %v231, 112
    %v294 = vpop.permute.xlu0 %293
    %295 = vrot.lane.b32.xlu0 %v236, 112
    %v296 = vpop.permute.xlu0 %295
    %297 = vrot.lane.b32.xlu0 %v241, 112
    %v298 = vpop.permute.xlu0 %297
    %299 = vrot.lane.b32.xlu0 %v246, 112
    %v300 = vpop.permute.xlu0 %299
    %301 = vrot.lane.b32.xlu0 %v231, 104
    %v302 = vpop.permute.xlu0 %301
    %303 = vrot.lane.b32.xlu0 %v236, 104
    %v304 = vpop.permute.xlu0 %303
    %305 = vrot.lane.b32.xlu0 %v241, 104
    %v306 = vpop.permute.xlu0 %305
    %307 = vrot.lane.b32.xlu0 %v246, 104
    %v308 = vpop.permute.xlu0 %307
    %309 = vrot.lane.b32.xlu0 %v231, 96
    %v310 = vpop.permute.xlu0 %309
    %311 = vrot.lane.b32.xlu0 %v236, 96
    %v312 = vpop.permute.xlu0 %311
    %313 = vrot.lane.b32.xlu0 %v241, 96
    %v314 = vpop.permute.xlu0 %313
    %315 = vrot.lane.b32.xlu0 %v246, 96
    %v316 = vpop.permute.xlu0 %315
    %vm317 = vcmask 64512
    %v318 = vsel %vm317, %v249, 0
    %v320 = vsel %vm317, %v250, 0
    %v322 = vsel %vm317, %v251, 0
    %v324 = vsel %vm317, %v252, 0
    %v326 = vsel %vm317, %v310, 0
    %v328 = vsel %vm317, %v312, 0
    %v330 = vsel %vm317, %v314, 0
    %v332 = vsel %vm317, %v316, 0
    %334 = vmatprep.subr.mxu0 0.0
    %335 = vmatpush1.xpose.msra.mxu0 0.0
    %336 = vmatprep.subr.mxu0 0.0
    %337 = vmatpush1.xpose.msra.mxu0 0.0
    %338 = vmatprep.subr.mxu0 0.0
    %339 = vmatpush1.xpose.msra.mxu0 0.0
    %340 = vmatprep.subr.mxu0 0.0
    %341 = vmatpush1.xpose.msra.mxu0 0.0
    %342 = vmatprep.subr.mxu0 0.0
    %343 = vmatpush1.xpose.msra.mxu0 0.0
    %344 = vmatprep.subr.mxu0 0.0
    %345 = vmatpush1.xpose.msra.mxu0 0.0
    %346 = vmatprep.subr.mxu0 0.0
    %347 = vmatpush1.xpose.msra.mxu0 0.0
    %348 = vmatprep.subr.mxu0 0.0
    %349 = vmatpush1.xpose.msra.mxu0 0.0
    %350 = vmatprep.subr.mxu0 0.0
    %351 = vmatpush1.xpose.msra.mxu0 0.0
    %352 = vmatprep.subr.mxu0 0.0
    %353 = vmatpush1.xpose.msra.mxu0 0.0
    %354 = vmatprep.subr.mxu0 0.0
    %355 = vmatpush1.xpose.msra.mxu0 0.0
    %356 = vmatprep.subr.mxu0 0.0
    %357 = vmatpush1.xpose.msra.mxu0 0.0
    %358 = vmatprep.subr.mxu0 0.0
    %359 = vmatpush1.xpose.msra.mxu0 %v332
    %360 = vmatprep.subr.mxu0 0.0
    %361 = vmatpush1.xpose.msra.mxu0 %v330
    %362 = vmatprep.subr.mxu0 0.0
    %363 = vmatpush1.xpose.msra.mxu0 %v328
    %364 = vmatprep.subr.mxu0 0.0
    %365 = vmatpush1.xpose.msra.mxu0 %v326
    %366 = vmatprep.subr.mxu0 0.0
    %367 = vmatpush2.xpose.msra.mxu0 0.0
    %368 = vmatprep.subr.mxu0 0.0
    %369 = vmatpush2.xpose.msra.mxu0 0.0
    %370 = vmatprep.subr.mxu0 0.0
    %371 = vmatpush2.xpose.msra.mxu0 0.0
    %372 = vmatprep.subr.mxu0 0.0
    %373 = vmatpush2.xpose.msra.mxu0 0.0
    %374 = vmatprep.subr.mxu0 0.0
    %375 = vmatpush2.xpose.msra.mxu0 0.0
    %376 = vmatprep.subr.mxu0 0.0
    %377 = vmatpush2.xpose.msra.mxu0 0.0
    %378 = vmatprep.subr.mxu0 0.0
    %379 = vmatpush2.xpose.msra.mxu0 0.0
    %380 = vmatprep.subr.mxu0 0.0
    %381 = vmatpush2.xpose.msra.mxu0 0.0
    %382 = vmatprep.subr.mxu0 0.0
    %383 = vmatpush2.xpose.msra.mxu0 0.0
    %384 = vmatprep.subr.mxu0 0.0
    %385 = vmatpush2.xpose.msra.mxu0 0.0
    %386 = vmatprep.subr.mxu0 0.0
    %387 = vmatpush2.xpose.msra.mxu0 0.0
    %388 = vmatprep.subr.mxu0 0.0
    %389 = vmatpush2.xpose.msra.mxu0 0.0
    %390 = vmatprep.subr.mxu0 0.0
    %391 = vmatpush2.xpose.msra.mxu0 0.0
    %392 = vmatprep.subr.mxu0 0.0
    %393 = vmatpush2.xpose.msra.mxu0 0.0
    %394 = vmatprep.subr.mxu0 0.0
    %395 = vmatpush2.xpose.msra.mxu0 0.0
    %396 = vmatprep.subr.mxu0 0.0
    %397 = vmatpush2.xpose.msra.mxu0 0.0
    %398 = vmatprep.mubr.f32.mxu0 0.0
    %399 = vmatmul.mubr.f32.gmra.mxu0 %v318
    %v400 = vpop.f32.mrf.mxu0
    %v401 = vadd.f32 %v61, %v400
    %v402 = vpop.f32.mrf.mxu0
    %403 = vmatprep.mubr.f32.mxu0 0.0
    %404 = vmatmul.mubr.f32.gmra.mxu0 %v320
    %v405 = vpop.f32.mrf.mxu0
    %v406 = vadd.f32 %v62, %v405
    %v407 = vpop.f32.mrf.mxu0
    %408 = vmatprep.mubr.f32.mxu0 0.0
    %409 = vmatmul.mubr.f32.gmra.mxu0 %v322
    %v410 = vpop.f32.mrf.mxu0
    %v411 = vadd.f32 %v63, %v410
    %v412 = vpop.f32.mrf.mxu0
    %413 = vmatprep.mubr.f32.mxu0 0.0
    %414 = vmatmul.mubr.f32.gmra.mxu0 %v324
    %v415 = vpop.f32.mrf.mxu0
    %v416 = vadd.f32 %v64, %v415
    %v417 = vpop.f32.mrf.mxu0
    %418 = vdwg.mxu0
    %419 = vrot.lane.b32.xlu0 %v286, 96
    %v420 = vpop.permute.xlu0 %419
    %421 = vrot.lane.b32.xlu0 %v288, 96
    %v422 = vpop.permute.xlu0 %421
    %423 = vrot.lane.b32.xlu0 %v290, 96
    %v424 = vpop.permute.xlu0 %423
    %425 = vrot.lane.b32.xlu0 %v292, 96
    %v426 = vpop.permute.xlu0 %425
    %v427 = vsel %vm317, %v258, 0
    %v429 = vsel %vm317, %v260, 0
    %v431 = vsel %vm317, %v262, 0
    %v433 = vsel %vm317, %v264, 0
    %v435 = vsel %vm317, %v420, 0
    %v437 = vsel %vm317, %v422, 0
    %v439 = vsel %vm317, %v424, 0
    %v441 = vsel %vm317, %v426, 0
    %443 = vmatprep.subr.mxu0 0.0
    %444 = vmatpush1.xpose.msra.mxu0 0.0
    %445 = vmatprep.subr.mxu0 0.0
    %446 = vmatpush1.xpose.msra.mxu0 0.0
    %447 = vmatprep.subr.mxu0 0.0
    %448 = vmatpush1.xpose.msra.mxu0 0.0
    %449 = vmatprep.subr.mxu0 0.0
    %450 = vmatpush1.xpose.msra.mxu0 0.0
    %451 = vmatprep.subr.mxu0 0.0
    %452 = vmatpush1.xpose.msra.mxu0 0.0
    %453 = vmatprep.subr.mxu0 0.0
    %454 = vmatpush1.xpose.msra.mxu0 0.0
    %455 = vmatprep.subr.mxu0 0.0
    %456 = vmatpush1.xpose.msra.mxu0 0.0
    %457 = vmatprep.subr.mxu0 0.0
    %458 = vmatpush1.xpose.msra.mxu0 0.0
    %459 = vmatprep.subr.mxu0 0.0
    %460 = vmatpush1.xpose.msra.mxu0 0.0
    %461 = vmatprep.subr.mxu0 0.0
    %462 = vmatpush1.xpose.msra.mxu0 0.0
    %463 = vmatprep.subr.mxu0 0.0
    %464 = vmatpush1.xpose.msra.mxu0 0.0
    %465 = vmatprep.subr.mxu0 0.0
    %466 = vmatpush1.xpose.msra.mxu0 0.0
    %467 = vmatprep.subr.mxu0 0.0
    %468 = vmatpush1.xpose.msra.mxu0 %v441
    %469 = vmatprep.subr.mxu0 0.0
    %470 = vmatpush1.xpose.msra.mxu0 %v439
    %471 = vmatprep.subr.mxu0 0.0
    %472 = vmatpush1.xpose.msra.mxu0 %v437
    %473 = vmatprep.subr.mxu0 0.0
    %474 = vmatpush1.xpose.msra.mxu0 %v435
    %475 = vmatprep.subr.mxu0 0.0
    %476 = vmatpush2.xpose.msra.mxu0 0.0
    %477 = vmatprep.subr.mxu0 0.0
    %478 = vmatpush2.xpose.msra.mxu0 0.0
    %479 = vmatprep.subr.mxu0 0.0
    %480 = vmatpush2.xpose.msra.mxu0 0.0
    %481 = vmatprep.subr.mxu0 0.0
    %482 = vmatpush2.xpose.msra.mxu0 0.0
    %483 = vmatprep.subr.mxu0 0.0
    %484 = vmatpush2.xpose.msra.mxu0 0.0
    %485 = vmatprep.subr.mxu0 0.0
    %486 = vmatpush2.xpose.msra.mxu0 0.0
    %487 = vmatprep.subr.mxu0 0.0
    %488 = vmatpush2.xpose.msra.mxu0 0.0
    %489 = vmatprep.subr.mxu0 0.0
    %490 = vmatpush2.xpose.msra.mxu0 0.0
    %491 = vmatprep.subr.mxu0 0.0
    %492 = vmatpush2.xpose.msra.mxu0 0.0
    %493 = vmatprep.subr.mxu0 0.0
    %494 = vmatpush2.xpose.msra.mxu0 0.0
    %495 = vmatprep.subr.mxu0 0.0
    %496 = vmatpush2.xpose.msra.mxu0 0.0
    %497 = vmatprep.subr.mxu0 0.0
    %498 = vmatpush2.xpose.msra.mxu0 0.0
    %499 = vmatprep.subr.mxu0 0.0
    %500 = vmatpush2.xpose.msra.mxu0 0.0
    %501 = vmatprep.subr.mxu0 0.0
    %502 = vmatpush2.xpose.msra.mxu0 0.0
    %503 = vmatprep.subr.mxu0 0.0
    %504 = vmatpush2.xpose.msra.mxu0 0.0
    %505 = vmatprep.subr.mxu0 0.0
    %506 = vmatpush2.xpose.msra.mxu0 0.0
    %507 = vmatprep.mubr.f32.mxu0 0.0
    %508 = vmatmul.mubr.f32.gmra.mxu0 %v427
    %v509 = vpop.f32.mrf.mxu0
    %v510 = vadd.f32 %v61, %v509
    %v511 = vpop.f32.mrf.mxu0
    %512 = vmatprep.mubr.f32.mxu0 0.0
    %513 = vmatmul.mubr.f32.gmra.mxu0 %v429
    %v514 = vpop.f32.mrf.mxu0
    %v515 = vadd.f32 %v62, %v514
    %v516 = vpop.f32.mrf.mxu0
    %517 = vmatprep.mubr.f32.mxu0 0.0
    %518 = vmatmul.mubr.f32.gmra.mxu0 %v431
    %v519 = vpop.f32.mrf.mxu0
    %v520 = vadd.f32 %v63, %v519
    %v521 = vpop.f32.mrf.mxu0
    %522 = vmatprep.mubr.f32.mxu0 0.0
    %523 = vmatmul.mubr.f32.gmra.mxu0 %v433
    %v524 = vpop.f32.mrf.mxu0
    %v525 = vadd.f32 %v64, %v524
    %v526 = vpop.f32.mrf.mxu0
    %527 = vdwg.mxu0
    %528 = vrot.lane.b32.xlu0 %v294, 96
    %v529 = vpop.permute.xlu0 %528
    %530 = vrot.lane.b32.xlu0 %v296, 96
    %v531 = vpop.permute.xlu0 %530
    %532 = vrot.lane.b32.xlu0 %v298, 96
    %v533 = vpop.permute.xlu0 %532
    %534 = vrot.lane.b32.xlu0 %v300, 96
    %v535 = vpop.permute.xlu0 %534
    %v536 = vsel %vm317, %v266, 0
    %v538 = vsel %vm317, %v268, 0
    %v540 = vsel %vm317, %v270, 0
    %v542 = vsel %vm317, %v272, 0
    %v544 = vsel %vm317, %v529, 0
    %v546 = vsel %vm317, %v531, 0
    %v548 = vsel %vm317, %v533, 0
    %v550 = vsel %vm317, %v535, 0
    %552 = vmatprep.subr.mxu0 0.0
    %553 = vmatpush1.xpose.msra.mxu0 0.0
    %554 = vmatprep.subr.mxu0 0.0
    %555 = vmatpush1.xpose.msra.mxu0 0.0
    %556 = vmatprep.subr.mxu0 0.0
    %557 = vmatpush1.xpose.msra.mxu0 0.0
    %558 = vmatprep.subr.mxu0 0.0
    %559 = vmatpush1.xpose.msra.mxu0 0.0
    %560 = vmatprep.subr.mxu0 0.0
    %561 = vmatpush1.xpose.msra.mxu0 0.0
    %562 = vmatprep.subr.mxu0 0.0
    %563 = vmatpush1.xpose.msra.mxu0 0.0
    %564 = vmatprep.subr.mxu0 0.0
    %565 = vmatpush1.xpose.msra.mxu0 0.0
    %566 = vmatprep.subr.mxu0 0.0
    %567 = vmatpush1.xpose.msra.mxu0 0.0
    %568 = vmatprep.subr.mxu0 0.0
    %569 = vmatpush1.xpose.msra.mxu0 0.0
    %570 = vmatprep.subr.mxu0 0.0
    %571 = vmatpush1.xpose.msra.mxu0 0.0
    %572 = vmatprep.subr.mxu0 0.0
    %573 = vmatpush1.xpose.msra.mxu0 0.0
    %574 = vmatprep.subr.mxu0 0.0
    %575 = vmatpush1.xpose.msra.mxu0 0.0
    %576 = vmatprep.subr.mxu0 0.0
    %577 = vmatpush1.xpose.msra.mxu0 %v550
    %578 = vmatprep.subr.mxu0 0.0
    %579 = vmatpush1.xpose.msra.mxu0 %v548
    %580 = vmatprep.subr.mxu0 0.0
    %581 = vmatpush1.xpose.msra.mxu0 %v546
    %582 = vmatprep.subr.mxu0 0.0
    %583 = vmatpush1.xpose.msra.mxu0 %v544
    %584 = vmatprep.subr.mxu0 0.0
    %585 = vmatpush2.xpose.msra.mxu0 0.0
    %586 = vmatprep.subr.mxu0 0.0
    %587 = vmatpush2.xpose.msra.mxu0 0.0
    %588 = vmatprep.subr.mxu0 0.0
    %589 = vmatpush2.xpose.msra.mxu0 0.0
    %590 = vmatprep.subr.mxu0 0.0
    %591 = vmatpush2.xpose.msra.mxu0 0.0
    %592 = vmatprep.subr.mxu0 0.0
    %593 = vmatpush2.xpose.msra.mxu0 0.0
    %594 = vmatprep.subr.mxu0 0.0
    %595 = vmatpush2.xpose.msra.mxu0 0.0
    %596 = vmatprep.subr.mxu0 0.0
    %597 = vmatpush2.xpose.msra.mxu0 0.0
    %598 = vmatprep.subr.mxu0 0.0
    %599 = vmatpush2.xpose.msra.mxu0 0.0
    %600 = vmatprep.subr.mxu0 0.0
    %601 = vmatpush2.xpose.msra.mxu0 0.0
    %602 = vmatprep.subr.mxu0 0.0
    %603 = vmatpush2.xpose.msra.mxu0 0.0
    %604 = vmatprep.subr.mxu0 0.0
    %605 = vmatpush2.xpose.msra.mxu0 0.0
    %606 = vmatprep.subr.mxu0 0.0
    %607 = vmatpush2.xpose.msra.mxu0 0.0
    %608 = vmatprep.subr.mxu0 0.0
    %609 = vmatpush2.xpose.msra.mxu0 0.0
    %610 = vmatprep.subr.mxu0 0.0
    %611 = vmatpush2.xpose.msra.mxu0 0.0
    %612 = vmatprep.subr.mxu0 0.0
    %613 = vmatpush2.xpose.msra.mxu0 0.0
    %614 = vmatprep.subr.mxu0 0.0
    %615 = vmatpush2.xpose.msra.mxu0 0.0
    %616 = vmatprep.mubr.f32.mxu0 0.0
    %617 = vmatmul.mubr.f32.gmra.mxu0 %v536
    %v618 = vpop.f32.mrf.mxu0
    %v619 = vadd.f32 %v61, %v618
    %v620 = vpop.f32.mrf.mxu0
    %621 = vmatprep.mubr.f32.mxu0 0.0
    %622 = vmatmul.mubr.f32.gmra.mxu0 %v538
    %v623 = vpop.f32.mrf.mxu0
    %v624 = vadd.f32 %v62, %v623
    %v625 = vpop.f32.mrf.mxu0
    %626 = vmatprep.mubr.f32.mxu0 0.0
    %627 = vmatmul.mubr.f32.gmra.mxu0 %v540
    %v628 = vpop.f32.mrf.mxu0
    %v629 = vadd.f32 %v63, %v628
    %v630 = vpop.f32.mrf.mxu0
    %631 = vmatprep.mubr.f32.mxu0 0.0
    %632 = vmatmul.mubr.f32.gmra.mxu0 %v542
    %v633 = vpop.f32.mrf.mxu0
    %v634 = vadd.f32 %v64, %v633
    %v635 = vpop.f32.mrf.mxu0
    %636 = vdwg.mxu0
    %637 = vrot.lane.b32.xlu0 %v302, 96
    %v638 = vpop.permute.xlu0 %637
    %639 = vrot.lane.b32.xlu0 %v304, 96
    %v640 = vpop.permute.xlu0 %639
    %641 = vrot.lane.b32.xlu0 %v306, 96
    %v642 = vpop.permute.xlu0 %641
    %643 = vrot.lane.b32.xlu0 %v308, 96
    %v644 = vpop.permute.xlu0 %643
    %v645 = vsel %vm317, %v274, 0
    %v647 = vsel %vm317, %v276, 0
    %v649 = vsel %vm317, %v278, 0
    %v651 = vsel %vm317, %v280, 0
    %v653 = vsel %vm317, %v638, 0
    %v655 = vsel %vm317, %v640, 0
    %v657 = vsel %vm317, %v642, 0
    %v659 = vsel %vm317, %v644, 0
    %661 = vmatprep.subr.mxu0 0.0
    %662 = vmatpush1.xpose.msra.mxu0 0.0
    %663 = vmatprep.subr.mxu0 0.0
    %664 = vmatpush1.xpose.msra.mxu0 0.0
    %665 = vmatprep.subr.mxu0 0.0
    %666 = vmatpush1.xpose.msra.mxu0 0.0
    %667 = vmatprep.subr.mxu0 0.0
    %668 = vmatpush1.xpose.msra.mxu0 0.0
    %669 = vmatprep.subr.mxu0 0.0
    %670 = vmatpush1.xpose.msra.mxu0 0.0
    %671 = vmatprep.subr.mxu0 0.0
    %672 = vmatpush1.xpose.msra.mxu0 0.0
    %673 = vmatprep.subr.mxu0 0.0
    %674 = vmatpush1.xpose.msra.mxu0 0.0
    %675 = vmatprep.subr.mxu0 0.0
    %676 = vmatpush1.xpose.msra.mxu0 0.0
    %677 = vmatprep.subr.mxu0 0.0
    %678 = vmatpush1.xpose.msra.mxu0 0.0
    %679 = vmatprep.subr.mxu0 0.0
    %680 = vmatpush1.xpose.msra.mxu0 0.0
    %681 = vmatprep.subr.mxu0 0.0
    %682 = vmatpush1.xpose.msra.mxu0 0.0
    %683 = vmatprep.subr.mxu0 0.0
    %684 = vmatpush1.xpose.msra.mxu0 0.0
    %685 = vmatprep.subr.mxu0 0.0
    %686 = vmatpush1.xpose.msra.mxu0 %v659
    %687 = vmatprep.subr.mxu0 0.0
    %688 = vmatpush1.xpose.msra.mxu0 %v657
    %689 = vmatprep.subr.mxu0 0.0
    %690 = vmatpush1.xpose.msra.mxu0 %v655
    %691 = vmatprep.subr.mxu0 0.0
    %692 = vmatpush1.xpose.msra.mxu0 %v653
    %693 = vmatprep.subr.mxu0 0.0
    %694 = vmatpush2.xpose.msra.mxu0 0.0
    %695 = vmatprep.subr.mxu0 0.0
    %696 = vmatpush2.xpose.msra.mxu0 0.0
    %697 = vmatprep.subr.mxu0 0.0
    %698 = vmatpush2.xpose.msra.mxu0 0.0
    %699 = vmatprep.subr.mxu0 0.0
    %700 = vmatpush2.xpose.msra.mxu0 0.0
    %701 = vmatprep.subr.mxu0 0.0
    %702 = vmatpush2.xpose.msra.mxu0 0.0
    %703 = vmatprep.subr.mxu0 0.0
    %704 = vmatpush2.xpose.msra.mxu0 0.0
    %705 = vmatprep.subr.mxu0 0.0
    %706 = vmatpush2.xpose.msra.mxu0 0.0
    %707 = vmatprep.subr.mxu0 0.0
    %708 = vmatpush2.xpose.msra.mxu0 0.0
    %709 = vmatprep.subr.mxu0 0.0
    %710 = vmatpush2.xpose.msra.mxu0 0.0
    %711 = vmatprep.subr.mxu0 0.0
    %712 = vmatpush2.xpose.msra.mxu0 0.0
    %713 = vmatprep.subr.mxu0 0.0
    %714 = vmatpush2.xpose.msra.mxu0 0.0
    %715 = vmatprep.subr.mxu0 0.0
    %716 = vmatpush2.xpose.msra.mxu0 0.0
    %717 = vmatprep.subr.mxu0 0.0
    %718 = vmatpush2.xpose.msra.mxu0 0.0
    %719 = vmatprep.subr.mxu0 0.0
    %720 = vmatpush2.xpose.msra.mxu0 0.0
    %721 = vmatprep.subr.mxu0 0.0
    %722 = vmatpush2.xpose.msra.mxu0 0.0
    %723 = vmatprep.subr.mxu0 0.0
    %724 = vmatpush2.xpose.msra.mxu0 0.0
    %725 = vmatprep.mubr.f32.mxu0 0.0
    %726 = vmatmul.mubr.f32.gmra.mxu0 %v645
    %v727 = vpop.f32.mrf.mxu0
    %v728 = vadd.f32 %v61, %v727
    %v729 = vpop.f32.mrf.mxu0
    %730 = vmatprep.mubr.f32.mxu0 0.0
    %731 = vmatmul.mubr.f32.gmra.mxu0 %v647
    %v732 = vpop.f32.mrf.mxu0
    %v733 = vadd.f32 %v62, %v732
    %v734 = vpop.f32.mrf.mxu0
    %735 = vmatprep.mubr.f32.mxu0 0.0
    %736 = vmatmul.mubr.f32.gmra.mxu0 %v649
    %v737 = vpop.f32.mrf.mxu0
    %v738 = vadd.f32 %v63, %v737
    %v739 = vpop.f32.mrf.mxu0
    %740 = vmatprep.mubr.f32.mxu0 0.0
    %741 = vmatmul.mubr.f32.gmra.mxu0 %v651
    %v742 = vpop.f32.mrf.mxu0
    %v743 = vadd.f32 %v64, %v742
    %v744 = vpop.f32.mrf.mxu0
    %745 = vdwg.mxu0
    %v746 = vsel %vm67, %v401, -inf
    %747 = vmax.xlane.f32.xlu0 %v746
    %v748 = vpop.xlane.xlu0 %747
    %v749 = vsel %vm67, %v406, -inf
    %750 = vmax.xlane.f32.xlu0 %v749
    %v751 = vpop.xlane.xlu0 %750
    %v752 = vsel %vm67, %v411, -inf
    %753 = vmax.xlane.f32.xlu0 %v752
    %v754 = vpop.xlane.xlu0 %753
    %v755 = vsel %vm67, %v416, -inf
    %756 = vmax.xlane.f32.xlu0 %v755
    %v757 = vpop.xlane.xlu0 %756
    %v758 = vsel %vm67, %v510, -inf
    %759 = vmax.xlane.f32.xlu0 %v758
    %v760 = vpop.xlane.xlu0 %759
    %v761 = vsel %vm67, %v515, -inf
    %762 = vmax.xlane.f32.xlu0 %v761
    %v763 = vpop.xlane.xlu0 %762
    %v764 = vsel %vm67, %v520, -inf
    %765 = vmax.xlane.f32.xlu0 %v764
    %v766 = vpop.xlane.xlu0 %765
    %v767 = vsel %vm67, %v525, -inf
    %768 = vmax.xlane.f32.xlu0 %v767
    %v769 = vpop.xlane.xlu0 %768
    %v770 = vsel %vm67, %v619, -inf
    %771 = vmax.xlane.f32.xlu0 %v770
    %v772 = vpop.xlane.xlu0 %771
    %v773 = vsel %vm67, %v624, -inf
    %774 = vmax.xlane.f32.xlu0 %v773
    %v775 = vpop.xlane.xlu0 %774
    %v776 = vsel %vm67, %v629, -inf
    %777 = vmax.xlane.f32.xlu0 %v776
    %v778 = vpop.xlane.xlu0 %777
    %v779 = vsel %vm67, %v634, -inf
    %780 = vmax.xlane.f32.xlu0 %v779
    %v781 = vpop.xlane.xlu0 %780
    %v782 = vsel %vm67, %v728, -inf
    %783 = vmax.xlane.f32.xlu0 %v782
    %v784 = vpop.xlane.xlu0 %783
    %v785 = vsel %vm67, %v733, -inf
    %786 = vmax.xlane.f32.xlu0 %v785
    %v787 = vpop.xlane.xlu0 %786
    %v788 = vsel %vm67, %v738, -inf
    %789 = vmax.xlane.f32.xlu0 %v788
    %v790 = vpop.xlane.xlu0 %789
    %v791 = vsel %vm67, %v743, -inf
    %792 = vmax.xlane.f32.xlu0 %v791
    %v793 = vpop.xlane.xlu0 %792
    %v794 = vsub.f32 %v401, %v748
    %v795 = vsub.f32 %v406, %v751
    %v796 = vsub.f32 %v411, %v754
    %v797 = vsub.f32 %v416, %v757
    %v798 = vsub.f32 %v510, %v760
    %v799 = vsub.f32 %v515, %v763
    %v800 = vsub.f32 %v520, %v766
    %v801 = vsub.f32 %v525, %v769
    %v802 = vsub.f32 %v619, %v772
    %v803 = vsub.f32 %v624, %v775
    %v804 = vsub.f32 %v629, %v778
    %v805 = vsub.f32 %v634, %v781
    %v806 = vsub.f32 %v728, %v784
    %v807 = vsub.f32 %v733, %v787
    %v808 = vsub.f32 %v738, %v790
    %v809 = vsub.f32 %v743, %v793
    %v810 = vmul.f32 %v794, 1.442695
    %v811 = vpow.pop %v810
    %v812 = vmul.f32 %v795, 1.442695
    %v813 = vpow.pop %v812
    %v814 = vmul.f32 %v796, 1.442695
    %v815 = vpow.pop %v814
    %v816 = vmul.f32 %v797, 1.442695
    %v817 = vpow.pop %v816
    %v818 = vmul.f32 %v798, 1.442695
    %v819 = vpow.pop %v818
    %v820 = vmul.f32 %v799, 1.442695
    %v821 = vpow.pop %v820
    %v822 = vmul.f32 %v800, 1.442695
    %v823 = vpow.pop %v822
    %v824 = vmul.f32 %v801, 1.442695
    %v825 = vpow.pop %v824
    %v826 = vmul.f32 %v802, 1.442695
    %v827 = vpow.pop %v826
    %v828 = vmul.f32 %v803, 1.442695
    %v829 = vpow.pop %v828
    %v830 = vmul.f32 %v804, 1.442695
    %v831 = vpow.pop %v830
    %v832 = vmul.f32 %v805, 1.442695
    %v833 = vpow.pop %v832
    %v834 = vmul.f32 %v806, 1.442695
    %v835 = vpow.pop %v834
    %v836 = vmul.f32 %v807, 1.442695
    %v837 = vpow.pop %v836
    %v838 = vmul.f32 %v808, 1.442695
    %v839 = vpow.pop %v838
    %v840 = vmul.f32 %v809, 1.442695
    %v841 = vpow.pop %v840
    %v842 = vsel %vm67, %v811, 0.0
    %843 = vadd.xlane.f32.xlu0 %v842
    %v844 = vpop.xlane.xlu0 %843
    %v845 = vsel %vm67, %v813, 0.0
    %846 = vadd.xlane.f32.xlu0 %v845
    %v847 = vpop.xlane.xlu0 %846
    %v848 = vsel %vm67, %v815, 0.0
    %849 = vadd.xlane.f32.xlu0 %v848
    %v850 = vpop.xlane.xlu0 %849
    %v851 = vsel %vm67, %v817, 0.0
    %852 = vadd.xlane.f32.xlu0 %v851
    %v853 = vpop.xlane.xlu0 %852
    %v854 = vsel %vm67, %v819, 0.0
    %855 = vadd.xlane.f32.xlu0 %v854
    %v856 = vpop.xlane.xlu0 %855
    %v857 = vsel %vm67, %v821, 0.0
    %858 = vadd.xlane.f32.xlu0 %v857
    %v859 = vpop.xlane.xlu0 %858
    %v860 = vsel %vm67, %v823, 0.0
    %861 = vadd.xlane.f32.xlu0 %v860
    %v862 = vpop.xlane.xlu0 %861
    %v863 = vsel %vm67, %v825, 0.0
    %864 = vadd.xlane.f32.xlu0 %v863
    %v865 = vpop.xlane.xlu0 %864
    %v866 = vsel %vm67, %v827, 0.0
    %867 = vadd.xlane.f32.xlu0 %v866
    %v868 = vpop.xlane.xlu0 %867
    %v869 = vsel %vm67, %v829, 0.0
    %870 = vadd.xlane.f32.xlu0 %v869
    %v871 = vpop.xlane.xlu0 %870
    %v872 = vsel %vm67, %v831, 0.0
    %873 = vadd.xlane.f32.xlu0 %v872
    %v874 = vpop.xlane.xlu0 %873
    %v875 = vsel %vm67, %v833, 0.0
    %876 = vadd.xlane.f32.xlu0 %v875
    %v877 = vpop.xlane.xlu0 %876
    %v878 = vsel %vm67, %v835, 0.0
    %879 = vadd.xlane.f32.xlu0 %v878
    %v880 = vpop.xlane.xlu0 %879
    %v881 = vsel %vm67, %v837, 0.0
    %882 = vadd.xlane.f32.xlu0 %v881
    %v883 = vpop.xlane.xlu0 %882
    %v884 = vsel %vm67, %v839, 0.0
    %885 = vadd.xlane.f32.xlu0 %v884
    %v886 = vpop.xlane.xlu0 %885
    %v887 = vsel %vm67, %v841, 0.0
    %888 = vadd.xlane.f32.xlu0 %v887
    %v889 = vpop.xlane.xlu0 %888
    %v890 = vrcp.pop %v844
    %v891 = vrcp.pop %v847
    %v892 = vrcp.pop %v850
    %v893 = vrcp.pop %v853
    %v894 = vrcp.pop %v856
    %v895 = vrcp.pop %v859
    %v896 = vrcp.pop %v862
    %v897 = vrcp.pop %v865
    %v898 = vrcp.pop %v868
    %v899 = vrcp.pop %v871
    %v900 = vrcp.pop %v874
    %v901 = vrcp.pop %v877
    %v902 = vrcp.pop %v880
    %v903 = vrcp.pop %v883
    %v904 = vrcp.pop %v886
    %v905 = vrcp.pop %v889
    %v906 = vmul.f32 %v811, %v890
    %v907 = vmul.f32 %v813, %v891
    %v908 = vmul.f32 %v815, %v892
    %v909 = vmul.f32 %v817, %v893
    %v910 = vmul.f32 %v819, %v894
    %v911 = vmul.f32 %v821, %v895
    %v912 = vmul.f32 %v823, %v896
    %v913 = vmul.f32 %v825, %v897
    %v914 = vmul.f32 %v827, %v898
    %v915 = vmul.f32 %v829, %v899
    %v916 = vmul.f32 %v831, %v900
    %v917 = vmul.f32 %v833, %v901
    %v918 = vmul.f32 %v835, %v902
    %v919 = vmul.f32 %v837, %v903
    %v920 = vmul.f32 %v839, %v904
    %v921 = vmul.f32 %v841, %v905
    %922 = vrot.lane.b32.xlu0 %v231, 64
    %v923 = vpop.permute.xlu0 %922
    %924 = vrot.lane.b32.xlu0 %v236, 64
    %v925 = vpop.permute.xlu0 %924
    %926 = vrot.lane.b32.xlu0 %v241, 64
    %v927 = vpop.permute.xlu0 %926
    %928 = vrot.lane.b32.xlu0 %v246, 64
    %v929 = vpop.permute.xlu0 %928
    %v935 = vsel %vm67, %v906, 0
    %v938 = vsel %vm67, %v907, 0
    %v941 = vsel %vm67, %v908, 0
    %v944 = vsel %vm67, %v909, 0
    %946 = vmatprep.subr.mxu0 0.0
    %947 = vmatpush1.msra.mxu0 0.0
    %948 = vmatprep.subr.mxu0 0.0
    %949 = vmatpush1.msra.mxu0 0.0
    %950 = vmatprep.subr.mxu0 0.0
    %951 = vmatpush1.msra.mxu0 0.0
    %952 = vmatprep.subr.mxu0 0.0
    %953 = vmatpush1.msra.mxu0 0.0
    %954 = vmatprep.subr.mxu0 0.0
    %955 = vmatpush1.msra.mxu0 0.0
    %956 = vmatprep.subr.mxu0 0.0
    %957 = vmatpush1.msra.mxu0 0.0
    %958 = vmatprep.subr.mxu0 0.0
    %959 = vmatpush1.msra.mxu0 0.0
    %960 = vmatprep.subr.mxu0 0.0
    %961 = vmatpush1.msra.mxu0 0.0
    %962 = vmatprep.subr.mxu0 0.0
    %963 = vmatpush1.msra.mxu0 0.0
    %964 = vmatprep.subr.mxu0 0.0
    %965 = vmatpush1.msra.mxu0 0.0
    %966 = vmatprep.subr.mxu0 0.0
    %967 = vmatpush1.msra.mxu0 0.0
    %968 = vmatprep.subr.mxu0 0.0
    %969 = vmatpush1.msra.mxu0 0.0
    %970 = vmatprep.subr.mxu0 0.0
    %971 = vmatpush1.msra.mxu0 %v929
    %972 = vmatprep.subr.mxu0 0.0
    %973 = vmatpush1.msra.mxu0 %v927
    %974 = vmatprep.subr.mxu0 0.0
    %975 = vmatpush1.msra.mxu0 %v925
    %976 = vmatprep.subr.mxu0 0.0
    %977 = vmatpush1.msra.mxu0 %v923
    %978 = vmatprep.subr.mxu0 0.0
    %979 = vmatpush2.msra.mxu0 0.0
    %980 = vmatprep.subr.mxu0 0.0
    %981 = vmatpush2.msra.mxu0 0.0
    %982 = vmatprep.subr.mxu0 0.0
    %983 = vmatpush2.msra.mxu0 0.0
    %984 = vmatprep.subr.mxu0 0.0
    %985 = vmatpush2.msra.mxu0 0.0
    %986 = vmatprep.subr.mxu0 0.0
    %987 = vmatpush2.msra.mxu0 0.0
    %988 = vmatprep.subr.mxu0 0.0
    %989 = vmatpush2.msra.mxu0 0.0
    %990 = vmatprep.subr.mxu0 0.0
    %991 = vmatpush2.msra.mxu0 0.0
    %992 = vmatprep.subr.mxu0 0.0
    %993 = vmatpush2.msra.mxu0 0.0
    %994 = vmatprep.subr.mxu0 0.0
    %995 = vmatpush2.msra.mxu0 0.0
    %996 = vmatprep.subr.mxu0 0.0
    %997 = vmatpush2.msra.mxu0 0.0
    %998 = vmatprep.subr.mxu0 0.0
    %999 = vmatpush2.msra.mxu0 0.0
    %1000 = vmatprep.subr.mxu0 0.0
    %1001 = vmatpush2.msra.mxu0 0.0
    %1002 = vmatprep.subr.mxu0 0.0
    %1003 = vmatpush2.msra.mxu0 0.0
    %1004 = vmatprep.subr.mxu0 0.0
    %1005 = vmatpush2.msra.mxu0 0.0
    %1006 = vmatprep.subr.mxu0 0.0
    %1007 = vmatpush2.msra.mxu0 0.0
    %1008 = vmatprep.subr.mxu0 0.0
    %1009 = vmatpush2.msra.mxu0 0.0
    %1010 = vmatprep.mubr.f32.mxu0 0.0
    %1011 = vmatmul.mubr.f32.gmra.mxu0 %v935
    %v1012 = vpop.f32.mrf.mxu0
    %v1013 = vadd.f32 0.0, %v1012
    %v1014 = vpop.f32.mrf.mxu0
    %1015 = vmatprep.mubr.f32.mxu0 0.0
    %1016 = vmatmul.mubr.f32.gmra.mxu0 %v938
    %v1017 = vpop.f32.mrf.mxu0
    %v1018 = vadd.f32 0.0, %v1017
    %v1019 = vpop.f32.mrf.mxu0
    %1020 = vmatprep.mubr.f32.mxu0 0.0
    %1021 = vmatmul.mubr.f32.gmra.mxu0 %v941
    %v1022 = vpop.f32.mrf.mxu0
    %v1023 = vadd.f32 0.0, %v1022
    %v1024 = vpop.f32.mrf.mxu0
    %1025 = vmatprep.mubr.f32.mxu0 0.0
    %1026 = vmatmul.mubr.f32.gmra.mxu0 %v944
    %v1027 = vpop.f32.mrf.mxu0
    %v1028 = vadd.f32 0.0, %v1027
    %v1029 = vpop.f32.mrf.mxu0
    %1030 = vdwg.mxu0
    %1031 = vrot.lane.b32.xlu0 %v286, 64
    %v1032 = vpop.permute.xlu0 %1031
    %1033 = vrot.lane.b32.xlu0 %v288, 64
    %v1034 = vpop.permute.xlu0 %1033
    %1035 = vrot.lane.b32.xlu0 %v290, 64
    %v1036 = vpop.permute.xlu0 %1035
    %1037 = vrot.lane.b32.xlu0 %v292, 64
    %v1038 = vpop.permute.xlu0 %1037
    %v1044 = vsel %vm67, %v910, 0
    %v1047 = vsel %vm67, %v911, 0
    %v1050 = vsel %vm67, %v912, 0
    %v1053 = vsel %vm67, %v913, 0
    %1055 = vmatprep.subr.mxu0 0.0
    %1056 = vmatpush1.msra.mxu0 0.0
    %1057 = vmatprep.subr.mxu0 0.0
    %1058 = vmatpush1.msra.mxu0 0.0
    %1059 = vmatprep.subr.mxu0 0.0
    %1060 = vmatpush1.msra.mxu0 0.0
    %1061 = vmatprep.subr.mxu0 0.0
    %1062 = vmatpush1.msra.mxu0 0.0
    %1063 = vmatprep.subr.mxu0 0.0
    %1064 = vmatpush1.msra.mxu0 0.0
    %1065 = vmatprep.subr.mxu0 0.0
    %1066 = vmatpush1.msra.mxu0 0.0
    %1067 = vmatprep.subr.mxu0 0.0
    %1068 = vmatpush1.msra.mxu0 0.0
    %1069 = vmatprep.subr.mxu0 0.0
    %1070 = vmatpush1.msra.mxu0 0.0
    %1071 = vmatprep.subr.mxu0 0.0
    %1072 = vmatpush1.msra.mxu0 0.0
    %1073 = vmatprep.subr.mxu0 0.0
    %1074 = vmatpush1.msra.mxu0 0.0
    %1075 = vmatprep.subr.mxu0 0.0
    %1076 = vmatpush1.msra.mxu0 0.0
    %1077 = vmatprep.subr.mxu0 0.0
    %1078 = vmatpush1.msra.mxu0 0.0
    %1079 = vmatprep.subr.mxu0 0.0
    %1080 = vmatpush1.msra.mxu0 %v1038
    %1081 = vmatprep.subr.mxu0 0.0
    %1082 = vmatpush1.msra.mxu0 %v1036
    %1083 = vmatprep.subr.mxu0 0.0
    %1084 = vmatpush1.msra.mxu0 %v1034
    %1085 = vmatprep.subr.mxu0 0.0
    %1086 = vmatpush1.msra.mxu0 %v1032
    %1087 = vmatprep.subr.mxu0 0.0
    %1088 = vmatpush2.msra.mxu0 0.0
    %1089 = vmatprep.subr.mxu0 0.0
    %1090 = vmatpush2.msra.mxu0 0.0
    %1091 = vmatprep.subr.mxu0 0.0
    %1092 = vmatpush2.msra.mxu0 0.0
    %1093 = vmatprep.subr.mxu0 0.0
    %1094 = vmatpush2.msra.mxu0 0.0
    %1095 = vmatprep.subr.mxu0 0.0
    %1096 = vmatpush2.msra.mxu0 0.0
    %1097 = vmatprep.subr.mxu0 0.0
    %1098 = vmatpush2.msra.mxu0 0.0
    %1099 = vmatprep.subr.mxu0 0.0
    %1100 = vmatpush2.msra.mxu0 0.0
    %1101 = vmatprep.subr.mxu0 0.0
    %1102 = vmatpush2.msra.mxu0 0.0
    %1103 = vmatprep.subr.mxu0 0.0
    %1104 = vmatpush2.msra.mxu0 0.0
    %1105 = vmatprep.subr.mxu0 0.0
    %1106 = vmatpush2.msra.mxu0 0.0
    %1107 = vmatprep.subr.mxu0 0.0
    %1108 = vmatpush2.msra.mxu0 0.0
    %1109 = vmatprep.subr.mxu0 0.0
    %1110 = vmatpush2.msra.mxu0 0.0
    %1111 = vmatprep.subr.mxu0 0.0
    %1112 = vmatpush2.msra.mxu0 0.0
    %1113 = vmatprep.subr.mxu0 0.0
    %1114 = vmatpush2.msra.mxu0 0.0
    %1115 = vmatprep.subr.mxu0 0.0
    %1116 = vmatpush2.msra.mxu0 0.0
    %1117 = vmatprep.subr.mxu0 0.0
    %1118 = vmatpush2.msra.mxu0 0.0
    %1119 = vmatprep.mubr.f32.mxu0 0.0
    %1120 = vmatmul.mubr.f32.gmra.mxu0 %v1044
    %v1121 = vpop.f32.mrf.mxu0
    %v1122 = vadd.f32 0.0, %v1121
    %v1123 = vpop.f32.mrf.mxu0
    %1124 = vmatprep.mubr.f32.mxu0 0.0
    %1125 = vmatmul.mubr.f32.gmra.mxu0 %v1047
    %v1126 = vpop.f32.mrf.mxu0
    %v1127 = vadd.f32 0.0, %v1126
    %v1128 = vpop.f32.mrf.mxu0
    %1129 = vmatprep.mubr.f32.mxu0 0.0
    %1130 = vmatmul.mubr.f32.gmra.mxu0 %v1050
    %v1131 = vpop.f32.mrf.mxu0
    %v1132 = vadd.f32 0.0, %v1131
    %v1133 = vpop.f32.mrf.mxu0
    %1134 = vmatprep.mubr.f32.mxu0 0.0
    %1135 = vmatmul.mubr.f32.gmra.mxu0 %v1053
    %v1136 = vpop.f32.mrf.mxu0
    %v1137 = vadd.f32 0.0, %v1136
    %v1138 = vpop.f32.mrf.mxu0
    %1139 = vdwg.mxu0
    %1140 = vrot.lane.b32.xlu0 %v294, 64
    %v1141 = vpop.permute.xlu0 %1140
    %1142 = vrot.lane.b32.xlu0 %v296, 64
    %v1143 = vpop.permute.xlu0 %1142
    %1144 = vrot.lane.b32.xlu0 %v298, 64
    %v1145 = vpop.permute.xlu0 %1144
    %1146 = vrot.lane.b32.xlu0 %v300, 64
    %v1147 = vpop.permute.xlu0 %1146
    %v1153 = vsel %vm67, %v914, 0
    %v1156 = vsel %vm67, %v915, 0
    %v1159 = vsel %vm67, %v916, 0
    %v1162 = vsel %vm67, %v917, 0
    %1164 = vmatprep.subr.mxu0 0.0
    %1165 = vmatpush1.msra.mxu0 0.0
    %1166 = vmatprep.subr.mxu0 0.0
    %1167 = vmatpush1.msra.mxu0 0.0
    %1168 = vmatprep.subr.mxu0 0.0
    %1169 = vmatpush1.msra.mxu0 0.0
    %1170 = vmatprep.subr.mxu0 0.0
    %1171 = vmatpush1.msra.mxu0 0.0
    %1172 = vmatprep.subr.mxu0 0.0
    %1173 = vmatpush1.msra.mxu0 0.0
    %1174 = vmatprep.subr.mxu0 0.0
    %1175 = vmatpush1.msra.mxu0 0.0
    %1176 = vmatprep.subr.mxu0 0.0
    %1177 = vmatpush1.msra.mxu0 0.0
    %1178 = vmatprep.subr.mxu0 0.0
    %1179 = vmatpush1.msra.mxu0 0.0
    %1180 = vmatprep.subr.mxu0 0.0
    %1181 = vmatpush1.msra.mxu0 0.0
    %1182 = vmatprep.subr.mxu0 0.0
    %1183 = vmatpush1.msra.mxu0 0.0
    %1184 = vmatprep.subr.mxu0 0.0
    %1185 = vmatpush1.msra.mxu0 0.0
    %1186 = vmatprep.subr.mxu0 0.0
    %1187 = vmatpush1.msra.mxu0 0.0
    %1188 = vmatprep.subr.mxu0 0.0
    %1189 = vmatpush1.msra.mxu0 %v1147
    %1190 = vmatprep.subr.mxu0 0.0
    %1191 = vmatpush1.msra.mxu0 %v1145
    %1192 = vmatprep.subr.mxu0 0.0
    %1193 = vmatpush1.msra.mxu0 %v1143
    %1194 = vmatprep.subr.mxu0 0.0
    %1195 = vmatpush1.msra.mxu0 %v1141
    %1196 = vmatprep.subr.mxu0 0.0
    %1197 = vmatpush2.msra.mxu0 0.0
    %1198 = vmatprep.subr.mxu0 0.0
    %1199 = vmatpush2.msra.mxu0 0.0
    %1200 = vmatprep.subr.mxu0 0.0
    %1201 = vmatpush2.msra.mxu0 0.0
    %1202 = vmatprep.subr.mxu0 0.0
    %1203 = vmatpush2.msra.mxu0 0.0
    %1204 = vmatprep.subr.mxu0 0.0
    %1205 = vmatpush2.msra.mxu0 0.0
    %1206 = vmatprep.subr.mxu0 0.0
    %1207 = vmatpush2.msra.mxu0 0.0
    %1208 = vmatprep.subr.mxu0 0.0
    %1209 = vmatpush2.msra.mxu0 0.0
    %1210 = vmatprep.subr.mxu0 0.0
    %1211 = vmatpush2.msra.mxu0 0.0
    %1212 = vmatprep.subr.mxu0 0.0
    %1213 = vmatpush2.msra.mxu0 0.0
    %1214 = vmatprep.subr.mxu0 0.0
    %1215 = vmatpush2.msra.mxu0 0.0
    %1216 = vmatprep.subr.mxu0 0.0
    %1217 = vmatpush2.msra.mxu0 0.0
    %1218 = vmatprep.subr.mxu0 0.0
    %1219 = vmatpush2.msra.mxu0 0.0
    %1220 = vmatprep.subr.mxu0 0.0
    %1221 = vmatpush2.msra.mxu0 0.0
    %1222 = vmatprep.subr.mxu0 0.0
    %1223 = vmatpush2.msra.mxu0 0.0
    %1224 = vmatprep.subr.mxu0 0.0
    %1225 = vmatpush2.msra.mxu0 0.0
    %1226 = vmatprep.subr.mxu0 0.0
    %1227 = vmatpush2.msra.mxu0 0.0
    %1228 = vmatprep.mubr.f32.mxu0 0.0
    %1229 = vmatmul.mubr.f32.gmra.mxu0 %v1153
    %v1230 = vpop.f32.mrf.mxu0
    %v1231 = vadd.f32 0.0, %v1230
    %v1232 = vpop.f32.mrf.mxu0
    %1233 = vmatprep.mubr.f32.mxu0 0.0
    %1234 = vmatmul.mubr.f32.gmra.mxu0 %v1156
    %v1235 = vpop.f32.mrf.mxu0
    %v1236 = vadd.f32 0.0, %v1235
    %v1237 = vpop.f32.mrf.mxu0
    %1238 = vmatprep.mubr.f32.mxu0 0.0
    %1239 = vmatmul.mubr.f32.gmra.mxu0 %v1159
    %v1240 = vpop.f32.mrf.mxu0
    %v1241 = vadd.f32 0.0, %v1240
    %v1242 = vpop.f32.mrf.mxu0
    %1243 = vmatprep.mubr.f32.mxu0 0.0
    %1244 = vmatmul.mubr.f32.gmra.mxu0 %v1162
    %v1245 = vpop.f32.mrf.mxu0
    %v1246 = vadd.f32 0.0, %v1245
    %v1247 = vpop.f32.mrf.mxu0
    %1248 = vdwg.mxu0
    %1249 = vrot.lane.b32.xlu0 %v302, 64
    %v1250 = vpop.permute.xlu0 %1249
    %1251 = vrot.lane.b32.xlu0 %v304, 64
    %v1252 = vpop.permute.xlu0 %1251
    %1253 = vrot.lane.b32.xlu0 %v306, 64
    %v1254 = vpop.permute.xlu0 %1253
    %1255 = vrot.lane.b32.xlu0 %v308, 64
    %v1256 = vpop.permute.xlu0 %1255
    %v1262 = vsel %vm67, %v918, 0
    %v1265 = vsel %vm67, %v919, 0
    %v1268 = vsel %vm67, %v920, 0
    %v1271 = vsel %vm67, %v921, 0
    %1273 = vmatprep.subr.mxu0 0.0
    %1274 = vmatpush1.msra.mxu0 0.0
    %1275 = vmatprep.subr.mxu0 0.0
    %1276 = vmatpush1.msra.mxu0 0.0
    %1277 = vmatprep.subr.mxu0 0.0
    %1278 = vmatpush1.msra.mxu0 0.0
    %1279 = vmatprep.subr.mxu0 0.0
    %1280 = vmatpush1.msra.mxu0 0.0
    %1281 = vmatprep.subr.mxu0 0.0
    %1282 = vmatpush1.msra.mxu0 0.0
    %1283 = vmatprep.subr.mxu0 0.0
    %1284 = vmatpush1.msra.mxu0 0.0
    %1285 = vmatprep.subr.mxu0 0.0
    %1286 = vmatpush1.msra.mxu0 0.0
    %1287 = vmatprep.subr.mxu0 0.0
    %1288 = vmatpush1.msra.mxu0 0.0
    %1289 = vmatprep.subr.mxu0 0.0
    %1290 = vmatpush1.msra.mxu0 0.0
    %1291 = vmatprep.subr.mxu0 0.0
    %1292 = vmatpush1.msra.mxu0 0.0
    %1293 = vmatprep.subr.mxu0 0.0
    %1294 = vmatpush1.msra.mxu0 0.0
    %1295 = vmatprep.subr.mxu0 0.0
    %1296 = vmatpush1.msra.mxu0 0.0
    %1297 = vmatprep.subr.mxu0 0.0
    %1298 = vmatpush1.msra.mxu0 %v1256
    %1299 = vmatprep.subr.mxu0 0.0
    %1300 = vmatpush1.msra.mxu0 %v1254
    %1301 = vmatprep.subr.mxu0 0.0
    %1302 = vmatpush1.msra.mxu0 %v1252
    %1303 = vmatprep.subr.mxu0 0.0
    %1304 = vmatpush1.msra.mxu0 %v1250
    %1305 = vmatprep.subr.mxu0 0.0
    %1306 = vmatpush2.msra.mxu0 0.0
    %1307 = vmatprep.subr.mxu0 0.0
    %1308 = vmatpush2.msra.mxu0 0.0
    %1309 = vmatprep.subr.mxu0 0.0
    %1310 = vmatpush2.msra.mxu0 0.0
    %1311 = vmatprep.subr.mxu0 0.0
    %1312 = vmatpush2.msra.mxu0 0.0
    %1313 = vmatprep.subr.mxu0 0.0
    %1314 = vmatpush2.msra.mxu0 0.0
    %1315 = vmatprep.subr.mxu0 0.0
    %1316 = vmatpush2.msra.mxu0 0.0
    %1317 = vmatprep.subr.mxu0 0.0
    %1318 = vmatpush2.msra.mxu0 0.0
    %1319 = vmatprep.subr.mxu0 0.0
    %1320 = vmatpush2.msra.mxu0 0.0
    %1321 = vmatprep.subr.mxu0 0.0
    %1322 = vmatpush2.msra.mxu0 0.0
    %1323 = vmatprep.subr.mxu0 0.0
    %1324 = vmatpush2.msra.mxu0 0.0
    %1325 = vmatprep.subr.mxu0 0.0
    %1326 = vmatpush2.msra.mxu0 0.0
    %1327 = vmatprep.subr.mxu0 0.0
    %1328 = vmatpush2.msra.mxu0 0.0
    %1329 = vmatprep.subr.mxu0 0.0
    %1330 = vmatpush2.msra.mxu0 0.0
    %1331 = vmatprep.subr.mxu0 0.0
    %1332 = vmatpush2.msra.mxu0 0.0
    %1333 = vmatprep.subr.mxu0 0.0
    %1334 = vmatpush2.msra.mxu0 0.0
    %1335 = vmatprep.subr.mxu0 0.0
    %1336 = vmatpush2.msra.mxu0 0.0
    %1337 = vmatprep.mubr.f32.mxu0 0.0
    %1338 = vmatmul.mubr.f32.gmra.mxu0 %v1262
    %v1339 = vpop.f32.mrf.mxu0
    %v1340 = vadd.f32 0.0, %v1339
    %v1341 = vpop.f32.mrf.mxu0
    %1342 = vmatprep.mubr.f32.mxu0 0.0
    %1343 = vmatmul.mubr.f32.gmra.mxu0 %v1265
    %v1344 = vpop.f32.mrf.mxu0
    %v1345 = vadd.f32 0.0, %v1344
    %v1346 = vpop.f32.mrf.mxu0
    %1347 = vmatprep.mubr.f32.mxu0 0.0
    %1348 = vmatmul.mubr.f32.gmra.mxu0 %v1268
    %v1349 = vpop.f32.mrf.mxu0
    %v1350 = vadd.f32 0.0, %v1349
    %v1351 = vpop.f32.mrf.mxu0
    %1352 = vmatprep.mubr.f32.mxu0 0.0
    %1353 = vmatmul.mubr.f32.gmra.mxu0 %v1271
    %v1354 = vpop.f32.mrf.mxu0
    %v1355 = vadd.f32 0.0, %v1354
    %v1356 = vpop.f32.mrf.mxu0
    %1357 = vdwg.mxu0
    %v1358 = vld [vmem:[%s6] sm:$0xff]
    %v1359 = vld [vmem:[%s6 + $0x8] sm:$0xff]
    %v1360 = vld [vmem:[%s6 + $0x10] sm:$0xff]
    %v1361 = vld [vmem:[%s6 + $0x18] sm:$0xff]
    %v1363 = vsel %vm317, %v1013, 0
    %v1366 = vsel %vm317, %v1018, 0
    %v1369 = vsel %vm317, %v1023, 0
    %v1372 = vsel %vm317, %v1028, 0
    %1374 = vmatprep.subr.mxu0 0.0
    %1375 = vmatpush1.msra.mxu0 0.0
    %1376 = vmatprep.subr.mxu0 0.0
    %1377 = vmatpush1.msra.mxu0 0.0
    %1378 = vmatprep.subr.mxu0 0.0
    %1379 = vmatpush1.msra.mxu0 0.0
    %1380 = vmatprep.subr.mxu0 0.0
    %1381 = vmatpush1.msra.mxu0 0.0
    %1382 = vmatprep.subr.mxu0 0.0
    %1383 = vmatpush1.msra.mxu0 0.0
    %1384 = vmatprep.subr.mxu0 0.0
    %1385 = vmatpush1.msra.mxu0 0.0
    %1386 = vmatprep.subr.mxu0 0.0
    %1387 = vmatpush1.msra.mxu0 0.0
    %1388 = vmatprep.subr.mxu0 0.0
    %1389 = vmatpush1.msra.mxu0 0.0
    %1390 = vmatprep.subr.mxu0 0.0
    %1391 = vmatpush1.msra.mxu0 0.0
    %1392 = vmatprep.subr.mxu0 0.0
    %1393 = vmatpush1.msra.mxu0 0.0
    %1394 = vmatprep.subr.mxu0 0.0
    %1395 = vmatpush1.msra.mxu0 0.0
    %1396 = vmatprep.subr.mxu0 0.0
    %1397 = vmatpush1.msra.mxu0 0.0
    %1398 = vmatprep.subr.mxu0 0.0
    %1399 = vmatpush1.msra.mxu0 0.0
    %1400 = vmatprep.subr.mxu0 0.0
    %1401 = vmatpush1.msra.mxu0 0.0
    %1402 = vmatprep.subr.mxu0 0.0
    %1403 = vmatpush1.msra.mxu0 0.0
    %1404 = vmatprep.subr.mxu0 0.0
    %1405 = vmatpush1.msra.mxu0 %v1358
    %1406 = vmatprep.subr.mxu0 0.0
    %1407 = vmatpush2.msra.mxu0 0.0
    %1408 = vmatprep.subr.mxu0 0.0
    %1409 = vmatpush2.msra.mxu0 0.0
    %1410 = vmatprep.subr.mxu0 0.0
    %1411 = vmatpush2.msra.mxu0 0.0
    %1412 = vmatprep.subr.mxu0 0.0
    %1413 = vmatpush2.msra.mxu0 0.0
    %1414 = vmatprep.subr.mxu0 0.0
    %1415 = vmatpush2.msra.mxu0 0.0
    %1416 = vmatprep.subr.mxu0 0.0
    %1417 = vmatpush2.msra.mxu0 0.0
    %1418 = vmatprep.subr.mxu0 0.0
    %1419 = vmatpush2.msra.mxu0 0.0
    %1420 = vmatprep.subr.mxu0 0.0
    %1421 = vmatpush2.msra.mxu0 0.0
    %1422 = vmatprep.subr.mxu0 0.0
    %1423 = vmatpush2.msra.mxu0 0.0
    %1424 = vmatprep.subr.mxu0 0.0
    %1425 = vmatpush2.msra.mxu0 0.0
    %1426 = vmatprep.subr.mxu0 0.0
    %1427 = vmatpush2.msra.mxu0 0.0
    %1428 = vmatprep.subr.mxu0 0.0
    %1429 = vmatpush2.msra.mxu0 0.0
    %1430 = vmatprep.subr.mxu0 0.0
    %1431 = vmatpush2.msra.mxu0 0.0
    %1432 = vmatprep.subr.mxu0 0.0
    %1433 = vmatpush2.msra.mxu0 0.0
    %1434 = vmatprep.subr.mxu0 0.0
    %1435 = vmatpush2.msra.mxu0 0.0
    %1436 = vmatprep.subr.mxu0 0.0
    %1437 = vmatpush2.msra.mxu0 0.0
    %1438 = vmatprep.mubr.f32.mxu0 0.0
    %1439 = vmatmul.mubr.f32.gmra.mxu0 %v1363
    %v1440 = vpop.f32.mrf.mxu0
    %v1441 = vadd.f32 0.0, %v1440
    %v1442 = vpop.f32.mrf.mxu0
    %1443 = vmatprep.mubr.f32.mxu0 0.0
    %1444 = vmatmul.mubr.f32.gmra.mxu0 %v1366
    %v1445 = vpop.f32.mrf.mxu0
    %v1446 = vadd.f32 0.0, %v1445
    %v1447 = vpop.f32.mrf.mxu0
    %1448 = vmatprep.mubr.f32.mxu0 0.0
    %1449 = vmatmul.mubr.f32.gmra.mxu0 %v1369
    %v1450 = vpop.f32.mrf.mxu0
    %v1451 = vadd.f32 0.0, %v1450
    %v1452 = vpop.f32.mrf.mxu0
    %1453 = vmatprep.mubr.f32.mxu0 0.0
    %1454 = vmatmul.mubr.f32.gmra.mxu0 %v1372
    %v1455 = vpop.f32.mrf.mxu0
    %v1456 = vadd.f32 0.0, %v1455
    %v1457 = vpop.f32.mrf.mxu0
    %1458 = vdwg.mxu0
    %v1460 = vsel %vm317, %v1122, 0
    %v1463 = vsel %vm317, %v1127, 0
    %v1466 = vsel %vm317, %v1132, 0
    %v1469 = vsel %vm317, %v1137, 0
    %1471 = vmatprep.subr.mxu0 0.0
    %1472 = vmatpush1.msra.mxu0 0.0
    %1473 = vmatprep.subr.mxu0 0.0
    %1474 = vmatpush1.msra.mxu0 0.0
    %1475 = vmatprep.subr.mxu0 0.0
    %1476 = vmatpush1.msra.mxu0 0.0
    %1477 = vmatprep.subr.mxu0 0.0
    %1478 = vmatpush1.msra.mxu0 0.0
    %1479 = vmatprep.subr.mxu0 0.0
    %1480 = vmatpush1.msra.mxu0 0.0
    %1481 = vmatprep.subr.mxu0 0.0
    %1482 = vmatpush1.msra.mxu0 0.0
    %1483 = vmatprep.subr.mxu0 0.0
    %1484 = vmatpush1.msra.mxu0 0.0
    %1485 = vmatprep.subr.mxu0 0.0
    %1486 = vmatpush1.msra.mxu0 0.0
    %1487 = vmatprep.subr.mxu0 0.0
    %1488 = vmatpush1.msra.mxu0 0.0
    %1489 = vmatprep.subr.mxu0 0.0
    %1490 = vmatpush1.msra.mxu0 0.0
    %1491 = vmatprep.subr.mxu0 0.0
    %1492 = vmatpush1.msra.mxu0 0.0
    %1493 = vmatprep.subr.mxu0 0.0
    %1494 = vmatpush1.msra.mxu0 0.0
    %1495 = vmatprep.subr.mxu0 0.0
    %1496 = vmatpush1.msra.mxu0 0.0
    %1497 = vmatprep.subr.mxu0 0.0
    %1498 = vmatpush1.msra.mxu0 0.0
    %1499 = vmatprep.subr.mxu0 0.0
    %1500 = vmatpush1.msra.mxu0 0.0
    %1501 = vmatprep.subr.mxu0 0.0
    %1502 = vmatpush1.msra.mxu0 %v1359
    %1503 = vmatprep.subr.mxu0 0.0
    %1504 = vmatpush2.msra.mxu0 0.0
    %1505 = vmatprep.subr.mxu0 0.0
    %1506 = vmatpush2.msra.mxu0 0.0
    %1507 = vmatprep.subr.mxu0 0.0
    %1508 = vmatpush2.msra.mxu0 0.0
    %1509 = vmatprep.subr.mxu0 0.0
    %1510 = vmatpush2.msra.mxu0 0.0
    %1511 = vmatprep.subr.mxu0 0.0
    %1512 = vmatpush2.msra.mxu0 0.0
    %1513 = vmatprep.subr.mxu0 0.0
    %1514 = vmatpush2.msra.mxu0 0.0
    %1515 = vmatprep.subr.mxu0 0.0
    %1516 = vmatpush2.msra.mxu0 0.0
    %1517 = vmatprep.subr.mxu0 0.0
    %1518 = vmatpush2.msra.mxu0 0.0
    %1519 = vmatprep.subr.mxu0 0.0
    %1520 = vmatpush2.msra.mxu0 0.0
    %1521 = vmatprep.subr.mxu0 0.0
    %1522 = vmatpush2.msra.mxu0 0.0
    %1523 = vmatprep.subr.mxu0 0.0
    %1524 = vmatpush2.msra.mxu0 0.0
    %1525 = vmatprep.subr.mxu0 0.0
    %1526 = vmatpush2.msra.mxu0 0.0
    %1527 = vmatprep.subr.mxu0 0.0
    %1528 = vmatpush2.msra.mxu0 0.0
    %1529 = vmatprep.subr.mxu0 0.0
    %1530 = vmatpush2.msra.mxu0 0.0
    %1531 = vmatprep.subr.mxu0 0.0
    %1532 = vmatpush2.msra.mxu0 0.0
    %1533 = vmatprep.subr.mxu0 0.0
    %1534 = vmatpush2.msra.mxu0 0.0
    %1535 = vmatprep.mubr.f32.mxu0 0.0
    %1536 = vmatmul.mubr.f32.gmra.mxu0 %v1460
    %v1537 = vpop.f32.mrf.mxu0
    %v1538 = vadd.f32 0.0, %v1537
    %v1539 = vpop.f32.mrf.mxu0
    %1540 = vmatprep.mubr.f32.mxu0 0.0
    %1541 = vmatmul.mubr.f32.gmra.mxu0 %v1463
    %v1542 = vpop.f32.mrf.mxu0
    %v1543 = vadd.f32 0.0, %v1542
    %v1544 = vpop.f32.mrf.mxu0
    %1545 = vmatprep.mubr.f32.mxu0 0.0
    %1546 = vmatmul.mubr.f32.gmra.mxu0 %v1466
    %v1547 = vpop.f32.mrf.mxu0
    %v1548 = vadd.f32 0.0, %v1547
    %v1549 = vpop.f32.mrf.mxu0
    %1550 = vmatprep.mubr.f32.mxu0 0.0
    %1551 = vmatmul.mubr.f32.gmra.mxu0 %v1469
    %v1552 = vpop.f32.mrf.mxu0
    %v1553 = vadd.f32 0.0, %v1552
    %v1554 = vpop.f32.mrf.mxu0
    %1555 = vdwg.mxu0
    %v1557 = vsel %vm317, %v1231, 0
    %v1560 = vsel %vm317, %v1236, 0
    %v1563 = vsel %vm317, %v1241, 0
    %v1566 = vsel %vm317, %v1246, 0
    %1568 = vmatprep.subr.mxu0 0.0
    %1569 = vmatpush1.msra.mxu0 0.0
    %1570 = vmatprep.subr.mxu0 0.0
    %1571 = vmatpush1.msra.mxu0 0.0
    %1572 = vmatprep.subr.mxu0 0.0
    %1573 = vmatpush1.msra.mxu0 0.0
    %1574 = vmatprep.subr.mxu0 0.0
    %1575 = vmatpush1.msra.mxu0 0.0
    %1576 = vmatprep.subr.mxu0 0.0
    %1577 = vmatpush1.msra.mxu0 0.0
    %1578 = vmatprep.subr.mxu0 0.0
    %1579 = vmatpush1.msra.mxu0 0.0
    %1580 = vmatprep.subr.mxu0 0.0
    %1581 = vmatpush1.msra.mxu0 0.0
    %1582 = vmatprep.subr.mxu0 0.0
    %1583 = vmatpush1.msra.mxu0 0.0
    %1584 = vmatprep.subr.mxu0 0.0
    %1585 = vmatpush1.msra.mxu0 0.0
    %1586 = vmatprep.subr.mxu0 0.0
    %1587 = vmatpush1.msra.mxu0 0.0
    %1588 = vmatprep.subr.mxu0 0.0
    %1589 = vmatpush1.msra.mxu0 0.0
    %1590 = vmatprep.subr.mxu0 0.0
    %1591 = vmatpush1.msra.mxu0 0.0
    %1592 = vmatprep.subr.mxu0 0.0
    %1593 = vmatpush1.msra.mxu0 0.0
    %1594 = vmatprep.subr.mxu0 0.0
    %1595 = vmatpush1.msra.mxu0 0.0
    %1596 = vmatprep.subr.mxu0 0.0
    %1597 = vmatpush1.msra.mxu0 0.0
    %1598 = vmatprep.subr.mxu0 0.0
    %1599 = vmatpush1.msra.mxu0 %v1360
    %1600 = vmatprep.subr.mxu0 0.0
    %1601 = vmatpush2.msra.mxu0 0.0
    %1602 = vmatprep.subr.mxu0 0.0
    %1603 = vmatpush2.msra.mxu0 0.0
    %1604 = vmatprep.subr.mxu0 0.0
    %1605 = vmatpush2.msra.mxu0 0.0
    %1606 = vmatprep.subr.mxu0 0.0
    %1607 = vmatpush2.msra.mxu0 0.0
    %1608 = vmatprep.subr.mxu0 0.0
    %1609 = vmatpush2.msra.mxu0 0.0
    %1610 = vmatprep.subr.mxu0 0.0
    %1611 = vmatpush2.msra.mxu0 0.0
    %1612 = vmatprep.subr.mxu0 0.0
    %1613 = vmatpush2.msra.mxu0 0.0
    %1614 = vmatprep.subr.mxu0 0.0
    %1615 = vmatpush2.msra.mxu0 0.0
    %1616 = vmatprep.subr.mxu0 0.0
    %1617 = vmatpush2.msra.mxu0 0.0
    %1618 = vmatprep.subr.mxu0 0.0
    %1619 = vmatpush2.msra.mxu0 0.0
    %1620 = vmatprep.subr.mxu0 0.0
    %1621 = vmatpush2.msra.mxu0 0.0
    %1622 = vmatprep.subr.mxu0 0.0
    %1623 = vmatpush2.msra.mxu0 0.0
    %1624 = vmatprep.subr.mxu0 0.0
    %1625 = vmatpush2.msra.mxu0 0.0
    %1626 = vmatprep.subr.mxu0 0.0
    %1627 = vmatpush2.msra.mxu0 0.0
    %1628 = vmatprep.subr.mxu0 0.0
    %1629 = vmatpush2.msra.mxu0 0.0
    %1630 = vmatprep.subr.mxu0 0.0
    %1631 = vmatpush2.msra.mxu0 0.0
    %1632 = vmatprep.mubr.f32.mxu0 0.0
    %1633 = vmatmul.mubr.f32.gmra.mxu0 %v1557
    %v1634 = vpop.f32.mrf.mxu0
    %v1635 = vadd.f32 0.0, %v1634
    %v1636 = vpop.f32.mrf.mxu0
    %1637 = vmatprep.mubr.f32.mxu0 0.0
    %1638 = vmatmul.mubr.f32.gmra.mxu0 %v1560
    %v1639 = vpop.f32.mrf.mxu0
    %v1640 = vadd.f32 0.0, %v1639
    %v1641 = vpop.f32.mrf.mxu0
    %1642 = vmatprep.mubr.f32.mxu0 0.0
    %1643 = vmatmul.mubr.f32.gmra.mxu0 %v1563
    %v1644 = vpop.f32.mrf.mxu0
    %v1645 = vadd.f32 0.0, %v1644
    %v1646 = vpop.f32.mrf.mxu0
    %1647 = vmatprep.mubr.f32.mxu0 0.0
    %1648 = vmatmul.mubr.f32.gmra.mxu0 %v1566
    %v1649 = vpop.f32.mrf.mxu0
    %v1650 = vadd.f32 0.0, %v1649
    %v1651 = vpop.f32.mrf.mxu0
    %1652 = vdwg.mxu0
    %v1654 = vsel %vm317, %v1340, 0
    %v1657 = vsel %vm317, %v1345, 0
    %v1660 = vsel %vm317, %v1350, 0
    %v1663 = vsel %vm317, %v1355, 0
    %1665 = vmatprep.subr.mxu0 0.0
    %1666 = vmatpush1.msra.mxu0 0.0
    %1667 = vmatprep.subr.mxu0 0.0
    %1668 = vmatpush1.msra.mxu0 0.0
    %1669 = vmatprep.subr.mxu0 0.0
    %1670 = vmatpush1.msra.mxu0 0.0
    %1671 = vmatprep.subr.mxu0 0.0
    %1672 = vmatpush1.msra.mxu0 0.0
    %1673 = vmatprep.subr.mxu0 0.0
    %1674 = vmatpush1.msra.mxu0 0.0
    %1675 = vmatprep.subr.mxu0 0.0
    %1676 = vmatpush1.msra.mxu0 0.0
    %1677 = vmatprep.subr.mxu0 0.0
    %1678 = vmatpush1.msra.mxu0 0.0
    %1679 = vmatprep.subr.mxu0 0.0
    %1680 = vmatpush1.msra.mxu0 0.0
    %1681 = vmatprep.subr.mxu0 0.0
    %1682 = vmatpush1.msra.mxu0 0.0
    %1683 = vmatprep.subr.mxu0 0.0
    %1684 = vmatpush1.msra.mxu0 0.0
    %1685 = vmatprep.subr.mxu0 0.0
    %1686 = vmatpush1.msra.mxu0 0.0
    %1687 = vmatprep.subr.mxu0 0.0
    %1688 = vmatpush1.msra.mxu0 0.0
    %1689 = vmatprep.subr.mxu0 0.0
    %1690 = vmatpush1.msra.mxu0 0.0
    %1691 = vmatprep.subr.mxu0 0.0
    %1692 = vmatpush1.msra.mxu0 0.0
    %1693 = vmatprep.subr.mxu0 0.0
    %1694 = vmatpush1.msra.mxu0 0.0
    %1695 = vmatprep.subr.mxu0 0.0
    %1696 = vmatpush1.msra.mxu0 %v1361
    %1697 = vmatprep.subr.mxu0 0.0
    %1698 = vmatpush2.msra.mxu0 0.0
    %1699 = vmatprep.subr.mxu0 0.0
    %1700 = vmatpush2.msra.mxu0 0.0
    %1701 = vmatprep.subr.mxu0 0.0
    %1702 = vmatpush2.msra.mxu0 0.0
    %1703 = vmatprep.subr.mxu0 0.0
    %1704 = vmatpush2.msra.mxu0 0.0
    %1705 = vmatprep.subr.mxu0 0.0
    %1706 = vmatpush2.msra.mxu0 0.0
    %1707 = vmatprep.subr.mxu0 0.0
    %1708 = vmatpush2.msra.mxu0 0.0
    %1709 = vmatprep.subr.mxu0 0.0
    %1710 = vmatpush2.msra.mxu0 0.0
    %1711 = vmatprep.subr.mxu0 0.0
    %1712 = vmatpush2.msra.mxu0 0.0
    %1713 = vmatprep.subr.mxu0 0.0
    %1714 = vmatpush2.msra.mxu0 0.0
    %1715 = vmatprep.subr.mxu0 0.0
    %1716 = vmatpush2.msra.mxu0 0.0
    %1717 = vmatprep.subr.mxu0 0.0
    %1718 = vmatpush2.msra.mxu0 0.0
    %1719 = vmatprep.subr.mxu0 0.0
    %1720 = vmatpush2.msra.mxu0 0.0
    %1721 = vmatprep.subr.mxu0 0.0
    %1722 = vmatpush2.msra.mxu0 0.0
    %1723 = vmatprep.subr.mxu0 0.0
    %1724 = vmatpush2.msra.mxu0 0.0
    %1725 = vmatprep.subr.mxu0 0.0
    %1726 = vmatpush2.msra.mxu0 0.0
    %1727 = vmatprep.subr.mxu0 0.0
    %1728 = vmatpush2.msra.mxu0 0.0
    %1729 = vmatprep.mubr.f32.mxu0 0.0
    %1730 = vmatmul.mubr.f32.gmra.mxu0 %v1654
    %v1731 = vpop.f32.mrf.mxu0
    %v1732 = vadd.f32 0.0, %v1731
    %v1733 = vpop.f32.mrf.mxu0
    %1734 = vmatprep.mubr.f32.mxu0 0.0
    %1735 = vmatmul.mubr.f32.gmra.mxu0 %v1657
    %v1736 = vpop.f32.mrf.mxu0
    %v1737 = vadd.f32 0.0, %v1736
    %v1738 = vpop.f32.mrf.mxu0
    %1739 = vmatprep.mubr.f32.mxu0 0.0
    %1740 = vmatmul.mubr.f32.gmra.mxu0 %v1660
    %v1741 = vpop.f32.mrf.mxu0
    %v1742 = vadd.f32 0.0, %v1741
    %v1743 = vpop.f32.mrf.mxu0
    %1744 = vmatprep.mubr.f32.mxu0 0.0
    %1745 = vmatmul.mubr.f32.gmra.mxu0 %v1663
    %v1746 = vpop.f32.mrf.mxu0
    %v1747 = vadd.f32 0.0, %v1746
    %v1748 = vpop.f32.mrf.mxu0
    %1749 = vdwg.mxu0
    %v1750 = vsel %vm67, %v1441, 0.0
    %v1751 = vsel %vm67, %v1538, 0.0
    %v1752 = vadd.f32 %v1750, %v1751
    %v1753 = vsel %vm67, %v1635, 0.0
    %v1754 = vadd.f32 %v1752, %v1753
    %v1755 = vsel %vm67, %v1732, 0.0
    %v1756 = vadd.f32 %v1754, %v1755
    %v1757 = vsel %vm67, %v1446, 0.0
    %v1758 = vsel %vm67, %v1543, 0.0
    %v1759 = vadd.f32 %v1757, %v1758
    %v1760 = vsel %vm67, %v1640, 0.0
    %v1761 = vadd.f32 %v1759, %v1760
    %v1762 = vsel %vm67, %v1737, 0.0
    %v1763 = vadd.f32 %v1761, %v1762
    %v1764 = vsel %vm67, %v1451, 0.0
    %v1765 = vsel %vm67, %v1548, 0.0
    %v1766 = vadd.f32 %v1764, %v1765
    %v1767 = vsel %vm67, %v1645, 0.0
    %v1768 = vadd.f32 %v1766, %v1767
    %v1769 = vsel %vm67, %v1742, 0.0
    %v1770 = vadd.f32 %v1768, %v1769
    %v1771 = vsel %vm67, %v1456, 0.0
    %v1772 = vsel %vm67, %v1553, 0.0
    %v1773 = vadd.f32 %v1771, %v1772
    %v1774 = vsel %vm67, %v1650, 0.0
    %v1775 = vadd.f32 %v1773, %v1774
    %v1776 = vsel %vm67, %v1747, 0.0
    %v1777 = vadd.f32 %v1775, %v1776
    %v1778 = vld [vmem:[%s7] sm:$0x1]
    %v1780 = vlaneseq
    %v1781 = vshrl.u32 %v1780, 7
    %v1782 = vsub.s32 0, %v1781
    %v1783 = vrot.slane %v1778, %v1782
    %v1785 = vadd.f32 %v1756, %v1783
    %v1786 = vadd.f32 %v1763, %v1783
    %v1787 = vadd.f32 %v1770, %v1783
    %v1788 = vadd.f32 %v1777, %v1783
    %v1789 = vadd.f32 %v137, %v1785
    %v1790 = vadd.f32 %v138, %v1786
    %v1791 = vadd.f32 %v139, %v1787
    %v1792 = vadd.f32 %v140, %v1788
    %v1793 = vld [vmem:[%s8] sm:$0x1]
    %v1794 = vld [vmem:[%s9] sm:$0x1]
    %v1795 = vsel %vm67, %v1789, 0.0
    %1796 = vadd.xlane.f32.xlu0 %v1795
    %v1797 = vpop.xlane.xlu0 %1796
    %v1798 = vsel %vm67, %v1790, 0.0
    %1799 = vadd.xlane.f32.xlu0 %v1798
    %v1800 = vpop.xlane.xlu0 %1799
    %v1801 = vsel %vm67, %v1791, 0.0
    %1802 = vadd.xlane.f32.xlu0 %v1801
    %v1803 = vpop.xlane.xlu0 %1802
    %v1804 = vsel %vm67, %v1792, 0.0
    %1805 = vadd.xlane.f32.xlu0 %v1804
    %v1806 = vpop.xlane.xlu0 %1805
    %v1807 = vmul.f32 %v1797, %v80
    %v1808 = vmul.f32 %v1800, %v80
    %v1809 = vmul.f32 %v1803, %v80
    %v1810 = vmul.f32 %v1806, %v80
    %v1811 = vsub.f32 %v1789, %v1807
    %v1812 = vsub.f32 %v1790, %v1808
    %v1813 = vsub.f32 %v1791, %v1809
    %v1814 = vsub.f32 %v1792, %v1810
    %v1815 = vmul.f32 %v1811, %v1811
    %v1816 = vmul.f32 %v1812, %v1812
    %v1817 = vmul.f32 %v1813, %v1813
    %v1818 = vmul.f32 %v1814, %v1814
    %v1819 = vsel %vm67, %v1815, 0.0
    %1820 = vadd.xlane.f32.xlu0 %v1819
    %v1821 = vpop.xlane.xlu0 %1820
    %v1822 = vsel %vm67, %v1816, 0.0
    %1823 = vadd.xlane.f32.xlu0 %v1822
    %v1824 = vpop.xlane.xlu0 %1823
    %v1825 = vsel %vm67, %v1817, 0.0
    %1826 = vadd.xlane.f32.xlu0 %v1825
    %v1827 = vpop.xlane.xlu0 %1826
    %v1828 = vsel %vm67, %v1818, 0.0
    %1829 = vadd.xlane.f32.xlu0 %v1828
    %v1830 = vpop.xlane.xlu0 %1829
    %v1831 = vmul.f32 %v1821, %v80
    %v1832 = vmul.f32 %v1824, %v80
    %v1833 = vmul.f32 %v1827, %v80
    %v1834 = vmul.f32 %v1830, %v80
    %v1835 = vadd.f32 %v1831, 1e-05
    %v1836 = vadd.f32 %v1832, 1e-05
    %v1837 = vadd.f32 %v1833, 1e-05
    %v1838 = vadd.f32 %v1834, 1e-05
    %v1839 = vrsqrt.pop %v1835
    %v1840 = vrsqrt.pop %v1836
    %v1841 = vrsqrt.pop %v1837
    %v1842 = vrsqrt.pop %v1838
    %v1843 = vmul.f32 %v1811, %v1839
    %v1844 = vmul.f32 %v1812, %v1840
    %v1845 = vmul.f32 %v1813, %v1841
    %v1846 = vmul.f32 %v1814, %v1842
    %v1848 = vlaneseq
    %v1849 = vshrl.u32 %v1848, 7
    %v1850 = vsub.s32 0, %v1849
    %v1851 = vrot.slane %v1793, %v1850
    %v1853 = vmul.f32 %v1843, %v1851
    %v1854 = vmul.f32 %v1844, %v1851
    %v1855 = vmul.f32 %v1845, %v1851
    %v1856 = vmul.f32 %v1846, %v1851
    %v1858 = vlaneseq
    %v1859 = vshrl.u32 %v1858, 7
    %v1860 = vsub.s32 0, %v1859
    %v1861 = vrot.slane %v1794, %v1860
    %v1863 = vadd.f32 %v1853, %v1861
    %v1864 = vadd.f32 %v1854, %v1861
    %v1865 = vadd.f32 %v1855, %v1861
    %v1866 = vadd.f32 %v1856, %v1861
    %v1867 = vld [vmem:[%s10] sm:$0xff]
    %v1868 = vld [vmem:[%s10 + $0x8] sm:$0xff]
    %v1869 = vld [vmem:[%s10 + $0x10] sm:$0xff]
    %v1870 = vld [vmem:[%s10 + $0x18] sm:$0xff]
    %v1871 = vld [vmem:[%s11] sm:$0x1]
    %v1873 = vlaneseq
    %v1874 = vshrl.u32 %v1873, 7
    %v1875 = vsub.s32 0, %v1874
    %v1876 = vrot.slane %v1871, %v1875
    %v1879 = vsel %vm67, %v1863, 0
    %v1882 = vsel %vm67, %v1864, 0
    %v1885 = vsel %vm67, %v1865, 0
    %v1888 = vsel %vm67, %v1866, 0
    %1890 = vmatprep.subr.mxu0 0.0
    %1891 = vmatpush1.msra.mxu0 0.0
    %1892 = vmatprep.subr.mxu0 0.0
    %1893 = vmatpush1.msra.mxu0 0.0
    %1894 = vmatprep.subr.mxu0 0.0
    %1895 = vmatpush1.msra.mxu0 0.0
    %1896 = vmatprep.subr.mxu0 0.0
    %1897 = vmatpush1.msra.mxu0 0.0
    %1898 = vmatprep.subr.mxu0 0.0
    %1899 = vmatpush1.msra.mxu0 0.0
    %1900 = vmatprep.subr.mxu0 0.0
    %1901 = vmatpush1.msra.mxu0 0.0
    %1902 = vmatprep.subr.mxu0 0.0
    %1903 = vmatpush1.msra.mxu0 0.0
    %1904 = vmatprep.subr.mxu0 0.0
    %1905 = vmatpush1.msra.mxu0 0.0
    %1906 = vmatprep.subr.mxu0 0.0
    %1907 = vmatpush1.msra.mxu0 0.0
    %1908 = vmatprep.subr.mxu0 0.0
    %1909 = vmatpush1.msra.mxu0 0.0
    %1910 = vmatprep.subr.mxu0 0.0
    %1911 = vmatpush1.msra.mxu0 0.0
    %1912 = vmatprep.subr.mxu0 0.0
    %1913 = vmatpush1.msra.mxu0 0.0
    %1914 = vmatprep.subr.mxu0 0.0
    %1915 = vmatpush1.msra.mxu0 %v1870
    %1916 = vmatprep.subr.mxu0 0.0
    %1917 = vmatpush1.msra.mxu0 %v1869
    %1918 = vmatprep.subr.mxu0 0.0
    %1919 = vmatpush1.msra.mxu0 %v1868
    %1920 = vmatprep.subr.mxu0 0.0
    %1921 = vmatpush1.msra.mxu0 %v1867
    %1922 = vmatprep.subr.mxu0 0.0
    %1923 = vmatpush2.msra.mxu0 0.0
    %1924 = vmatprep.subr.mxu0 0.0
    %1925 = vmatpush2.msra.mxu0 0.0
    %1926 = vmatprep.subr.mxu0 0.0
    %1927 = vmatpush2.msra.mxu0 0.0
    %1928 = vmatprep.subr.mxu0 0.0
    %1929 = vmatpush2.msra.mxu0 0.0
    %1930 = vmatprep.subr.mxu0 0.0
    %1931 = vmatpush2.msra.mxu0 0.0
    %1932 = vmatprep.subr.mxu0 0.0
    %1933 = vmatpush2.msra.mxu0 0.0
    %1934 = vmatprep.subr.mxu0 0.0
    %1935 = vmatpush2.msra.mxu0 0.0
    %1936 = vmatprep.subr.mxu0 0.0
    %1937 = vmatpush2.msra.mxu0 0.0
    %1938 = vmatprep.subr.mxu0 0.0
    %1939 = vmatpush2.msra.mxu0 0.0
    %1940 = vmatprep.subr.mxu0 0.0
    %1941 = vmatpush2.msra.mxu0 0.0
    %1942 = vmatprep.subr.mxu0 0.0
    %1943 = vmatpush2.msra.mxu0 0.0
    %1944 = vmatprep.subr.mxu0 0.0
    %1945 = vmatpush2.msra.mxu0 0.0
    %1946 = vmatprep.subr.mxu0 0.0
    %1947 = vmatpush2.msra.mxu0 0.0
    %1948 = vmatprep.subr.mxu0 0.0
    %1949 = vmatpush2.msra.mxu0 0.0
    %1950 = vmatprep.subr.mxu0 0.0
    %1951 = vmatpush2.msra.mxu0 0.0
    %1952 = vmatprep.subr.mxu0 0.0
    %1953 = vmatpush2.msra.mxu0 0.0
    %1954 = vmatprep.mubr.f32.mxu0 0.0
    %1955 = vmatmul.mubr.f32.gmra.mxu0 %v1879
    %v1956 = vpop.f32.mrf.mxu0
    %v1957 = vadd.f32 %v1876, %v1956
    %v1958 = vpop.f32.mrf.mxu0
    %1959 = vmatprep.mubr.f32.mxu0 0.0
    %1960 = vmatmul.mubr.f32.gmra.mxu0 %v1882
    %v1961 = vpop.f32.mrf.mxu0
    %v1962 = vadd.f32 %v1876, %v1961
    %v1963 = vpop.f32.mrf.mxu0
    %1964 = vmatprep.mubr.f32.mxu0 0.0
    %1965 = vmatmul.mubr.f32.gmra.mxu0 %v1885
    %v1966 = vpop.f32.mrf.mxu0
    %v1967 = vadd.f32 %v1876, %v1966
    %v1968 = vpop.f32.mrf.mxu0
    %1969 = vmatprep.mubr.f32.mxu0 0.0
    %1970 = vmatmul.mubr.f32.gmra.mxu0 %v1888
    %v1971 = vpop.f32.mrf.mxu0
    %v1972 = vadd.f32 %v1876, %v1971
    %v1973 = vpop.f32.mrf.mxu0
    %1974 = vdwg.mxu0
    %v1975 = vmax.f32 %v1957, 0.0
    %v1976 = vmax.f32 %v1962, 0.0
    %v1977 = vmax.f32 %v1967, 0.0
    %v1978 = vmax.f32 %v1972, 0.0
    %v1979 = vld [vmem:[%s12] sm:$0xff]
    %v1980 = vld [vmem:[%s12 + $0x8] sm:$0xff]
    %v1981 = vld [vmem:[%s12 + $0x10] sm:$0xff]
    %v1982 = vld [vmem:[%s12 + $0x18] sm:$0xff]
    %v1983 = vld [vmem:[%s12 + $0x20] sm:$0xff]
    %v1984 = vld [vmem:[%s12 + $0x28] sm:$0xff]
    %v1985 = vld [vmem:[%s12 + $0x30] sm:$0xff]
    %v1986 = vld [vmem:[%s12 + $0x38] sm:$0xff]
    %v1987 = vld [vmem:[%s13] sm:$0x1]
    %v1989 = vlaneseq
    %v1990 = vshrl.u32 %v1989, 7
    %v1991 = vsub.s32 0, %v1990
    %v1992 = vrot.slane %v1987, %v1991
    %vm1994 = vcmask 523264
    %v1996 = vsel %vm1994, %v1975, 0
    %v1999 = vsel %vm1994, %v1976, 0
    %v2002 = vsel %vm1994, %v1977, 0
    %v2005 = vsel %vm1994, %v1978, 0
    %2007 = vmatprep.subr.mxu0 0.0
    %2008 = vmatpush1.msra.mxu0 0.0
    %2009 = vmatprep.subr.mxu0 0.0
    %2010 = vmatpush1.msra.mxu0 0.0
    %2011 = vmatprep.subr.mxu0 0.0
    %2012 = vmatpush1.msra.mxu0 0.0
    %2013 = vmatprep.subr.mxu0 0.0
    %2014 = vmatpush1.msra.mxu0 0.0
    %2015 = vmatprep.subr.mxu0 0.0
    %2016 = vmatpush1.msra.mxu0 0.0
    %2017 = vmatprep.subr.mxu0 0.0
    %2018 = vmatpush1.msra.mxu0 0.0
    %2019 = vmatprep.subr.mxu0 0.0
    %2020 = vmatpush1.msra.mxu0 0.0
    %2021 = vmatprep.subr.mxu0 0.0
    %2022 = vmatpush1.msra.mxu0 0.0
    %2023 = vmatprep.subr.mxu0 0.0
    %2024 = vmatpush1.msra.mxu0 %v1986
    %2025 = vmatprep.subr.mxu0 0.0
    %2026 = vmatpush1.msra.mxu0 %v1985
    %2027 = vmatprep.subr.mxu0 0.0
    %2028 = vmatpush1.msra.mxu0 %v1984
    %2029 = vmatprep.subr.mxu0 0.0
    %2030 = vmatpush1.msra.mxu0 %v1983
    %2031 = vmatprep.subr.mxu0 0.0
    %2032 = vmatpush1.msra.mxu0 %v1982
    %2033 = vmatprep.subr.mxu0 0.0
    %2034 = vmatpush1.msra.mxu0 %v1981
    %2035 = vmatprep.subr.mxu0 0.0
    %2036 = vmatpush1.msra.mxu0 %v1980
    %2037 = vmatprep.subr.mxu0 0.0
    %2038 = vmatpush1.msra.mxu0 %v1979
    %2039 = vmatprep.subr.mxu0 0.0
    %2040 = vmatpush2.msra.mxu0 0.0
    %2041 = vmatprep.subr.mxu0 0.0
    %2042 = vmatpush2.msra.mxu0 0.0
    %2043 = vmatprep.subr.mxu0 0.0
    %2044 = vmatpush2.msra.mxu0 0.0
    %2045 = vmatprep.subr.mxu0 0.0
    %2046 = vmatpush2.msra.mxu0 0.0
    %2047 = vmatprep.subr.mxu0 0.0
    %2048 = vmatpush2.msra.mxu0 0.0
    %2049 = vmatprep.subr.mxu0 0.0
    %2050 = vmatpush2.msra.mxu0 0.0
    %2051 = vmatprep.subr.mxu0 0.0
    %2052 = vmatpush2.msra.mxu0 0.0
    %2053 = vmatprep.subr.mxu0 0.0
    %2054 = vmatpush2.msra.mxu0 0.0
    %2055 = vmatprep.subr.mxu0 0.0
    %2056 = vmatpush2.msra.mxu0 0.0
    %2057 = vmatprep.subr.mxu0 0.0
    %2058 = vmatpush2.msra.mxu0 0.0
    %2059 = vmatprep.subr.mxu0 0.0
    %2060 = vmatpush2.msra.mxu0 0.0
    %2061 = vmatprep.subr.mxu0 0.0
    %2062 = vmatpush2.msra.mxu0 0.0
    %2063 = vmatprep.subr.mxu0 0.0
    %2064 = vmatpush2.msra.mxu0 0.0
    %2065 = vmatprep.subr.mxu0 0.0
    %2066 = vmatpush2.msra.mxu0 0.0
    %2067 = vmatprep.subr.mxu0 0.0
    %2068 = vmatpush2.msra.mxu0 0.0
    %2069 = vmatprep.subr.mxu0 0.0
    %2070 = vmatpush2.msra.mxu0 0.0
    %2071 = vmatprep.mubr.f32.mxu0 0.0
    %2072 = vmatmul.mubr.f32.gmra.mxu0 %v1996
    %v2073 = vpop.f32.mrf.mxu0
    %v2074 = vadd.f32 %v1992, %v2073
    %v2075 = vpop.f32.mrf.mxu0
    %2076 = vmatprep.mubr.f32.mxu0 0.0
    %2077 = vmatmul.mubr.f32.gmra.mxu0 %v1999
    %v2078 = vpop.f32.mrf.mxu0
    %v2079 = vadd.f32 %v1992, %v2078
    %v2080 = vpop.f32.mrf.mxu0
    %2081 = vmatprep.mubr.f32.mxu0 0.0
    %2082 = vmatmul.mubr.f32.gmra.mxu0 %v2002
    %v2083 = vpop.f32.mrf.mxu0
    %v2084 = vadd.f32 %v1992, %v2083
    %v2085 = vpop.f32.mrf.mxu0
    %2086 = vmatprep.mubr.f32.mxu0 0.0
    %2087 = vmatmul.mubr.f32.gmra.mxu0 %v2005
    %v2088 = vpop.f32.mrf.mxu0
    %v2089 = vadd.f32 %v1992, %v2088
    %v2090 = vpop.f32.mrf.mxu0
    %2091 = vdwg.mxu0
    %v2092 = vadd.f32 %v1789, %v2074
    %v2093 = vadd.f32 %v1790, %v2079
    %v2094 = vadd.f32 %v1791, %v2084
    %v2095 = vadd.f32 %v1792, %v2089
    %s2096 = scalar_lea.vmem %s2, 1
    %v2097 = vld [vmem:[%s2096] sm:$0x1]
    %s2098 = scalar_lea.vmem %s3, 1
    %v2099 = vld [vmem:[%s2098] sm:$0x1]
    %v2100 = vsel %vm67, %v2092, 0.0
    %2101 = vadd.xlane.f32.xlu0 %v2100
    %v2102 = vpop.xlane.xlu0 %2101
    %v2103 = vsel %vm67, %v2093, 0.0
    %2104 = vadd.xlane.f32.xlu0 %v2103
    %v2105 = vpop.xlane.xlu0 %2104
    %v2106 = vsel %vm67, %v2094, 0.0
    %2107 = vadd.xlane.f32.xlu0 %v2106
    %v2108 = vpop.xlane.xlu0 %2107
    %v2109 = vsel %vm67, %v2095, 0.0
    %2110 = vadd.xlane.f32.xlu0 %v2109
    %v2111 = vpop.xlane.xlu0 %2110
    %v2112 = vmul.f32 %v2102, %v80
    %v2113 = vmul.f32 %v2105, %v80
    %v2114 = vmul.f32 %v2108, %v80
    %v2115 = vmul.f32 %v2111, %v80
    %v2116 = vsub.f32 %v2092, %v2112
    %v2117 = vsub.f32 %v2093, %v2113
    %v2118 = vsub.f32 %v2094, %v2114
    %v2119 = vsub.f32 %v2095, %v2115
    %v2120 = vmul.f32 %v2116, %v2116
    %v2121 = vmul.f32 %v2117, %v2117
    %v2122 = vmul.f32 %v2118, %v2118
    %v2123 = vmul.f32 %v2119, %v2119
    %v2124 = vsel %vm67, %v2120, 0.0
    %2125 = vadd.xlane.f32.xlu0 %v2124
    %v2126 = vpop.xlane.xlu0 %2125
    %v2127 = vsel %vm67, %v2121, 0.0
    %2128 = vadd.xlane.f32.xlu0 %v2127
    %v2129 = vpop.xlane.xlu0 %2128
    %v2130 = vsel %vm67, %v2122, 0.0
    %2131 = vadd.xlane.f32.xlu0 %v2130
    %v2132 = vpop.xlane.xlu0 %2131
    %v2133 = vsel %vm67, %v2123, 0.0
    %2134 = vadd.xlane.f32.xlu0 %v2133
    %v2135 = vpop.xlane.xlu0 %2134
    %v2136 = vmul.f32 %v2126, %v80
    %v2137 = vmul.f32 %v2129, %v80
    %v2138 = vmul.f32 %v2132, %v80
    %v2139 = vmul.f32 %v2135, %v80
    %v2140 = vadd.f32 %v2136, 1e-05
    %v2141 = vadd.f32 %v2137, 1e-05
    %v2142 = vadd.f32 %v2138, 1e-05
    %v2143 = vadd.f32 %v2139, 1e-05
    %v2144 = vrsqrt.pop %v2140
    %v2145 = vrsqrt.pop %v2141
    %v2146 = vrsqrt.pop %v2142
    %v2147 = vrsqrt.pop %v2143
    %v2148 = vmul.f32 %v2116, %v2144
    %v2149 = vmul.f32 %v2117, %v2145
    %v2150 = vmul.f32 %v2118, %v2146
    %v2151 = vmul.f32 %v2119, %v2147
    %v2153 = vlaneseq
    %v2154 = vshrl.u32 %v2153, 7
    %v2155 = vsub.s32 0, %v2154
    %v2156 = vrot.slane %v2097, %v2155
    %v2158 = vmul.f32 %v2148, %v2156
    %v2159 = vmul.f32 %v2149, %v2156
    %v2160 = vmul.f32 %v2150, %v2156
    %v2161 = vmul.f32 %v2151, %v2156
    %v2163 = vlaneseq
    %v2164 = vshrl.u32 %v2163, 7
    %v2165 = vsub.s32 0, %v2164
    %v2166 = vrot.slane %v2099, %v2165
    %v2168 = vadd.f32 %v2158, %v2166
    %v2169 = vadd.f32 %v2159, %v2166
    %v2170 = vadd.f32 %v2160, %v2166
    %v2171 = vadd.f32 %v2161, %v2166
    %s2172 = scalar_lea.vmem %s4, 32
    %v2173 = vld [vmem:[%s2172] sm:$0xff]
    %v2174 = vld [vmem:[%s2172 + $0x8] sm:$0xff]
    %v2175 = vld [vmem:[%s2172 + $0x10] sm:$0xff]
    %v2176 = vld [vmem:[%s2172 + $0x18] sm:$0xff]
    %s2177 = scalar_lea.vmem %s5, 1
    %v2178 = vld [vmem:[%s2177] sm:$0x1]
    %v2180 = vlaneseq
    %v2181 = vshrl.u32 %v2180, 7
    %v2182 = vsub.s32 0, %v2181
    %v2183 = vrot.slane %v2178, %v2182
    %v2186 = vsel %vm67, %v2168, 0
    %v2189 = vsel %vm67, %v2169, 0
    %v2192 = vsel %vm67, %v2170, 0
    %v2195 = vsel %vm67, %v2171, 0
    %2197 = vmatprep.subr.mxu0 0.0
    %2198 = vmatpush1.msra.mxu0 0.0
    %2199 = vmatprep.subr.mxu0 0.0
    %2200 = vmatpush1.msra.mxu0 0.0
    %2201 = vmatprep.subr.mxu0 0.0
    %2202 = vmatpush1.msra.mxu0 0.0
    %2203 = vmatprep.subr.mxu0 0.0
    %2204 = vmatpush1.msra.mxu0 0.0
    %2205 = vmatprep.subr.mxu0 0.0
    %2206 = vmatpush1.msra.mxu0 0.0
    %2207 = vmatprep.subr.mxu0 0.0
    %2208 = vmatpush1.msra.mxu0 0.0
    %2209 = vmatprep.subr.mxu0 0.0
    %2210 = vmatpush1.msra.mxu0 0.0
    %2211 = vmatprep.subr.mxu0 0.0
    %2212 = vmatpush1.msra.mxu0 0.0
    %2213 = vmatprep.subr.mxu0 0.0
    %2214 = vmatpush1.msra.mxu0 0.0
    %2215 = vmatprep.subr.mxu0 0.0
    %2216 = vmatpush1.msra.mxu0 0.0
    %2217 = vmatprep.subr.mxu0 0.0
    %2218 = vmatpush1.msra.mxu0 0.0
    %2219 = vmatprep.subr.mxu0 0.0
    %2220 = vmatpush1.msra.mxu0 0.0
    %2221 = vmatprep.subr.mxu0 0.0
    %2222 = vmatpush1.msra.mxu0 %v2176
    %2223 = vmatprep.subr.mxu0 0.0
    %2224 = vmatpush1.msra.mxu0 %v2175
    %2225 = vmatprep.subr.mxu0 0.0
    %2226 = vmatpush1.msra.mxu0 %v2174
    %2227 = vmatprep.subr.mxu0 0.0
    %2228 = vmatpush1.msra.mxu0 %v2173
    %2229 = vmatprep.subr.mxu0 0.0
    %2230 = vmatpush2.msra.mxu0 0.0
    %2231 = vmatprep.subr.mxu0 0.0
    %2232 = vmatpush2.msra.mxu0 0.0
    %2233 = vmatprep.subr.mxu0 0.0
    %2234 = vmatpush2.msra.mxu0 0.0
    %2235 = vmatprep.subr.mxu0 0.0
    %2236 = vmatpush2.msra.mxu0 0.0
    %2237 = vmatprep.subr.mxu0 0.0
    %2238 = vmatpush2.msra.mxu0 0.0
    %2239 = vmatprep.subr.mxu0 0.0
    %2240 = vmatpush2.msra.mxu0 0.0
    %2241 = vmatprep.subr.mxu0 0.0
    %2242 = vmatpush2.msra.mxu0 0.0
    %2243 = vmatprep.subr.mxu0 0.0
    %2244 = vmatpush2.msra.mxu0 0.0
    %2245 = vmatprep.subr.mxu0 0.0
    %2246 = vmatpush2.msra.mxu0 0.0
    %2247 = vmatprep.subr.mxu0 0.0
    %2248 = vmatpush2.msra.mxu0 0.0
    %2249 = vmatprep.subr.mxu0 0.0
    %2250 = vmatpush2.msra.mxu0 0.0
    %2251 = vmatprep.subr.mxu0 0.0
    %2252 = vmatpush2.msra.mxu0 0.0
    %2253 = vmatprep.subr.mxu0 0.0
    %2254 = vmatpush2.msra.mxu0 0.0
    %2255 = vmatprep.subr.mxu0 0.0
    %2256 = vmatpush2.msra.mxu0 0.0
    %2257 = vmatprep.subr.mxu0 0.0
    %2258 = vmatpush2.msra.mxu0 0.0
    %2259 = vmatprep.subr.mxu0 0.0
    %2260 = vmatpush2.msra.mxu0 0.0
    %2261 = vmatprep.mubr.f32.mxu0 0.0
    %2262 = vmatmul.mubr.f32.gmra.mxu0 %v2186
    %v2263 = vpop.f32.mrf.mxu0
    %v2264 = vadd.f32 %v2183, %v2263
    %v2265 = vpop.f32.mrf.mxu0
    %2266 = vmatprep.mubr.f32.mxu0 0.0
    %2267 = vmatmul.mubr.f32.gmra.mxu0 %v2189
    %v2268 = vpop.f32.mrf.mxu0
    %v2269 = vadd.f32 %v2183, %v2268
    %v2270 = vpop.f32.mrf.mxu0
    %2271 = vmatprep.mubr.f32.mxu0 0.0
    %2272 = vmatmul.mubr.f32.gmra.mxu0 %v2192
    %v2273 = vpop.f32.mrf.mxu0
    %v2274 = vadd.f32 %v2183, %v2273
    %v2275 = vpop.f32.mrf.mxu0
    %2276 = vmatprep.mubr.f32.mxu0 0.0
    %2277 = vmatmul.mubr.f32.gmra.mxu0 %v2195
    %v2278 = vpop.f32.mrf.mxu0
    %v2279 = vadd.f32 %v2183, %v2278
    %v2280 = vpop.f32.mrf.mxu0
    %2281 = vdwg.mxu0
    %v2282 = vmul.f32 %v2264, 0.35355338
    %v2283 = vmul.f32 %v2269, 0.35355338
    %v2284 = vmul.f32 %v2274, 0.35355338
    %v2285 = vmul.f32 %v2279, 0.35355338
    %2290 = vrot.lane.b32.xlu0 %v2282, 120
    %v2291 = vpop.permute.xlu0 %2290
    %2292 = vrot.lane.b32.xlu0 %v2283, 120
    %v2293 = vpop.permute.xlu0 %2292
    %2294 = vrot.lane.b32.xlu0 %v2284, 120
    %v2295 = vpop.permute.xlu0 %2294
    %2296 = vrot.lane.b32.xlu0 %v2285, 120
    %v2297 = vpop.permute.xlu0 %2296
    %2298 = vrot.lane.b32.xlu0 %v2282, 112
    %v2299 = vpop.permute.xlu0 %2298
    %2300 = vrot.lane.b32.xlu0 %v2283, 112
    %v2301 = vpop.permute.xlu0 %2300
    %2302 = vrot.lane.b32.xlu0 %v2284, 112
    %v2303 = vpop.permute.xlu0 %2302
    %2304 = vrot.lane.b32.xlu0 %v2285, 112
    %v2305 = vpop.permute.xlu0 %2304
    %2306 = vrot.lane.b32.xlu0 %v2282, 104
    %v2307 = vpop.permute.xlu0 %2306
    %2308 = vrot.lane.b32.xlu0 %v2283, 104
    %v2309 = vpop.permute.xlu0 %2308
    %2310 = vrot.lane.b32.xlu0 %v2284, 104
    %v2311 = vpop.permute.xlu0 %2310
    %2312 = vrot.lane.b32.xlu0 %v2285, 104
    %v2313 = vpop.permute.xlu0 %2312
    %2318 = vrot.lane.b32.xlu0 %v2264, 120
    %v2319 = vpop.permute.xlu0 %2318
    %2320 = vrot.lane.b32.xlu0 %v2269, 120
    %v2321 = vpop.permute.xlu0 %2320
    %2322 = vrot.lane.b32.xlu0 %v2274, 120
    %v2323 = vpop.permute.xlu0 %2322
    %2324 = vrot.lane.b32.xlu0 %v2279, 120
    %v2325 = vpop.permute.xlu0 %2324
    %2326 = vrot.lane.b32.xlu0 %v2264, 112
    %v2327 = vpop.permute.xlu0 %2326
    %2328 = vrot.lane.b32.xlu0 %v2269, 112
    %v2329 = vpop.permute.xlu0 %2328
    %2330 = vrot.lane.b32.xlu0 %v2274, 112
    %v2331 = vpop.permute.xlu0 %2330
    %2332 = vrot.lane.b32.xlu0 %v2279, 112
    %v2333 = vpop.permute.xlu0 %2332
    %2334 = vrot.lane.b32.xlu0 %v2264, 104
    %v2335 = vpop.permute.xlu0 %2334
    %2336 = vrot.lane.b32.xlu0 %v2269, 104
    %v2337 = vpop.permute.xlu0 %2336
    %2338 = vrot.lane.b32.xlu0 %v2274, 104
    %v2339 = vpop.permute.xlu0 %2338
    %2340 = vrot.lane.b32.xlu0 %v2279, 104
    %v2341 = vpop.permute.xlu0 %2340
    %2342 = vrot.lane.b32.xlu0 %v2264, 96
    %v2343 = vpop.permute.xlu0 %2342
    %2344 = vrot.lane.b32.xlu0 %v2269, 96
    %v2345 = vpop.permute.xlu0 %2344
    %2346 = vrot.lane.b32.xlu0 %v2274, 96
    %v2347 = vpop.permute.xlu0 %2346
    %2348 = vrot.lane.b32.xlu0 %v2279, 96
    %v2349 = vpop.permute.xlu0 %2348
    %v2350 = vsel %vm317, %v2282, 0
    %v2352 = vsel %vm317, %v2283, 0
    %v2354 = vsel %vm317, %v2284, 0
    %v2356 = vsel %vm317, %v2285, 0
    %v2358 = vsel %vm317, %v2343, 0
    %v2360 = vsel %vm317, %v2345, 0
    %v2362 = vsel %vm317, %v2347, 0
    %v2364 = vsel %vm317, %v2349, 0
    %2366 = vmatprep.subr.mxu0 0.0
    %2367 = vmatpush1.xpose.msra.mxu0 0.0
    %2368 = vmatprep.subr.mxu0 0.0
    %2369 = vmatpush1.xpose.msra.mxu0 0.0
    %2370 = vmatprep.subr.mxu0 0.0
    %2371 = vmatpush1.xpose.msra.mxu0 0.0
    %2372 = vmatprep.subr.mxu0 0.0
    %2373 = vmatpush1.xpose.msra.mxu0 0.0
    %2374 = vmatprep.subr.mxu0 0.0
    %2375 = vmatpush1.xpose.msra.mxu0 0.0
    %2376 = vmatprep.subr.mxu0 0.0
    %2377 = vmatpush1.xpose.msra.mxu0 0.0
    %2378 = vmatprep.subr.mxu0 0.0
    %2379 = vmatpush1.xpose.msra.mxu0 0.0
    %2380 = vmatprep.subr.mxu0 0.0
    %2381 = vmatpush1.xpose.msra.mxu0 0.0
    %2382 = vmatprep.subr.mxu0 0.0
    %2383 = vmatpush1.xpose.msra.mxu0 0.0
    %2384 = vmatprep.subr.mxu0 0.0
    %2385 = vmatpush1.xpose.msra.mxu0 0.0
    %2386 = vmatprep.subr.mxu0 0.0
    %2387 = vmatpush1.xpose.msra.mxu0 0.0
    %2388 = vmatprep.subr.mxu0 0.0
    %2389 = vmatpush1.xpose.msra.mxu0 0.0
    %2390 = vmatprep.subr.mxu0 0.0
    %2391 = vmatpush1.xpose.msra.mxu0 %v2364
    %2392 = vmatprep.subr.mxu0 0.0
    %2393 = vmatpush1.xpose.msra.mxu0 %v2362
    %2394 = vmatprep.subr.mxu0 0.0
    %2395 = vmatpush1.xpose.msra.mxu0 %v2360
    %2396 = vmatprep.subr.mxu0 0.0
    %2397 = vmatpush1.xpose.msra.mxu0 %v2358
    %2398 = vmatprep.subr.mxu0 0.0
    %2399 = vmatpush2.xpose.msra.mxu0 0.0
    %2400 = vmatprep.subr.mxu0 0.0
    %2401 = vmatpush2.xpose.msra.mxu0 0.0
    %2402 = vmatprep.subr.mxu0 0.0
    %2403 = vmatpush2.xpose.msra.mxu0 0.0
    %2404 = vmatprep.subr.mxu0 0.0
    %2405 = vmatpush2.xpose.msra.mxu0 0.0
    %2406 = vmatprep.subr.mxu0 0.0
    %2407 = vmatpush2.xpose.msra.mxu0 0.0
    %2408 = vmatprep.subr.mxu0 0.0
    %2409 = vmatpush2.xpose.msra.mxu0 0.0
    %2410 = vmatprep.subr.mxu0 0.0
    %2411 = vmatpush2.xpose.msra.mxu0 0.0
    %2412 = vmatprep.subr.mxu0 0.0
    %2413 = vmatpush2.xpose.msra.mxu0 0.0
    %2414 = vmatprep.subr.mxu0 0.0
    %2415 = vmatpush2.xpose.msra.mxu0 0.0
    %2416 = vmatprep.subr.mxu0 0.0
    %2417 = vmatpush2.xpose.msra.mxu0 0.0
    %2418 = vmatprep.subr.mxu0 0.0
    %2419 = vmatpush2.xpose.msra.mxu0 0.0
    %2420 = vmatprep.subr.mxu0 0.0
    %2421 = vmatpush2.xpose.msra.mxu0 0.0
    %2422 = vmatprep.subr.mxu0 0.0
    %2423 = vmatpush2.xpose.msra.mxu0 0.0
    %2424 = vmatprep.subr.mxu0 0.0
    %2425 = vmatpush2.xpose.msra.mxu0 0.0
    %2426 = vmatprep.subr.mxu0 0.0
    %2427 = vmatpush2.xpose.msra.mxu0 0.0
    %2428 = vmatprep.subr.mxu0 0.0
    %2429 = vmatpush2.xpose.msra.mxu0 0.0
    %2430 = vmatprep.mubr.f32.mxu0 0.0
    %2431 = vmatmul.mubr.f32.gmra.mxu0 %v2350
    %v2432 = vpop.f32.mrf.mxu0
    %v2433 = vadd.f32 %v61, %v2432
    %v2434 = vpop.f32.mrf.mxu0
    %2435 = vmatprep.mubr.f32.mxu0 0.0
    %2436 = vmatmul.mubr.f32.gmra.mxu0 %v2352
    %v2437 = vpop.f32.mrf.mxu0
    %v2438 = vadd.f32 %v62, %v2437
    %v2439 = vpop.f32.mrf.mxu0
    %2440 = vmatprep.mubr.f32.mxu0 0.0
    %2441 = vmatmul.mubr.f32.gmra.mxu0 %v2354
    %v2442 = vpop.f32.mrf.mxu0
    %v2443 = vadd.f32 %v63, %v2442
    %v2444 = vpop.f32.mrf.mxu0
    %2445 = vmatprep.mubr.f32.mxu0 0.0
    %2446 = vmatmul.mubr.f32.gmra.mxu0 %v2356
    %v2447 = vpop.f32.mrf.mxu0
    %v2448 = vadd.f32 %v64, %v2447
    %v2449 = vpop.f32.mrf.mxu0
    %2450 = vdwg.mxu0
    %2451 = vrot.lane.b32.xlu0 %v2319, 96
    %v2452 = vpop.permute.xlu0 %2451
    %2453 = vrot.lane.b32.xlu0 %v2321, 96
    %v2454 = vpop.permute.xlu0 %2453
    %2455 = vrot.lane.b32.xlu0 %v2323, 96
    %v2456 = vpop.permute.xlu0 %2455
    %2457 = vrot.lane.b32.xlu0 %v2325, 96
    %v2458 = vpop.permute.xlu0 %2457
    %v2459 = vsel %vm317, %v2291, 0
    %v2461 = vsel %vm317, %v2293, 0
    %v2463 = vsel %vm317, %v2295, 0
    %v2465 = vsel %vm317, %v2297, 0
    %v2467 = vsel %vm317, %v2452, 0
    %v2469 = vsel %vm317, %v2454, 0
    %v2471 = vsel %vm317, %v2456, 0
    %v2473 = vsel %vm317, %v2458, 0
    %2475 = vmatprep.subr.mxu0 0.0
    %2476 = vmatpush1.xpose.msra.mxu0 0.0
    %2477 = vmatprep.subr.mxu0 0.0
    %2478 = vmatpush1.xpose.msra.mxu0 0.0
    %2479 = vmatprep.subr.mxu0 0.0
    %2480 = vmatpush1.xpose.msra.mxu0 0.0
    %2481 = vmatprep.subr.mxu0 0.0
    %2482 = vmatpush1.xpose.msra.mxu0 0.0
    %2483 = vmatprep.subr.mxu0 0.0
    %2484 = vmatpush1.xpose.msra.mxu0 0.0
    %2485 = vmatprep.subr.mxu0 0.0
    %2486 = vmatpush1.xpose.msra.mxu0 0.0
    %2487 = vmatprep.subr.mxu0 0.0
    %2488 = vmatpush1.xpose.msra.mxu0 0.0
    %2489 = vmatprep.subr.mxu0 0.0
    %2490 = vmatpush1.xpose.msra.mxu0 0.0
    %2491 = vmatprep.subr.mxu0 0.0
    %2492 = vmatpush1.xpose.msra.mxu0 0.0
    %2493 = vmatprep.subr.mxu0 0.0
    %2494 = vmatpush1.xpose.msra.mxu0 0.0
    %2495 = vmatprep.subr.mxu0 0.0
    %2496 = vmatpush1.xpose.msra.mxu0 0.0
    %2497 = vmatprep.subr.mxu0 0.0
    %2498 = vmatpush1.xpose.msra.mxu0 0.0
    %2499 = vmatprep.subr.mxu0 0.0
    %2500 = vmatpush1.xpose.msra.mxu0 %v2473
    %2501 = vmatprep.subr.mxu0 0.0
    %2502 = vmatpush1.xpose.msra.mxu0 %v2471
    %2503 = vmatprep.subr.mxu0 0.0
    %2504 = vmatpush1.xpose.msra.mxu0 %v2469
    %2505 = vmatprep.subr.mxu0 0.0
    %2506 = vmatpush1.xpose.msra.mxu0 %v2467
    %2507 = vmatprep.subr.mxu0 0.0
    %2508 = vmatpush2.xpose.msra.mxu0 0.0
    %2509 = vmatprep.subr.mxu0 0.0
    %2510 = vmatpush2.xpose.msra.mxu0 0.0
    %2511 = vmatprep.subr.mxu0 0.0
    %2512 = vmatpush2.xpose.msra.mxu0 0.0
    %2513 = vmatprep.subr.mxu0 0.0
    %2514 = vmatpush2.xpose.msra.mxu0 0.0
    %2515 = vmatprep.subr.mxu0 0.0
    %2516 = vmatpush2.xpose.msra.mxu0 0.0
    %2517 = vmatprep.subr.mxu0 0.0
    %2518 = vmatpush2.xpose.msra.mxu0 0.0
    %2519 = vmatprep.subr.mxu0 0.0
    %2520 = vmatpush2.xpose.msra.mxu0 0.0
    %2521 = vmatprep.subr.mxu0 0.0
    %2522 = vmatpush2.xpose.msra.mxu0 0.0
    %2523 = vmatprep.subr.mxu0 0.0
    %2524 = vmatpush2.xpose.msra.mxu0 0.0
    %2525 = vmatprep.subr.mxu0 0.0
    %2526 = vmatpush2.xpose.msra.mxu0 0.0
    %2527 = vmatprep.subr.mxu0 0.0
    %2528 = vmatpush2.xpose.msra.mxu0 0.0
    %2529 = vmatprep.subr.mxu0 0.0
    %2530 = vmatpush2.xpose.msra.mxu0 0.0
    %2531 = vmatprep.subr.mxu0 0.0
    %2532 = vmatpush2.xpose.msra.mxu0 0.0
    %2533 = vmatprep.subr.mxu0 0.0
    %2534 = vmatpush2.xpose.msra.mxu0 0.0
    %2535 = vmatprep.subr.mxu0 0.0
    %2536 = vmatpush2.xpose.msra.mxu0 0.0
    %2537 = vmatprep.subr.mxu0 0.0
    %2538 = vmatpush2.xpose.msra.mxu0 0.0
    %2539 = vmatprep.mubr.f32.mxu0 0.0
    %2540 = vmatmul.mubr.f32.gmra.mxu0 %v2459
    %v2541 = vpop.f32.mrf.mxu0
    %v2542 = vadd.f32 %v61, %v2541
    %v2543 = vpop.f32.mrf.mxu0
    %2544 = vmatprep.mubr.f32.mxu0 0.0
    %2545 = vmatmul.mubr.f32.gmra.mxu0 %v2461
    %v2546 = vpop.f32.mrf.mxu0
    %v2547 = vadd.f32 %v62, %v2546
    %v2548 = vpop.f32.mrf.mxu0
    %2549 = vmatprep.mubr.f32.mxu0 0.0
    %2550 = vmatmul.mubr.f32.gmra.mxu0 %v2463
    %v2551 = vpop.f32.mrf.mxu0
    %v2552 = vadd.f32 %v63, %v2551
    %v2553 = vpop.f32.mrf.mxu0
    %2554 = vmatprep.mubr.f32.mxu0 0.0
    %2555 = vmatmul.mubr.f32.gmra.mxu0 %v2465
    %v2556 = vpop.f32.mrf.mxu0
    %v2557 = vadd.f32 %v64, %v2556
    %v2558 = vpop.f32.mrf.mxu0
    %2559 = vdwg.mxu0
    %2560 = vrot.lane.b32.xlu0 %v2327, 96
    %v2561 = vpop.permute.xlu0 %2560
    %2562 = vrot.lane.b32.xlu0 %v2329, 96
    %v2563 = vpop.permute.xlu0 %2562
    %2564 = vrot.lane.b32.xlu0 %v2331, 96
    %v2565 = vpop.permute.xlu0 %2564
    %2566 = vrot.lane.b32.xlu0 %v2333, 96
    %v2567 = vpop.permute.xlu0 %2566
    %v2568 = vsel %vm317, %v2299, 0
    %v2570 = vsel %vm317, %v2301, 0
    %v2572 = vsel %vm317, %v2303, 0
    %v2574 = vsel %vm317, %v2305, 0
    %v2576 = vsel %vm317, %v2561, 0
    %v2578 = vsel %vm317, %v2563, 0
    %v2580 = vsel %vm317, %v2565, 0
    %v2582 = vsel %vm317, %v2567, 0
    %2584 = vmatprep.subr.mxu0 0.0
    %2585 = vmatpush1.xpose.msra.mxu0 0.0
    %2586 = vmatprep.subr.mxu0 0.0
    %2587 = vmatpush1.xpose.msra.mxu0 0.0
    %2588 = vmatprep.subr.mxu0 0.0
    %2589 = vmatpush1.xpose.msra.mxu0 0.0
    %2590 = vmatprep.subr.mxu0 0.0
    %2591 = vmatpush1.xpose.msra.mxu0 0.0
    %2592 = vmatprep.subr.mxu0 0.0
    %2593 = vmatpush1.xpose.msra.mxu0 0.0
    %2594 = vmatprep.subr.mxu0 0.0
    %2595 = vmatpush1.xpose.msra.mxu0 0.0
    %2596 = vmatprep.subr.mxu0 0.0
    %2597 = vmatpush1.xpose.msra.mxu0 0.0
    %2598 = vmatprep.subr.mxu0 0.0
    %2599 = vmatpush1.xpose.msra.mxu0 0.0
    %2600 = vmatprep.subr.mxu0 0.0
    %2601 = vmatpush1.xpose.msra.mxu0 0.0
    %2602 = vmatprep.subr.mxu0 0.0
    %2603 = vmatpush1.xpose.msra.mxu0 0.0
    %2604 = vmatprep.subr.mxu0 0.0
    %2605 = vmatpush1.xpose.msra.mxu0 0.0
    %2606 = vmatprep.subr.mxu0 0.0
    %2607 = vmatpush1.xpose.msra.mxu0 0.0
    %2608 = vmatprep.subr.mxu0 0.0
    %2609 = vmatpush1.xpose.msra.mxu0 %v2582
    %2610 = vmatprep.subr.mxu0 0.0
    %2611 = vmatpush1.xpose.msra.mxu0 %v2580
    %2612 = vmatprep.subr.mxu0 0.0
    %2613 = vmatpush1.xpose.msra.mxu0 %v2578
    %2614 = vmatprep.subr.mxu0 0.0
    %2615 = vmatpush1.xpose.msra.mxu0 %v2576
    %2616 = vmatprep.subr.mxu0 0.0
    %2617 = vmatpush2.xpose.msra.mxu0 0.0
    %2618 = vmatprep.subr.mxu0 0.0
    %2619 = vmatpush2.xpose.msra.mxu0 0.0
    %2620 = vmatprep.subr.mxu0 0.0
    %2621 = vmatpush2.xpose.msra.mxu0 0.0
    %2622 = vmatprep.subr.mxu0 0.0
    %2623 = vmatpush2.xpose.msra.mxu0 0.0
    %2624 = vmatprep.subr.mxu0 0.0
    %2625 = vmatpush2.xpose.msra.mxu0 0.0
    %2626 = vmatprep.subr.mxu0 0.0
    %2627 = vmatpush2.xpose.msra.mxu0 0.0
    %2628 = vmatprep.subr.mxu0 0.0
    %2629 = vmatpush2.xpose.msra.mxu0 0.0
    %2630 = vmatprep.subr.mxu0 0.0
    %2631 = vmatpush2.xpose.msra.mxu0 0.0
    %2632 = vmatprep.subr.mxu0 0.0
    %2633 = vmatpush2.xpose.msra.mxu0 0.0
    %2634 = vmatprep.subr.mxu0 0.0
    %2635 = vmatpush2.xpose.msra.mxu0 0.0
    %2636 = vmatprep.subr.mxu0 0.0
    %2637 = vmatpush2.xpose.msra.mxu0 0.0
    %2638 = vmatprep.subr.mxu0 0.0
    %2639 = vmatpush2.xpose.msra.mxu0 0.0
    %2640 = vmatprep.subr.mxu0 0.0
    %2641 = vmatpush2.xpose.msra.mxu0 0.0
    %2642 = vmatprep.subr.mxu0 0.0
    %2643 = vmatpush2.xpose.msra.mxu0 0.0
    %2644 = vmatprep.subr.mxu0 0.0
    %2645 = vmatpush2.xpose.msra.mxu0 0.0
    %2646 = vmatprep.subr.mxu0 0.0
    %2647 = vmatpush2.xpose.msra.mxu0 0.0
    %2648 = vmatprep.mubr.f32.mxu0 0.0
    %2649 = vmatmul.mubr.f32.gmra.mxu0 %v2568
    %v2650 = vpop.f32.mrf.mxu0
    %v2651 = vadd.f32 %v61, %v2650
    %v2652 = vpop.f32.mrf.mxu0
    %2653 = vmatprep.mubr.f32.mxu0 0.0
    %2654 = vmatmul.mubr.f32.gmra.mxu0 %v2570
    %v2655 = vpop.f32.mrf.mxu0
    %v2656 = vadd.f32 %v62, %v2655
    %v2657 = vpop.f32.mrf.mxu0
    %2658 = vmatprep.mubr.f32.mxu0 0.0
    %2659 = vmatmul.mubr.f32.gmra.mxu0 %v2572
    %v2660 = vpop.f32.mrf.mxu0
    %v2661 = vadd.f32 %v63, %v2660
    %v2662 = vpop.f32.mrf.mxu0
    %2663 = vmatprep.mubr.f32.mxu0 0.0
    %2664 = vmatmul.mubr.f32.gmra.mxu0 %v2574
    %v2665 = vpop.f32.mrf.mxu0
    %v2666 = vadd.f32 %v64, %v2665
    %v2667 = vpop.f32.mrf.mxu0
    %2668 = vdwg.mxu0
    %2669 = vrot.lane.b32.xlu0 %v2335, 96
    %v2670 = vpop.permute.xlu0 %2669
    %2671 = vrot.lane.b32.xlu0 %v2337, 96
    %v2672 = vpop.permute.xlu0 %2671
    %2673 = vrot.lane.b32.xlu0 %v2339, 96
    %v2674 = vpop.permute.xlu0 %2673
    %2675 = vrot.lane.b32.xlu0 %v2341, 96
    %v2676 = vpop.permute.xlu0 %2675
    %v2677 = vsel %vm317, %v2307, 0
    %v2679 = vsel %vm317, %v2309, 0
    %v2681 = vsel %vm317, %v2311, 0
    %v2683 = vsel %vm317, %v2313, 0
    %v2685 = vsel %vm317, %v2670, 0
    %v2687 = vsel %vm317, %v2672, 0
    %v2689 = vsel %vm317, %v2674, 0
    %v2691 = vsel %vm317, %v2676, 0
    %2693 = vmatprep.subr.mxu0 0.0
    %2694 = vmatpush1.xpose.msra.mxu0 0.0
    %2695 = vmatprep.subr.mxu0 0.0
    %2696 = vmatpush1.xpose.msra.mxu0 0.0
    %2697 = vmatprep.subr.mxu0 0.0
    %2698 = vmatpush1.xpose.msra.mxu0 0.0
    %2699 = vmatprep.subr.mxu0 0.0
    %2700 = vmatpush1.xpose.msra.mxu0 0.0
    %2701 = vmatprep.subr.mxu0 0.0
    %2702 = vmatpush1.xpose.msra.mxu0 0.0
    %2703 = vmatprep.subr.mxu0 0.0
    %2704 = vmatpush1.xpose.msra.mxu0 0.0
    %2705 = vmatprep.subr.mxu0 0.0
    %2706 = vmatpush1.xpose.msra.mxu0 0.0
    %2707 = vmatprep.subr.mxu0 0.0
    %2708 = vmatpush1.xpose.msra.mxu0 0.0
    %2709 = vmatprep.subr.mxu0 0.0
    %2710 = vmatpush1.xpose.msra.mxu0 0.0
    %2711 = vmatprep.subr.mxu0 0.0
    %2712 = vmatpush1.xpose.msra.mxu0 0.0
    %2713 = vmatprep.subr.mxu0 0.0
    %2714 = vmatpush1.xpose.msra.mxu0 0.0
    %2715 = vmatprep.subr.mxu0 0.0
    %2716 = vmatpush1.xpose.msra.mxu0 0.0
    %2717 = vmatprep.subr.mxu0 0.0
    %2718 = vmatpush1.xpose.msra.mxu0 %v2691
    %2719 = vmatprep.subr.mxu0 0.0
    %2720 = vmatpush1.xpose.msra.mxu0 %v2689
    %2721 = vmatprep.subr.mxu0 0.0
    %2722 = vmatpush1.xpose.msra.mxu0 %v2687
    %2723 = vmatprep.subr.mxu0 0.0
    %2724 = vmatpush1.xpose.msra.mxu0 %v2685
    %2725 = vmatprep.subr.mxu0 0.0
    %2726 = vmatpush2.xpose.msra.mxu0 0.0
    %2727 = vmatprep.subr.mxu0 0.0
    %2728 = vmatpush2.xpose.msra.mxu0 0.0
    %2729 = vmatprep.subr.mxu0 0.0
    %2730 = vmatpush2.xpose.msra.mxu0 0.0
    %2731 = vmatprep.subr.mxu0 0.0
    %2732 = vmatpush2.xpose.msra.mxu0 0.0
    %2733 = vmatprep.subr.mxu0 0.0
    %2734 = vmatpush2.xpose.msra.mxu0 0.0
    %2735 = vmatprep.subr.mxu0 0.0
    %2736 = vmatpush2.xpose.msra.mxu0 0.0
    %2737 = vmatprep.subr.mxu0 0.0
    %2738 = vmatpush2.xpose.msra.mxu0 0.0
    %2739 = vmatprep.subr.mxu0 0.0
    %2740 = vmatpush2.xpose.msra.mxu0 0.0
    %2741 = vmatprep.subr.mxu0 0.0
    %2742 = vmatpush2.xpose.msra.mxu0 0.0
    %2743 = vmatprep.subr.mxu0 0.0
    %2744 = vmatpush2.xpose.msra.mxu0 0.0
    %2745 = vmatprep.subr.mxu0 0.0
    %2746 = vmatpush2.xpose.msra.mxu0 0.0
    %2747 = vmatprep.subr.mxu0 0.0
    %2748 = vmatpush2.xpose.msra.mxu0 0.0
    %2749 = vmatprep.subr.mxu0 0.0
    %2750 = vmatpush2.xpose.msra.mxu0 0.0
    %2751 = vmatprep.subr.mxu0 0.0
    %2752 = vmatpush2.xpose.msra.mxu0 0.0
    %2753 = vmatprep.subr.mxu0 0.0
    %2754 = vmatpush2.xpose.msra.mxu0 0.0
    %2755 = vmatprep.subr.mxu0 0.0
    %2756 = vmatpush2.xpose.msra.mxu0 0.0
    %2757 = vmatprep.mubr.f32.mxu0 0.0
    %2758 = vmatmul.mubr.f32.gmra.mxu0 %v2677
    %v2759 = vpop.f32.mrf.mxu0
    %v2760 = vadd.f32 %v61, %v2759
    %v2761 = vpop.f32.mrf.mxu0
    %2762 = vmatprep.mubr.f32.mxu0 0.0
    %2763 = vmatmul.mubr.f32.gmra.mxu0 %v2679
    %v2764 = vpop.f32.mrf.mxu0
    %v2765 = vadd.f32 %v62, %v2764
    %v2766 = vpop.f32.mrf.mxu0
    %2767 = vmatprep.mubr.f32.mxu0 0.0
    %2768 = vmatmul.mubr.f32.gmra.mxu0 %v2681
    %v2769 = vpop.f32.mrf.mxu0
    %v2770 = vadd.f32 %v63, %v2769
    %v2771 = vpop.f32.mrf.mxu0
    %2772 = vmatprep.mubr.f32.mxu0 0.0
    %2773 = vmatmul.mubr.f32.gmra.mxu0 %v2683
    %v2774 = vpop.f32.mrf.mxu0
    %v2775 = vadd.f32 %v64, %v2774
    %v2776 = vpop.f32.mrf.mxu0
    %2777 = vdwg.mxu0
    %v2778 = vsel %vm67, %v2433, -inf
    %2779 = vmax.xlane.f32.xlu0 %v2778
    %v2780 = vpop.xlane.xlu0 %2779
    %v2781 = vsel %vm67, %v2438, -inf
    %2782 = vmax.xlane.f32.xlu0 %v2781
    %v2783 = vpop.xlane.xlu0 %2782
    %v2784 = vsel %vm67, %v2443, -inf
    %2785 = vmax.xlane.f32.xlu0 %v2784
    %v2786 = vpop.xlane.xlu0 %2785
    %v2787 = vsel %vm67, %v2448, -inf
    %2788 = vmax.xlane.f32.xlu0 %v2787
    %v2789 = vpop.xlane.xlu0 %2788
    %v2790 = vsel %vm67, %v2542, -inf
    %2791 = vmax.xlane.f32.xlu0 %v2790
    %v2792 = vpop.xlane.xlu0 %2791
    %v2793 = vsel %vm67, %v2547, -inf
    %2794 = vmax.xlane.f32.xlu0 %v2793
    %v2795 = vpop.xlane.xlu0 %2794
    %v2796 = vsel %vm67, %v2552, -inf
    %2797 = vmax.xlane.f32.xlu0 %v2796
    %v2798 = vpop.xlane.xlu0 %2797
    %v2799 = vsel %vm67, %v2557, -inf
    %2800 = vmax.xlane.f32.xlu0 %v2799
    %v2801 = vpop.xlane.xlu0 %2800
    %v2802 = vsel %vm67, %v2651, -inf
    %2803 = vmax.xlane.f32.xlu0 %v2802
    %v2804 = vpop.xlane.xlu0 %2803
    %v2805 = vsel %vm67, %v2656, -inf
    %2806 = vmax.xlane.f32.xlu0 %v2805
    %v2807 = vpop.xlane.xlu0 %2806
    %v2808 = vsel %vm67, %v2661, -inf
    %2809 = vmax.xlane.f32.xlu0 %v2808
    %v2810 = vpop.xlane.xlu0 %2809
    %v2811 = vsel %vm67, %v2666, -inf
    %2812 = vmax.xlane.f32.xlu0 %v2811
    %v2813 = vpop.xlane.xlu0 %2812
    %v2814 = vsel %vm67, %v2760, -inf
    %2815 = vmax.xlane.f32.xlu0 %v2814
    %v2816 = vpop.xlane.xlu0 %2815
    %v2817 = vsel %vm67, %v2765, -inf
    %2818 = vmax.xlane.f32.xlu0 %v2817
    %v2819 = vpop.xlane.xlu0 %2818
    %v2820 = vsel %vm67, %v2770, -inf
    %2821 = vmax.xlane.f32.xlu0 %v2820
    %v2822 = vpop.xlane.xlu0 %2821
    %v2823 = vsel %vm67, %v2775, -inf
    %2824 = vmax.xlane.f32.xlu0 %v2823
    %v2825 = vpop.xlane.xlu0 %2824
    %v2826 = vsub.f32 %v2433, %v2780
    %v2827 = vsub.f32 %v2438, %v2783
    %v2828 = vsub.f32 %v2443, %v2786
    %v2829 = vsub.f32 %v2448, %v2789
    %v2830 = vsub.f32 %v2542, %v2792
    %v2831 = vsub.f32 %v2547, %v2795
    %v2832 = vsub.f32 %v2552, %v2798
    %v2833 = vsub.f32 %v2557, %v2801
    %v2834 = vsub.f32 %v2651, %v2804
    %v2835 = vsub.f32 %v2656, %v2807
    %v2836 = vsub.f32 %v2661, %v2810
    %v2837 = vsub.f32 %v2666, %v2813
    %v2838 = vsub.f32 %v2760, %v2816
    %v2839 = vsub.f32 %v2765, %v2819
    %v2840 = vsub.f32 %v2770, %v2822
    %v2841 = vsub.f32 %v2775, %v2825
    %v2842 = vmul.f32 %v2826, 1.442695
    %v2843 = vpow.pop %v2842
    %v2844 = vmul.f32 %v2827, 1.442695
    %v2845 = vpow.pop %v2844
    %v2846 = vmul.f32 %v2828, 1.442695
    %v2847 = vpow.pop %v2846
    %v2848 = vmul.f32 %v2829, 1.442695
    %v2849 = vpow.pop %v2848
    %v2850 = vmul.f32 %v2830, 1.442695
    %v2851 = vpow.pop %v2850
    %v2852 = vmul.f32 %v2831, 1.442695
    %v2853 = vpow.pop %v2852
    %v2854 = vmul.f32 %v2832, 1.442695
    %v2855 = vpow.pop %v2854
    %v2856 = vmul.f32 %v2833, 1.442695
    %v2857 = vpow.pop %v2856
    %v2858 = vmul.f32 %v2834, 1.442695
    %v2859 = vpow.pop %v2858
    %v2860 = vmul.f32 %v2835, 1.442695
    %v2861 = vpow.pop %v2860
    %v2862 = vmul.f32 %v2836, 1.442695
    %v2863 = vpow.pop %v2862
    %v2864 = vmul.f32 %v2837, 1.442695
    %v2865 = vpow.pop %v2864
    %v2866 = vmul.f32 %v2838, 1.442695
    %v2867 = vpow.pop %v2866
    %v2868 = vmul.f32 %v2839, 1.442695
    %v2869 = vpow.pop %v2868
    %v2870 = vmul.f32 %v2840, 1.442695
    %v2871 = vpow.pop %v2870
    %v2872 = vmul.f32 %v2841, 1.442695
    %v2873 = vpow.pop %v2872
    %v2874 = vsel %vm67, %v2843, 0.0
    %2875 = vadd.xlane.f32.xlu0 %v2874
    %v2876 = vpop.xlane.xlu0 %2875
    %v2877 = vsel %vm67, %v2845, 0.0
    %2878 = vadd.xlane.f32.xlu0 %v2877
    %v2879 = vpop.xlane.xlu0 %2878
    %v2880 = vsel %vm67, %v2847, 0.0
    %2881 = vadd.xlane.f32.xlu0 %v2880
    %v2882 = vpop.xlane.xlu0 %2881
    %v2883 = vsel %vm67, %v2849, 0.0
    %2884 = vadd.xlane.f32.xlu0 %v2883
    %v2885 = vpop.xlane.xlu0 %2884
    %v2886 = vsel %vm67, %v2851, 0.0
    %2887 = vadd.xlane.f32.xlu0 %v2886
    %v2888 = vpop.xlane.xlu0 %2887
    %v2889 = vsel %vm67, %v2853, 0.0
    %2890 = vadd.xlane.f32.xlu0 %v2889
    %v2891 = vpop.xlane.xlu0 %2890
    %v2892 = vsel %vm67, %v2855, 0.0
    %2893 = vadd.xlane.f32.xlu0 %v2892
    %v2894 = vpop.xlane.xlu0 %2893
    %v2895 = vsel %vm67, %v2857, 0.0
    %2896 = vadd.xlane.f32.xlu0 %v2895
    %v2897 = vpop.xlane.xlu0 %2896
    %v2898 = vsel %vm67, %v2859, 0.0
    %2899 = vadd.xlane.f32.xlu0 %v2898
    %v2900 = vpop.xlane.xlu0 %2899
    %v2901 = vsel %vm67, %v2861, 0.0
    %2902 = vadd.xlane.f32.xlu0 %v2901
    %v2903 = vpop.xlane.xlu0 %2902
    %v2904 = vsel %vm67, %v2863, 0.0
    %2905 = vadd.xlane.f32.xlu0 %v2904
    %v2906 = vpop.xlane.xlu0 %2905
    %v2907 = vsel %vm67, %v2865, 0.0
    %2908 = vadd.xlane.f32.xlu0 %v2907
    %v2909 = vpop.xlane.xlu0 %2908
    %v2910 = vsel %vm67, %v2867, 0.0
    %2911 = vadd.xlane.f32.xlu0 %v2910
    %v2912 = vpop.xlane.xlu0 %2911
    %v2913 = vsel %vm67, %v2869, 0.0
    %2914 = vadd.xlane.f32.xlu0 %v2913
    %v2915 = vpop.xlane.xlu0 %2914
    %v2916 = vsel %vm67, %v2871, 0.0
    %2917 = vadd.xlane.f32.xlu0 %v2916
    %v2918 = vpop.xlane.xlu0 %2917
    %v2919 = vsel %vm67, %v2873, 0.0
    %2920 = vadd.xlane.f32.xlu0 %v2919
    %v2921 = vpop.xlane.xlu0 %2920
    %v2922 = vrcp.pop %v2876
    %v2923 = vrcp.pop %v2879
    %v2924 = vrcp.pop %v2882
    %v2925 = vrcp.pop %v2885
    %v2926 = vrcp.pop %v2888
    %v2927 = vrcp.pop %v2891
    %v2928 = vrcp.pop %v2894
    %v2929 = vrcp.pop %v2897
    %v2930 = vrcp.pop %v2900
    %v2931 = vrcp.pop %v2903
    %v2932 = vrcp.pop %v2906
    %v2933 = vrcp.pop %v2909
    %v2934 = vrcp.pop %v2912
    %v2935 = vrcp.pop %v2915
    %v2936 = vrcp.pop %v2918
    %v2937 = vrcp.pop %v2921
    %v2938 = vmul.f32 %v2843, %v2922
    %v2939 = vmul.f32 %v2845, %v2923
    %v2940 = vmul.f32 %v2847, %v2924
    %v2941 = vmul.f32 %v2849, %v2925
    %v2942 = vmul.f32 %v2851, %v2926
    %v2943 = vmul.f32 %v2853, %v2927
    %v2944 = vmul.f32 %v2855, %v2928
    %v2945 = vmul.f32 %v2857, %v2929
    %v2946 = vmul.f32 %v2859, %v2930
    %v2947 = vmul.f32 %v2861, %v2931
    %v2948 = vmul.f32 %v2863, %v2932
    %v2949 = vmul.f32 %v2865, %v2933
    %v2950 = vmul.f32 %v2867, %v2934
    %v2951 = vmul.f32 %v2869, %v2935
    %v2952 = vmul.f32 %v2871, %v2936
    %v2953 = vmul.f32 %v2873, %v2937
    %2954 = vrot.lane.b32.xlu0 %v2264, 64
    %v2955 = vpop.permute.xlu0 %2954
    %2956 = vrot.lane.b32.xlu0 %v2269, 64
    %v2957 = vpop.permute.xlu0 %2956
    %2958 = vrot.lane.b32.xlu0 %v2274, 64
    %v2959 = vpop.permute.xlu0 %2958
    %2960 = vrot.lane.b32.xlu0 %v2279, 64
    %v2961 = vpop.permute.xlu0 %2960
    %v2967 = vsel %vm67, %v2938, 0
    %v2970 = vsel %vm67, %v2939, 0
    %v2973 = vsel %vm67, %v2940, 0
    %v2976 = vsel %vm67, %v2941, 0
    %2978 = vmatprep.subr.mxu0 0.0
    %2979 = vmatpush1.msra.mxu0 0.0
    %2980 = vmatprep.subr.mxu0 0.0
    %2981 = vmatpush1.msra.mxu0 0.0
    %2982 = vmatprep.subr.mxu0 0.0
    %2983 = vmatpush1.msra.mxu0 0.0
    %2984 = vmatprep.subr.mxu0 0.0
    %2985 = vmatpush1.msra.mxu0 0.0
    %2986 = vmatprep.subr.mxu0 0.0
    %2987 = vmatpush1.msra.mxu0 0.0
    %2988 = vmatprep.subr.mxu0 0.0
    %2989 = vmatpush1.msra.mxu0 0.0
    %2990 = vmatprep.subr.mxu0 0.0
    %2991 = vmatpush1.msra.mxu0 0.0
    %2992 = vmatprep.subr.mxu0 0.0
    %2993 = vmatpush1.msra.mxu0 0.0
    %2994 = vmatprep.subr.mxu0 0.0
    %2995 = vmatpush1.msra.mxu0 0.0
    %2996 = vmatprep.subr.mxu0 0.0
    %2997 = vmatpush1.msra.mxu0 0.0
    %2998 = vmatprep.subr.mxu0 0.0
    %2999 = vmatpush1.msra.mxu0 0.0
    %3000 = vmatprep.subr.mxu0 0.0
    %3001 = vmatpush1.msra.mxu0 0.0
    %3002 = vmatprep.subr.mxu0 0.0
    %3003 = vmatpush1.msra.mxu0 %v2961
    %3004 = vmatprep.subr.mxu0 0.0
    %3005 = vmatpush1.msra.mxu0 %v2959
    %3006 = vmatprep.subr.mxu0 0.0
    %3007 = vmatpush1.msra.mxu0 %v2957
    %3008 = vmatprep.subr.mxu0 0.0
    %3009 = vmatpush1.msra.mxu0 %v2955
    %3010 = vmatprep.subr.mxu0 0.0
    %3011 = vmatpush2.msra.mxu0 0.0
    %3012 = vmatprep.subr.mxu0 0.0
    %3013 = vmatpush2.msra.mxu0 0.0
    %3014 = vmatprep.subr.mxu0 0.0
    %3015 = vmatpush2.msra.mxu0 0.0
    %3016 = vmatprep.subr.mxu0 0.0
    %3017 = vmatpush2.msra.mxu0 0.0
    %3018 = vmatprep.subr.mxu0 0.0
    %3019 = vmatpush2.msra.mxu0 0.0
    %3020 = vmatprep.subr.mxu0 0.0
    %3021 = vmatpush2.msra.mxu0 0.0
    %3022 = vmatprep.subr.mxu0 0.0
    %3023 = vmatpush2.msra.mxu0 0.0
    %3024 = vmatprep.subr.mxu0 0.0
    %3025 = vmatpush2.msra.mxu0 0.0
    %3026 = vmatprep.subr.mxu0 0.0
    %3027 = vmatpush2.msra.mxu0 0.0
    %3028 = vmatprep.subr.mxu0 0.0
    %3029 = vmatpush2.msra.mxu0 0.0
    %3030 = vmatprep.subr.mxu0 0.0
    %3031 = vmatpush2.msra.mxu0 0.0
    %3032 = vmatprep.subr.mxu0 0.0
    %3033 = vmatpush2.msra.mxu0 0.0
    %3034 = vmatprep.subr.mxu0 0.0
    %3035 = vmatpush2.msra.mxu0 0.0
    %3036 = vmatprep.subr.mxu0 0.0
    %3037 = vmatpush2.msra.mxu0 0.0
    %3038 = vmatprep.subr.mxu0 0.0
    %3039 = vmatpush2.msra.mxu0 0.0
    %3040 = vmatprep.subr.mxu0 0.0
    %3041 = vmatpush2.msra.mxu0 0.0
    %3042 = vmatprep.mubr.f32.mxu0 0.0
    %3043 = vmatmul.mubr.f32.gmra.mxu0 %v2967
    %v3044 = vpop.f32.mrf.mxu0
    %v3045 = vadd.f32 0.0, %v3044
    %v3046 = vpop.f32.mrf.mxu0
    %3047 = vmatprep.mubr.f32.mxu0 0.0
    %3048 = vmatmul.mubr.f32.gmra.mxu0 %v2970
    %v3049 = vpop.f32.mrf.mxu0
    %v3050 = vadd.f32 0.0, %v3049
    %v3051 = vpop.f32.mrf.mxu0
    %3052 = vmatprep.mubr.f32.mxu0 0.0
    %3053 = vmatmul.mubr.f32.gmra.mxu0 %v2973
    %v3054 = vpop.f32.mrf.mxu0
    %v3055 = vadd.f32 0.0, %v3054
    %v3056 = vpop.f32.mrf.mxu0
    %3057 = vmatprep.mubr.f32.mxu0 0.0
    %3058 = vmatmul.mubr.f32.gmra.mxu0 %v2976
    %v3059 = vpop.f32.mrf.mxu0
    %v3060 = vadd.f32 0.0, %v3059
    %v3061 = vpop.f32.mrf.mxu0
    %3062 = vdwg.mxu0
    %3063 = vrot.lane.b32.xlu0 %v2319, 64
    %v3064 = vpop.permute.xlu0 %3063
    %3065 = vrot.lane.b32.xlu0 %v2321, 64
    %v3066 = vpop.permute.xlu0 %3065
    %3067 = vrot.lane.b32.xlu0 %v2323, 64
    %v3068 = vpop.permute.xlu0 %3067
    %3069 = vrot.lane.b32.xlu0 %v2325, 64
    %v3070 = vpop.permute.xlu0 %3069
    %v3076 = vsel %vm67, %v2942, 0
    %v3079 = vsel %vm67, %v2943, 0
    %v3082 = vsel %vm67, %v2944, 0
    %v3085 = vsel %vm67, %v2945, 0
    %3087 = vmatprep.subr.mxu0 0.0
    %3088 = vmatpush1.msra.mxu0 0.0
    %3089 = vmatprep.subr.mxu0 0.0
    %3090 = vmatpush1.msra.mxu0 0.0
    %3091 = vmatprep.subr.mxu0 0.0
    %3092 = vmatpush1.msra.mxu0 0.0
    %3093 = vmatprep.subr.mxu0 0.0
    %3094 = vmatpush1.msra.mxu0 0.0
    %3095 = vmatprep.subr.mxu0 0.0
    %3096 = vmatpush1.msra.mxu0 0.0
    %3097 = vmatprep.subr.mxu0 0.0
    %3098 = vmatpush1.msra.mxu0 0.0
    %3099 = vmatprep.subr.mxu0 0.0
    %3100 = vmatpush1.msra.mxu0 0.0
    %3101 = vmatprep.subr.mxu0 0.0
    %3102 = vmatpush1.msra.mxu0 0.0
    %3103 = vmatprep.subr.mxu0 0.0
    %3104 = vmatpush1.msra.mxu0 0.0
    %3105 = vmatprep.subr.mxu0 0.0
    %3106 = vmatpush1.msra.mxu0 0.0
    %3107 = vmatprep.subr.mxu0 0.0
    %3108 = vmatpush1.msra.mxu0 0.0
    %3109 = vmatprep.subr.mxu0 0.0
    %3110 = vmatpush1.msra.mxu0 0.0
    %3111 = vmatprep.subr.mxu0 0.0
    %3112 = vmatpush1.msra.mxu0 %v3070
    %3113 = vmatprep.subr.mxu0 0.0
    %3114 = vmatpush1.msra.mxu0 %v3068
    %3115 = vmatprep.subr.mxu0 0.0
    %3116 = vmatpush1.msra.mxu0 %v3066
    %3117 = vmatprep.subr.mxu0 0.0
    %3118 = vmatpush1.msra.mxu0 %v3064
    %3119 = vmatprep.subr.mxu0 0.0
    %3120 = vmatpush2.msra.mxu0 0.0
    %3121 = vmatprep.subr.mxu0 0.0
    %3122 = vmatpush2.msra.mxu0 0.0
    %3123 = vmatprep.subr.mxu0 0.0
    %3124 = vmatpush2.msra.mxu0 0.0
    %3125 = vmatprep.subr.mxu0 0.0
    %3126 = vmatpush2.msra.mxu0 0.0
    %3127 = vmatprep.subr.mxu0 0.0
    %3128 = vmatpush2.msra.mxu0 0.0
    %3129 = vmatprep.subr.mxu0 0.0
    %3130 = vmatpush2.msra.mxu0 0.0
    %3131 = vmatprep.subr.mxu0 0.0
    %3132 = vmatpush2.msra.mxu0 0.0
    %3133 = vmatprep.subr.mxu0 0.0
    %3134 = vmatpush2.msra.mxu0 0.0
    %3135 = vmatprep.subr.mxu0 0.0
    %3136 = vmatpush2.msra.mxu0 0.0
    %3137 = vmatprep.subr.mxu0 0.0
    %3138 = vmatpush2.msra.mxu0 0.0
    %3139 = vmatprep.subr.mxu0 0.0
    %3140 = vmatpush2.msra.mxu0 0.0
    %3141 = vmatprep.subr.mxu0 0.0
    %3142 = vmatpush2.msra.mxu0 0.0
    %3143 = vmatprep.subr.mxu0 0.0
    %3144 = vmatpush2.msra.mxu0 0.0
    %3145 = vmatprep.subr.mxu0 0.0
    %3146 = vmatpush2.msra.mxu0 0.0
    %3147 = vmatprep.subr.mxu0 0.0
    %3148 = vmatpush2.msra.mxu0 0.0
    %3149 = vmatprep.subr.mxu0 0.0
    %3150 = vmatpush2.msra.mxu0 0.0
    %3151 = vmatprep.mubr.f32.mxu0 0.0
    %3152 = vmatmul.mubr.f32.gmra.mxu0 %v3076
    %v3153 = vpop.f32.mrf.mxu0
    %v3154 = vadd.f32 0.0, %v3153
    %v3155 = vpop.f32.mrf.mxu0
    %3156 = vmatprep.mubr.f32.mxu0 0.0
    %3157 = vmatmul.mubr.f32.gmra.mxu0 %v3079
    %v3158 = vpop.f32.mrf.mxu0
    %v3159 = vadd.f32 0.0, %v3158
    %v3160 = vpop.f32.mrf.mxu0
    %3161 = vmatprep.mubr.f32.mxu0 0.0
    %3162 = vmatmul.mubr.f32.gmra.mxu0 %v3082
    %v3163 = vpop.f32.mrf.mxu0
    %v3164 = vadd.f32 0.0, %v3163
    %v3165 = vpop.f32.mrf.mxu0
    %3166 = vmatprep.mubr.f32.mxu0 0.0
    %3167 = vmatmul.mubr.f32.gmra.mxu0 %v3085
    %v3168 = vpop.f32.mrf.mxu0
    %v3169 = vadd.f32 0.0, %v3168
    %v3170 = vpop.f32.mrf.mxu0
    %3171 = vdwg.mxu0
    %3172 = vrot.lane.b32.xlu0 %v2327, 64
    %v3173 = vpop.permute.xlu0 %3172
    %3174 = vrot.lane.b32.xlu0 %v2329, 64
    %v3175 = vpop.permute.xlu0 %3174
    %3176 = vrot.lane.b32.xlu0 %v2331, 64
    %v3177 = vpop.permute.xlu0 %3176
    %3178 = vrot.lane.b32.xlu0 %v2333, 64
    %v3179 = vpop.permute.xlu0 %3178
    %v3185 = vsel %vm67, %v2946, 0
    %v3188 = vsel %vm67, %v2947, 0
    %v3191 = vsel %vm67, %v2948, 0
    %v3194 = vsel %vm67, %v2949, 0
    %3196 = vmatprep.subr.mxu0 0.0
    %3197 = vmatpush1.msra.mxu0 0.0
    %3198 = vmatprep.subr.mxu0 0.0
    %3199 = vmatpush1.msra.mxu0 0.0
    %3200 = vmatprep.subr.mxu0 0.0
    %3201 = vmatpush1.msra.mxu0 0.0
    %3202 = vmatprep.subr.mxu0 0.0
    %3203 = vmatpush1.msra.mxu0 0.0
    %3204 = vmatprep.subr.mxu0 0.0
    %3205 = vmatpush1.msra.mxu0 0.0
    %3206 = vmatprep.subr.mxu0 0.0
    %3207 = vmatpush1.msra.mxu0 0.0
    %3208 = vmatprep.subr.mxu0 0.0
    %3209 = vmatpush1.msra.mxu0 0.0
    %3210 = vmatprep.subr.mxu0 0.0
    %3211 = vmatpush1.msra.mxu0 0.0
    %3212 = vmatprep.subr.mxu0 0.0
    %3213 = vmatpush1.msra.mxu0 0.0
    %3214 = vmatprep.subr.mxu0 0.0
    %3215 = vmatpush1.msra.mxu0 0.0
    %3216 = vmatprep.subr.mxu0 0.0
    %3217 = vmatpush1.msra.mxu0 0.0
    %3218 = vmatprep.subr.mxu0 0.0
    %3219 = vmatpush1.msra.mxu0 0.0
    %3220 = vmatprep.subr.mxu0 0.0
    %3221 = vmatpush1.msra.mxu0 %v3179
    %3222 = vmatprep.subr.mxu0 0.0
    %3223 = vmatpush1.msra.mxu0 %v3177
    %3224 = vmatprep.subr.mxu0 0.0
    %3225 = vmatpush1.msra.mxu0 %v3175
    %3226 = vmatprep.subr.mxu0 0.0
    %3227 = vmatpush1.msra.mxu0 %v3173
    %3228 = vmatprep.subr.mxu0 0.0
    %3229 = vmatpush2.msra.mxu0 0.0
    %3230 = vmatprep.subr.mxu0 0.0
    %3231 = vmatpush2.msra.mxu0 0.0
    %3232 = vmatprep.subr.mxu0 0.0
    %3233 = vmatpush2.msra.mxu0 0.0
    %3234 = vmatprep.subr.mxu0 0.0
    %3235 = vmatpush2.msra.mxu0 0.0
    %3236 = vmatprep.subr.mxu0 0.0
    %3237 = vmatpush2.msra.mxu0 0.0
    %3238 = vmatprep.subr.mxu0 0.0
    %3239 = vmatpush2.msra.mxu0 0.0
    %3240 = vmatprep.subr.mxu0 0.0
    %3241 = vmatpush2.msra.mxu0 0.0
    %3242 = vmatprep.subr.mxu0 0.0
    %3243 = vmatpush2.msra.mxu0 0.0
    %3244 = vmatprep.subr.mxu0 0.0
    %3245 = vmatpush2.msra.mxu0 0.0
    %3246 = vmatprep.subr.mxu0 0.0
    %3247 = vmatpush2.msra.mxu0 0.0
    %3248 = vmatprep.subr.mxu0 0.0
    %3249 = vmatpush2.msra.mxu0 0.0
    %3250 = vmatprep.subr.mxu0 0.0
    %3251 = vmatpush2.msra.mxu0 0.0
    %3252 = vmatprep.subr.mxu0 0.0
    %3253 = vmatpush2.msra.mxu0 0.0
    %3254 = vmatprep.subr.mxu0 0.0
    %3255 = vmatpush2.msra.mxu0 0.0
    %3256 = vmatprep.subr.mxu0 0.0
    %3257 = vmatpush2.msra.mxu0 0.0
    %3258 = vmatprep.subr.mxu0 0.0
    %3259 = vmatpush2.msra.mxu0 0.0
    %3260 = vmatprep.mubr.f32.mxu0 0.0
    %3261 = vmatmul.mubr.f32.gmra.mxu0 %v3185
    %v3262 = vpop.f32.mrf.mxu0
    %v3263 = vadd.f32 0.0, %v3262
    %v3264 = vpop.f32.mrf.mxu0
    %3265 = vmatprep.mubr.f32.mxu0 0.0
    %3266 = vmatmul.mubr.f32.gmra.mxu0 %v3188
    %v3267 = vpop.f32.mrf.mxu0
    %v3268 = vadd.f32 0.0, %v3267
    %v3269 = vpop.f32.mrf.mxu0
    %3270 = vmatprep.mubr.f32.mxu0 0.0
    %3271 = vmatmul.mubr.f32.gmra.mxu0 %v3191
    %v3272 = vpop.f32.mrf.mxu0
    %v3273 = vadd.f32 0.0, %v3272
    %v3274 = vpop.f32.mrf.mxu0
    %3275 = vmatprep.mubr.f32.mxu0 0.0
    %3276 = vmatmul.mubr.f32.gmra.mxu0 %v3194
    %v3277 = vpop.f32.mrf.mxu0
    %v3278 = vadd.f32 0.0, %v3277
    %v3279 = vpop.f32.mrf.mxu0
    %3280 = vdwg.mxu0
    %3281 = vrot.lane.b32.xlu0 %v2335, 64
    %v3282 = vpop.permute.xlu0 %3281
    %3283 = vrot.lane.b32.xlu0 %v2337, 64
    %v3284 = vpop.permute.xlu0 %3283
    %3285 = vrot.lane.b32.xlu0 %v2339, 64
    %v3286 = vpop.permute.xlu0 %3285
    %3287 = vrot.lane.b32.xlu0 %v2341, 64
    %v3288 = vpop.permute.xlu0 %3287
    %v3294 = vsel %vm67, %v2950, 0
    %v3297 = vsel %vm67, %v2951, 0
    %v3300 = vsel %vm67, %v2952, 0
    %v3303 = vsel %vm67, %v2953, 0
    %3305 = vmatprep.subr.mxu0 0.0
    %3306 = vmatpush1.msra.mxu0 0.0
    %3307 = vmatprep.subr.mxu0 0.0
    %3308 = vmatpush1.msra.mxu0 0.0
    %3309 = vmatprep.subr.mxu0 0.0
    %3310 = vmatpush1.msra.mxu0 0.0
    %3311 = vmatprep.subr.mxu0 0.0
    %3312 = vmatpush1.msra.mxu0 0.0
    %3313 = vmatprep.subr.mxu0 0.0
    %3314 = vmatpush1.msra.mxu0 0.0
    %3315 = vmatprep.subr.mxu0 0.0
    %3316 = vmatpush1.msra.mxu0 0.0
    %3317 = vmatprep.subr.mxu0 0.0
    %3318 = vmatpush1.msra.mxu0 0.0
    %3319 = vmatprep.subr.mxu0 0.0
    %3320 = vmatpush1.msra.mxu0 0.0
    %3321 = vmatprep.subr.mxu0 0.0
    %3322 = vmatpush1.msra.mxu0 0.0
    %3323 = vmatprep.subr.mxu0 0.0
    %3324 = vmatpush1.msra.mxu0 0.0
    %3325 = vmatprep.subr.mxu0 0.0
    %3326 = vmatpush1.msra.mxu0 0.0
    %3327 = vmatprep.subr.mxu0 0.0
    %3328 = vmatpush1.msra.mxu0 0.0
    %3329 = vmatprep.subr.mxu0 0.0
    %3330 = vmatpush1.msra.mxu0 %v3288
    %3331 = vmatprep.subr.mxu0 0.0
    %3332 = vmatpush1.msra.mxu0 %v3286
    %3333 = vmatprep.subr.mxu0 0.0
    %3334 = vmatpush1.msra.mxu0 %v3284
    %3335 = vmatprep.subr.mxu0 0.0
    %3336 = vmatpush1.msra.mxu0 %v3282
    %3337 = vmatprep.subr.mxu0 0.0
    %3338 = vmatpush2.msra.mxu0 0.0
    %3339 = vmatprep.subr.mxu0 0.0
    %3340 = vmatpush2.msra.mxu0 0.0
    %3341 = vmatprep.subr.mxu0 0.0
    %3342 = vmatpush2.msra.mxu0 0.0
    %3343 = vmatprep.subr.mxu0 0.0
    %3344 = vmatpush2.msra.mxu0 0.0
    %3345 = vmatprep.subr.mxu0 0.0
    %3346 = vmatpush2.msra.mxu0 0.0
    %3347 = vmatprep.subr.mxu0 0.0
    %3348 = vmatpush2.msra.mxu0 0.0
    %3349 = vmatprep.subr.mxu0 0.0
    %3350 = vmatpush2.msra.mxu0 0.0
    %3351 = vmatprep.subr.mxu0 0.0
    %3352 = vmatpush2.msra.mxu0 0.0
    %3353 = vmatprep.subr.mxu0 0.0
    %3354 = vmatpush2.msra.mxu0 0.0
    %3355 = vmatprep.subr.mxu0 0.0
    %3356 = vmatpush2.msra.mxu0 0.0
    %3357 = vmatprep.subr.mxu0 0.0
    %3358 = vmatpush2.msra.mxu0 0.0
    %3359 = vmatprep.subr.mxu0 0.0
    %3360 = vmatpush2.msra.mxu0 0.0
    %3361 = vmatprep.subr.mxu0 0.0
    %3362 = vmatpush2.msra.mxu0 0.0
    %3363 = vmatprep.subr.mxu0 0.0
    %3364 = vmatpush2.msra.mxu0 0.0
    %3365 = vmatprep.subr.mxu0 0.0
    %3366 = vmatpush2.msra.mxu0 0.0
    %3367 = vmatprep.subr.mxu0 0.0
    %3368 = vmatpush2.msra.mxu0 0.0
    %3369 = vmatprep.mubr.f32.mxu0 0.0
    %3370 = vmatmul.mubr.f32.gmra.mxu0 %v3294
    %v3371 = vpop.f32.mrf.mxu0
    %v3372 = vadd.f32 0.0, %v3371
    %v3373 = vpop.f32.mrf.mxu0
    %3374 = vmatprep.mubr.f32.mxu0 0.0
    %3375 = vmatmul.mubr.f32.gmra.mxu0 %v3297
    %v3376 = vpop.f32.mrf.mxu0
    %v3377 = vadd.f32 0.0, %v3376
    %v3378 = vpop.f32.mrf.mxu0
    %3379 = vmatprep.mubr.f32.mxu0 0.0
    %3380 = vmatmul.mubr.f32.gmra.mxu0 %v3300
    %v3381 = vpop.f32.mrf.mxu0
    %v3382 = vadd.f32 0.0, %v3381
    %v3383 = vpop.f32.mrf.mxu0
    %3384 = vmatprep.mubr.f32.mxu0 0.0
    %3385 = vmatmul.mubr.f32.gmra.mxu0 %v3303
    %v3386 = vpop.f32.mrf.mxu0
    %v3387 = vadd.f32 0.0, %v3386
    %v3388 = vpop.f32.mrf.mxu0
    %3389 = vdwg.mxu0
    %s3390 = scalar_lea.vmem %s6, 32
    %v3391 = vld [vmem:[%s3390] sm:$0xff]
    %v3392 = vld [vmem:[%s3390 + $0x8] sm:$0xff]
    %v3393 = vld [vmem:[%s3390 + $0x10] sm:$0xff]
    %v3394 = vld [vmem:[%s3390 + $0x18] sm:$0xff]
    %v3396 = vsel %vm317, %v3045, 0
    %v3399 = vsel %vm317, %v3050, 0
    %v3402 = vsel %vm317, %v3055, 0
    %v3405 = vsel %vm317, %v3060, 0
    %3407 = vmatprep.subr.mxu0 0.0
    %3408 = vmatpush1.msra.mxu0 0.0
    %3409 = vmatprep.subr.mxu0 0.0
    %3410 = vmatpush1.msra.mxu0 0.0
    %3411 = vmatprep.subr.mxu0 0.0
    %3412 = vmatpush1.msra.mxu0 0.0
    %3413 = vmatprep.subr.mxu0 0.0
    %3414 = vmatpush1.msra.mxu0 0.0
    %3415 = vmatprep.subr.mxu0 0.0
    %3416 = vmatpush1.msra.mxu0 0.0
    %3417 = vmatprep.subr.mxu0 0.0
    %3418 = vmatpush1.msra.mxu0 0.0
    %3419 = vmatprep.subr.mxu0 0.0
    %3420 = vmatpush1.msra.mxu0 0.0
    %3421 = vmatprep.subr.mxu0 0.0
    %3422 = vmatpush1.msra.mxu0 0.0
    %3423 = vmatprep.subr.mxu0 0.0
    %3424 = vmatpush1.msra.mxu0 0.0
    %3425 = vmatprep.subr.mxu0 0.0
    %3426 = vmatpush1.msra.mxu0 0.0
    %3427 = vmatprep.subr.mxu0 0.0
    %3428 = vmatpush1.msra.mxu0 0.0
    %3429 = vmatprep.subr.mxu0 0.0
    %3430 = vmatpush1.msra.mxu0 0.0
    %3431 = vmatprep.subr.mxu0 0.0
    %3432 = vmatpush1.msra.mxu0 0.0
    %3433 = vmatprep.subr.mxu0 0.0
    %3434 = vmatpush1.msra.mxu0 0.0
    %3435 = vmatprep.subr.mxu0 0.0
    %3436 = vmatpush1.msra.mxu0 0.0
    %3437 = vmatprep.subr.mxu0 0.0
    %3438 = vmatpush1.msra.mxu0 %v3391
    %3439 = vmatprep.subr.mxu0 0.0
    %3440 = vmatpush2.msra.mxu0 0.0
    %3441 = vmatprep.subr.mxu0 0.0
    %3442 = vmatpush2.msra.mxu0 0.0
    %3443 = vmatprep.subr.mxu0 0.0
    %3444 = vmatpush2.msra.mxu0 0.0
    %3445 = vmatprep.subr.mxu0 0.0
    %3446 = vmatpush2.msra.mxu0 0.0
    %3447 = vmatprep.subr.mxu0 0.0
    %3448 = vmatpush2.msra.mxu0 0.0
    %3449 = vmatprep.subr.mxu0 0.0
    %3450 = vmatpush2.msra.mxu0 0.0
    %3451 = vmatprep.subr.mxu0 0.0
    %3452 = vmatpush2.msra.mxu0 0.0
    %3453 = vmatprep.subr.mxu0 0.0
    %3454 = vmatpush2.msra.mxu0 0.0
    %3455 = vmatprep.subr.mxu0 0.0
    %3456 = vmatpush2.msra.mxu0 0.0
    %3457 = vmatprep.subr.mxu0 0.0
    %3458 = vmatpush2.msra.mxu0 0.0
    %3459 = vmatprep.subr.mxu0 0.0
    %3460 = vmatpush2.msra.mxu0 0.0
    %3461 = vmatprep.subr.mxu0 0.0
    %3462 = vmatpush2.msra.mxu0 0.0
    %3463 = vmatprep.subr.mxu0 0.0
    %3464 = vmatpush2.msra.mxu0 0.0
    %3465 = vmatprep.subr.mxu0 0.0
    %3466 = vmatpush2.msra.mxu0 0.0
    %3467 = vmatprep.subr.mxu0 0.0
    %3468 = vmatpush2.msra.mxu0 0.0
    %3469 = vmatprep.subr.mxu0 0.0
    %3470 = vmatpush2.msra.mxu0 0.0
    %3471 = vmatprep.mubr.f32.mxu0 0.0
    %3472 = vmatmul.mubr.f32.gmra.mxu0 %v3396
    %v3473 = vpop.f32.mrf.mxu0
    %v3474 = vadd.f32 0.0, %v3473
    %v3475 = vpop.f32.mrf.mxu0
    %3476 = vmatprep.mubr.f32.mxu0 0.0
    %3477 = vmatmul.mubr.f32.gmra.mxu0 %v3399
    %v3478 = vpop.f32.mrf.mxu0
    %v3479 = vadd.f32 0.0, %v3478
    %v3480 = vpop.f32.mrf.mxu0
    %3481 = vmatprep.mubr.f32.mxu0 0.0
    %3482 = vmatmul.mubr.f32.gmra.mxu0 %v3402
    %v3483 = vpop.f32.mrf.mxu0
    %v3484 = vadd.f32 0.0, %v3483
    %v3485 = vpop.f32.mrf.mxu0
    %3486 = vmatprep.mubr.f32.mxu0 0.0
    %3487 = vmatmul.mubr.f32.gmra.mxu0 %v3405
    %v3488 = vpop.f32.mrf.mxu0
    %v3489 = vadd.f32 0.0, %v3488
    %v3490 = vpop.f32.mrf.mxu0
    %3491 = vdwg.mxu0
    %v3493 = vsel %vm317, %v3154, 0
    %v3496 = vsel %vm317, %v3159, 0
    %v3499 = vsel %vm317, %v3164, 0
    %v3502 = vsel %vm317, %v3169, 0
    %3504 = vmatprep.subr.mxu0 0.0
    %3505 = vmatpush1.msra.mxu0 0.0
    %3506 = vmatprep.subr.mxu0 0.0
    %3507 = vmatpush1.msra.mxu0 0.0
    %3508 = vmatprep.subr.mxu0 0.0
    %3509 = vmatpush1.msra.mxu0 0.0
    %3510 = vmatprep.subr.mxu0 0.0
    %3511 = vmatpush1.msra.mxu0 0.0
    %3512 = vmatprep.subr.mxu0 0.0
    %3513 = vmatpush1.msra.mxu0 0.0
    %3514 = vmatprep.subr.mxu0 0.0
    %3515 = vmatpush1.msra.mxu0 0.0
    %3516 = vmatprep.subr.mxu0 0.0
    %3517 = vmatpush1.msra.mxu0 0.0
    %3518 = vmatprep.subr.mxu0 0.0
    %3519 = vmatpush1.msra.mxu0 0.0
    %3520 = vmatprep.subr.mxu0 0.0
    %3521 = vmatpush1.msra.mxu0 0.0
    %3522 = vmatprep.subr.mxu0 0.0
    %3523 = vmatpush1.msra.mxu0 0.0
    %3524 = vmatprep.subr.mxu0 0.0
    %3525 = vmatpush1.msra.mxu0 0.0
    %3526 = vmatprep.subr.mxu0 0.0
    %3527 = vmatpush1.msra.mxu0 0.0
    %3528 = vmatprep.subr.mxu0 0.0
    %3529 = vmatpush1.msra.mxu0 0.0
    %3530 = vmatprep.subr.mxu0 0.0
    %3531 = vmatpush1.msra.mxu0 0.0
    %3532 = vmatprep.subr.mxu0 0.0
    %3533 = vmatpush1.msra.mxu0 0.0
    %3534 = vmatprep.subr.mxu0 0.0
    %3535 = vmatpush1.msra.mxu0 %v3392
    %3536 = vmatprep.subr.mxu0 0.0
    %3537 = vmatpush2.msra.mxu0 0.0
    %3538 = vmatprep.subr.mxu0 0.0
    %3539 = vmatpush2.msra.mxu0 0.0
    %3540 = vmatprep.subr.mxu0 0.0
    %3541 = vmatpush2.msra.mxu0 0.0
    %3542 = vmatprep.subr.mxu0 0.0
    %3543 = vmatpush2.msra.mxu0 0.0
    %3544 = vmatprep.subr.mxu0 0.0
    %3545 = vmatpush2.msra.mxu0 0.0
    %3546 = vmatprep.subr.mxu0 0.0
    %3547 = vmatpush2.msra.mxu0 0.0
    %3548 = vmatprep.subr.mxu0 0.0
    %3549 = vmatpush2.msra.mxu0 0.0
    %3550 = vmatprep.subr.mxu0 0.0
    %3551 = vmatpush2.msra.mxu0 0.0
    %3552 = vmatprep.subr.mxu0 0.0
    %3553 = vmatpush2.msra.mxu0 0.0
    %3554 = vmatprep.subr.mxu0 0.0
    %3555 = vmatpush2.msra.mxu0 0.0
    %3556 = vmatprep.subr.mxu0 0.0
    %3557 = vmatpush2.msra.mxu0 0.0
    %3558 = vmatprep.subr.mxu0 0.0
    %3559 = vmatpush2.msra.mxu0 0.0
    %3560 = vmatprep.subr.mxu0 0.0
    %3561 = vmatpush2.msra.mxu0 0.0
    %3562 = vmatprep.subr.mxu0 0.0
    %3563 = vmatpush2.msra.mxu0 0.0
    %3564 = vmatprep.subr.mxu0 0.0
    %3565 = vmatpush2.msra.mxu0 0.0
    %3566 = vmatprep.subr.mxu0 0.0
    %3567 = vmatpush2.msra.mxu0 0.0
    %3568 = vmatprep.mubr.f32.mxu0 0.0
    %3569 = vmatmul.mubr.f32.gmra.mxu0 %v3493
    %v3570 = vpop.f32.mrf.mxu0
    %v3571 = vadd.f32 0.0, %v3570
    %v3572 = vpop.f32.mrf.mxu0
    %3573 = vmatprep.mubr.f32.mxu0 0.0
    %3574 = vmatmul.mubr.f32.gmra.mxu0 %v3496
    %v3575 = vpop.f32.mrf.mxu0
    %v3576 = vadd.f32 0.0, %v3575
    %v3577 = vpop.f32.mrf.mxu0
    %3578 = vmatprep.mubr.f32.mxu0 0.0
    %3579 = vmatmul.mubr.f32.gmra.mxu0 %v3499
    %v3580 = vpop.f32.mrf.mxu0
    %v3581 = vadd.f32 0.0, %v3580
    %v3582 = vpop.f32.mrf.mxu0
    %3583 = vmatprep.mubr.f32.mxu0 0.0
    %3584 = vmatmul.mubr.f32.gmra.mxu0 %v3502
    %v3585 = vpop.f32.mrf.mxu0
    %v3586 = vadd.f32 0.0, %v3585
    %v3587 = vpop.f32.mrf.mxu0
    %3588 = vdwg.mxu0
    %v3590 = vsel %vm317, %v3263, 0
    %v3593 = vsel %vm317, %v3268, 0
    %v3596 = vsel %vm317, %v3273, 0
    %v3599 = vsel %vm317, %v3278, 0
    %3601 = vmatprep.subr.mxu0 0.0
    %3602 = vmatpush1.msra.mxu0 0.0
    %3603 = vmatprep.subr.mxu0 0.0
    %3604 = vmatpush1.msra.mxu0 0.0
    %3605 = vmatprep.subr.mxu0 0.0
    %3606 = vmatpush1.msra.mxu0 0.0
    %3607 = vmatprep.subr.mxu0 0.0
    %3608 = vmatpush1.msra.mxu0 0.0
    %3609 = vmatprep.subr.mxu0 0.0
    %3610 = vmatpush1.msra.mxu0 0.0
    %3611 = vmatprep.subr.mxu0 0.0
    %3612 = vmatpush1.msra.mxu0 0.0
    %3613 = vmatprep.subr.mxu0 0.0
    %3614 = vmatpush1.msra.mxu0 0.0
    %3615 = vmatprep.subr.mxu0 0.0
    %3616 = vmatpush1.msra.mxu0 0.0
    %3617 = vmatprep.subr.mxu0 0.0
    %3618 = vmatpush1.msra.mxu0 0.0
    %3619 = vmatprep.subr.mxu0 0.0
    %3620 = vmatpush1.msra.mxu0 0.0
    %3621 = vmatprep.subr.mxu0 0.0
    %3622 = vmatpush1.msra.mxu0 0.0
    %3623 = vmatprep.subr.mxu0 0.0
    %3624 = vmatpush1.msra.mxu0 0.0
    %3625 = vmatprep.subr.mxu0 0.0
    %3626 = vmatpush1.msra.mxu0 0.0
    %3627 = vmatprep.subr.mxu0 0.0
    %3628 = vmatpush1.msra.mxu0 0.0
    %3629 = vmatprep.subr.mxu0 0.0
    %3630 = vmatpush1.msra.mxu0 0.0
    %3631 = vmatprep.subr.mxu0 0.0
    %3632 = vmatpush1.msra.mxu0 %v3393
    %3633 = vmatprep.subr.mxu0 0.0
    %3634 = vmatpush2.msra.mxu0 0.0
    %3635 = vmatprep.subr.mxu0 0.0
    %3636 = vmatpush2.msra.mxu0 0.0
    %3637 = vmatprep.subr.mxu0 0.0
    %3638 = vmatpush2.msra.mxu0 0.0
    %3639 = vmatprep.subr.mxu0 0.0
    %3640 = vmatpush2.msra.mxu0 0.0
    %3641 = vmatprep.subr.mxu0 0.0
    %3642 = vmatpush2.msra.mxu0 0.0
    %3643 = vmatprep.subr.mxu0 0.0
    %3644 = vmatpush2.msra.mxu0 0.0
    %3645 = vmatprep.subr.mxu0 0.0
    %3646 = vmatpush2.msra.mxu0 0.0
    %3647 = vmatprep.subr.mxu0 0.0
    %3648 = vmatpush2.msra.mxu0 0.0
    %3649 = vmatprep.subr.mxu0 0.0
    %3650 = vmatpush2.msra.mxu0 0.0
    %3651 = vmatprep.subr.mxu0 0.0
    %3652 = vmatpush2.msra.mxu0 0.0
    %3653 = vmatprep.subr.mxu0 0.0
    %3654 = vmatpush2.msra.mxu0 0.0
    %3655 = vmatprep.subr.mxu0 0.0
    %3656 = vmatpush2.msra.mxu0 0.0
    %3657 = vmatprep.subr.mxu0 0.0
    %3658 = vmatpush2.msra.mxu0 0.0
    %3659 = vmatprep.subr.mxu0 0.0
    %3660 = vmatpush2.msra.mxu0 0.0
    %3661 = vmatprep.subr.mxu0 0.0
    %3662 = vmatpush2.msra.mxu0 0.0
    %3663 = vmatprep.subr.mxu0 0.0
    %3664 = vmatpush2.msra.mxu0 0.0
    %3665 = vmatprep.mubr.f32.mxu0 0.0
    %3666 = vmatmul.mubr.f32.gmra.mxu0 %v3590
    %v3667 = vpop.f32.mrf.mxu0
    %v3668 = vadd.f32 0.0, %v3667
    %v3669 = vpop.f32.mrf.mxu0
    %3670 = vmatprep.mubr.f32.mxu0 0.0
    %3671 = vmatmul.mubr.f32.gmra.mxu0 %v3593
    %v3672 = vpop.f32.mrf.mxu0
    %v3673 = vadd.f32 0.0, %v3672
    %v3674 = vpop.f32.mrf.mxu0
    %3675 = vmatprep.mubr.f32.mxu0 0.0
    %3676 = vmatmul.mubr.f32.gmra.mxu0 %v3596
    %v3677 = vpop.f32.mrf.mxu0
    %v3678 = vadd.f32 0.0, %v3677
    %v3679 = vpop.f32.mrf.mxu0
    %3680 = vmatprep.mubr.f32.mxu0 0.0
    %3681 = vmatmul.mubr.f32.gmra.mxu0 %v3599
    %v3682 = vpop.f32.mrf.mxu0
    %v3683 = vadd.f32 0.0, %v3682
    %v3684 = vpop.f32.mrf.mxu0
    %3685 = vdwg.mxu0
    %v3687 = vsel %vm317, %v3372, 0
    %v3690 = vsel %vm317, %v3377, 0
    %v3693 = vsel %vm317, %v3382, 0
    %v3696 = vsel %vm317, %v3387, 0
    %3698 = vmatprep.subr.mxu0 0.0
    %3699 = vmatpush1.msra.mxu0 0.0
    %3700 = vmatprep.subr.mxu0 0.0
    %3701 = vmatpush1.msra.mxu0 0.0
    %3702 = vmatprep.subr.mxu0 0.0
    %3703 = vmatpush1.msra.mxu0 0.0
    %3704 = vmatprep.subr.mxu0 0.0
    %3705 = vmatpush1.msra.mxu0 0.0
    %3706 = vmatprep.subr.mxu0 0.0
    %3707 = vmatpush1.msra.mxu0 0.0
    %3708 = vmatprep.subr.mxu0 0.0
    %3709 = vmatpush1.msra.mxu0 0.0
    %3710 = vmatprep.subr.mxu0 0.0
    %3711 = vmatpush1.msra.mxu0 0.0
    %3712 = vmatprep.subr.mxu0 0.0
    %3713 = vmatpush1.msra.mxu0 0.0
    %3714 = vmatprep.subr.mxu0 0.0
    %3715 = vmatpush1.msra.mxu0 0.0
    %3716 = vmatprep.subr.mxu0 0.0
    %3717 = vmatpush1.msra.mxu0 0.0
    %3718 = vmatprep.subr.mxu0 0.0
    %3719 = vmatpush1.msra.mxu0 0.0
    %3720 = vmatprep.subr.mxu0 0.0
    %3721 = vmatpush1.msra.mxu0 0.0
    %3722 = vmatprep.subr.mxu0 0.0
    %3723 = vmatpush1.msra.mxu0 0.0
    %3724 = vmatprep.subr.mxu0 0.0
    %3725 = vmatpush1.msra.mxu0 0.0
    %3726 = vmatprep.subr.mxu0 0.0
    %3727 = vmatpush1.msra.mxu0 0.0
    %3728 = vmatprep.subr.mxu0 0.0
    %3729 = vmatpush1.msra.mxu0 %v3394
    %3730 = vmatprep.subr.mxu0 0.0
    %3731 = vmatpush2.msra.mxu0 0.0
    %3732 = vmatprep.subr.mxu0 0.0
    %3733 = vmatpush2.msra.mxu0 0.0
    %3734 = vmatprep.subr.mxu0 0.0
    %3735 = vmatpush2.msra.mxu0 0.0
    %3736 = vmatprep.subr.mxu0 0.0
    %3737 = vmatpush2.msra.mxu0 0.0
    %3738 = vmatprep.subr.mxu0 0.0
    %3739 = vmatpush2.msra.mxu0 0.0
    %3740 = vmatprep.subr.mxu0 0.0
    %3741 = vmatpush2.msra.mxu0 0.0
    %3742 = vmatprep.subr.mxu0 0.0
    %3743 = vmatpush2.msra.mxu0 0.0
    %3744 = vmatprep.subr.mxu0 0.0
    %3745 = vmatpush2.msra.mxu0 0.0
    %3746 = vmatprep.subr.mxu0 0.0
    %3747 = vmatpush2.msra.mxu0 0.0
    %3748 = vmatprep.subr.mxu0 0.0
    %3749 = vmatpush2.msra.mxu0 0.0
    %3750 = vmatprep.subr.mxu0 0.0
    %3751 = vmatpush2.msra.mxu0 0.0
    %3752 = vmatprep.subr.mxu0 0.0
    %3753 = vmatpush2.msra.mxu0 0.0
    %3754 = vmatprep.subr.mxu0 0.0
    %3755 = vmatpush2.msra.mxu0 0.0
    %3756 = vmatprep.subr.mxu0 0.0
    %3757 = vmatpush2.msra.mxu0 0.0
    %3758 = vmatprep.subr.mxu0 0.0
    %3759 = vmatpush2.msra.mxu0 0.0
    %3760 = vmatprep.subr.mxu0 0.0
    %3761 = vmatpush2.msra.mxu0 0.0
    %3762 = vmatprep.mubr.f32.mxu0 0.0
    %3763 = vmatmul.mubr.f32.gmra.mxu0 %v3687
    %v3764 = vpop.f32.mrf.mxu0
    %v3765 = vadd.f32 0.0, %v3764
    %v3766 = vpop.f32.mrf.mxu0
    %3767 = vmatprep.mubr.f32.mxu0 0.0
    %3768 = vmatmul.mubr.f32.gmra.mxu0 %v3690
    %v3769 = vpop.f32.mrf.mxu0
    %v3770 = vadd.f32 0.0, %v3769
    %v3771 = vpop.f32.mrf.mxu0
    %3772 = vmatprep.mubr.f32.mxu0 0.0
    %3773 = vmatmul.mubr.f32.gmra.mxu0 %v3693
    %v3774 = vpop.f32.mrf.mxu0
    %v3775 = vadd.f32 0.0, %v3774
    %v3776 = vpop.f32.mrf.mxu0
    %3777 = vmatprep.mubr.f32.mxu0 0.0
    %3778 = vmatmul.mubr.f32.gmra.mxu0 %v3696
    %v3779 = vpop.f32.mrf.mxu0
    %v3780 = vadd.f32 0.0, %v3779
    %v3781 = vpop.f32.mrf.mxu0
    %3782 = vdwg.mxu0
    %v3783 = vsel %vm67, %v3474, 0.0
    %v3784 = vsel %vm67, %v3571, 0.0
    %v3785 = vadd.f32 %v3783, %v3784
    %v3786 = vsel %vm67, %v3668, 0.0
    %v3787 = vadd.f32 %v3785, %v3786
    %v3788 = vsel %vm67, %v3765, 0.0
    %v3789 = vadd.f32 %v3787, %v3788
    %v3790 = vsel %vm67, %v3479, 0.0
    %v3791 = vsel %vm67, %v3576, 0.0
    %v3792 = vadd.f32 %v3790, %v3791
    %v3793 = vsel %vm67, %v3673, 0.0
    %v3794 = vadd.f32 %v3792, %v3793
    %v3795 = vsel %vm67, %v3770, 0.0
    %v3796 = vadd.f32 %v3794, %v3795
    %v3797 = vsel %vm67, %v3484, 0.0
    %v3798 = vsel %vm67, %v3581, 0.0
    %v3799 = vadd.f32 %v3797, %v3798
    %v3800 = vsel %vm67, %v3678, 0.0
    %v3801 = vadd.f32 %v3799, %v3800
    %v3802 = vsel %vm67, %v3775, 0.0
    %v3803 = vadd.f32 %v3801, %v3802
    %v3804 = vsel %vm67, %v3489, 0.0
    %v3805 = vsel %vm67, %v3586, 0.0
    %v3806 = vadd.f32 %v3804, %v3805
    %v3807 = vsel %vm67, %v3683, 0.0
    %v3808 = vadd.f32 %v3806, %v3807
    %v3809 = vsel %vm67, %v3780, 0.0
    %v3810 = vadd.f32 %v3808, %v3809
    %s3811 = scalar_lea.vmem %s7, 1
    %v3812 = vld [vmem:[%s3811] sm:$0x1]
    %v3814 = vlaneseq
    %v3815 = vshrl.u32 %v3814, 7
    %v3816 = vsub.s32 0, %v3815
    %v3817 = vrot.slane %v3812, %v3816
    %v3819 = vadd.f32 %v3789, %v3817
    %v3820 = vadd.f32 %v3796, %v3817
    %v3821 = vadd.f32 %v3803, %v3817
    %v3822 = vadd.f32 %v3810, %v3817
    %v3823 = vadd.f32 %v2168, %v3819
    %v3824 = vadd.f32 %v2169, %v3820
    %v3825 = vadd.f32 %v2170, %v3821
    %v3826 = vadd.f32 %v2171, %v3822
    %s3827 = scalar_lea.vmem %s8, 1
    %v3828 = vld [vmem:[%s3827] sm:$0x1]
    %s3829 = scalar_lea.vmem %s9, 1
    %v3830 = vld [vmem:[%s3829] sm:$0x1]
    %v3831 = vsel %vm67, %v3823, 0.0
    %3832 = vadd.xlane.f32.xlu0 %v3831
    %v3833 = vpop.xlane.xlu0 %3832
    %v3834 = vsel %vm67, %v3824, 0.0
    %3835 = vadd.xlane.f32.xlu0 %v3834
    %v3836 = vpop.xlane.xlu0 %3835
    %v3837 = vsel %vm67, %v3825, 0.0
    %3838 = vadd.xlane.f32.xlu0 %v3837
    %v3839 = vpop.xlane.xlu0 %3838
    %v3840 = vsel %vm67, %v3826, 0.0
    %3841 = vadd.xlane.f32.xlu0 %v3840
    %v3842 = vpop.xlane.xlu0 %3841
    %v3843 = vmul.f32 %v3833, %v80
    %v3844 = vmul.f32 %v3836, %v80
    %v3845 = vmul.f32 %v3839, %v80
    %v3846 = vmul.f32 %v3842, %v80
    %v3847 = vsub.f32 %v3823, %v3843
    %v3848 = vsub.f32 %v3824, %v3844
    %v3849 = vsub.f32 %v3825, %v3845
    %v3850 = vsub.f32 %v3826, %v3846
    %v3851 = vmul.f32 %v3847, %v3847
    %v3852 = vmul.f32 %v3848, %v3848
    %v3853 = vmul.f32 %v3849, %v3849
    %v3854 = vmul.f32 %v3850, %v3850
    %v3855 = vsel %vm67, %v3851, 0.0
    %3856 = vadd.xlane.f32.xlu0 %v3855
    %v3857 = vpop.xlane.xlu0 %3856
    %v3858 = vsel %vm67, %v3852, 0.0
    %3859 = vadd.xlane.f32.xlu0 %v3858
    %v3860 = vpop.xlane.xlu0 %3859
    %v3861 = vsel %vm67, %v3853, 0.0
    %3862 = vadd.xlane.f32.xlu0 %v3861
    %v3863 = vpop.xlane.xlu0 %3862
    %v3864 = vsel %vm67, %v3854, 0.0
    %3865 = vadd.xlane.f32.xlu0 %v3864
    %v3866 = vpop.xlane.xlu0 %3865
    %v3867 = vmul.f32 %v3857, %v80
    %v3868 = vmul.f32 %v3860, %v80
    %v3869 = vmul.f32 %v3863, %v80
    %v3870 = vmul.f32 %v3866, %v80
    %v3871 = vadd.f32 %v3867, 1e-05
    %v3872 = vadd.f32 %v3868, 1e-05
    %v3873 = vadd.f32 %v3869, 1e-05
    %v3874 = vadd.f32 %v3870, 1e-05
    %v3875 = vrsqrt.pop %v3871
    %v3876 = vrsqrt.pop %v3872
    %v3877 = vrsqrt.pop %v3873
    %v3878 = vrsqrt.pop %v3874
    %v3879 = vmul.f32 %v3847, %v3875
    %v3880 = vmul.f32 %v3848, %v3876
    %v3881 = vmul.f32 %v3849, %v3877
    %v3882 = vmul.f32 %v3850, %v3878
    %v3884 = vlaneseq
    %v3885 = vshrl.u32 %v3884, 7
    %v3886 = vsub.s32 0, %v3885
    %v3887 = vrot.slane %v3828, %v3886
    %v3889 = vmul.f32 %v3879, %v3887
    %v3890 = vmul.f32 %v3880, %v3887
    %v3891 = vmul.f32 %v3881, %v3887
    %v3892 = vmul.f32 %v3882, %v3887
    %v3894 = vlaneseq
    %v3895 = vshrl.u32 %v3894, 7
    %v3896 = vsub.s32 0, %v3895
    %v3897 = vrot.slane %v3830, %v3896
    %v3899 = vadd.f32 %v3889, %v3897
    %v3900 = vadd.f32 %v3890, %v3897
    %v3901 = vadd.f32 %v3891, %v3897
    %v3902 = vadd.f32 %v3892, %v3897
    %s3903 = scalar_lea.vmem %s10, 32
    %v3904 = vld [vmem:[%s3903] sm:$0xff]
    %v3905 = vld [vmem:[%s3903 + $0x8] sm:$0xff]
    %v3906 = vld [vmem:[%s3903 + $0x10] sm:$0xff]
    %v3907 = vld [vmem:[%s3903 + $0x18] sm:$0xff]
    %s3908 = scalar_lea.vmem %s11, 1
    %v3909 = vld [vmem:[%s3908] sm:$0x1]
    %v3911 = vlaneseq
    %v3912 = vshrl.u32 %v3911, 7
    %v3913 = vsub.s32 0, %v3912
    %v3914 = vrot.slane %v3909, %v3913
    %v3917 = vsel %vm67, %v3899, 0
    %v3920 = vsel %vm67, %v3900, 0
    %v3923 = vsel %vm67, %v3901, 0
    %v3926 = vsel %vm67, %v3902, 0
    %3928 = vmatprep.subr.mxu0 0.0
    %3929 = vmatpush1.msra.mxu0 0.0
    %3930 = vmatprep.subr.mxu0 0.0
    %3931 = vmatpush1.msra.mxu0 0.0
    %3932 = vmatprep.subr.mxu0 0.0
    %3933 = vmatpush1.msra.mxu0 0.0
    %3934 = vmatprep.subr.mxu0 0.0
    %3935 = vmatpush1.msra.mxu0 0.0
    %3936 = vmatprep.subr.mxu0 0.0
    %3937 = vmatpush1.msra.mxu0 0.0
    %3938 = vmatprep.subr.mxu0 0.0
    %3939 = vmatpush1.msra.mxu0 0.0
    %3940 = vmatprep.subr.mxu0 0.0
    %3941 = vmatpush1.msra.mxu0 0.0
    %3942 = vmatprep.subr.mxu0 0.0
    %3943 = vmatpush1.msra.mxu0 0.0
    %3944 = vmatprep.subr.mxu0 0.0
    %3945 = vmatpush1.msra.mxu0 0.0
    %3946 = vmatprep.subr.mxu0 0.0
    %3947 = vmatpush1.msra.mxu0 0.0
    %3948 = vmatprep.subr.mxu0 0.0
    %3949 = vmatpush1.msra.mxu0 0.0
    %3950 = vmatprep.subr.mxu0 0.0
    %3951 = vmatpush1.msra.mxu0 0.0
    %3952 = vmatprep.subr.mxu0 0.0
    %3953 = vmatpush1.msra.mxu0 %v3907
    %3954 = vmatprep.subr.mxu0 0.0
    %3955 = vmatpush1.msra.mxu0 %v3906
    %3956 = vmatprep.subr.mxu0 0.0
    %3957 = vmatpush1.msra.mxu0 %v3905
    %3958 = vmatprep.subr.mxu0 0.0
    %3959 = vmatpush1.msra.mxu0 %v3904
    %3960 = vmatprep.subr.mxu0 0.0
    %3961 = vmatpush2.msra.mxu0 0.0
    %3962 = vmatprep.subr.mxu0 0.0
    %3963 = vmatpush2.msra.mxu0 0.0
    %3964 = vmatprep.subr.mxu0 0.0
    %3965 = vmatpush2.msra.mxu0 0.0
    %3966 = vmatprep.subr.mxu0 0.0
    %3967 = vmatpush2.msra.mxu0 0.0
    %3968 = vmatprep.subr.mxu0 0.0
    %3969 = vmatpush2.msra.mxu0 0.0
    %3970 = vmatprep.subr.mxu0 0.0
    %3971 = vmatpush2.msra.mxu0 0.0
    %3972 = vmatprep.subr.mxu0 0.0
    %3973 = vmatpush2.msra.mxu0 0.0
    %3974 = vmatprep.subr.mxu0 0.0
    %3975 = vmatpush2.msra.mxu0 0.0
    %3976 = vmatprep.subr.mxu0 0.0
    %3977 = vmatpush2.msra.mxu0 0.0
    %3978 = vmatprep.subr.mxu0 0.0
    %3979 = vmatpush2.msra.mxu0 0.0
    %3980 = vmatprep.subr.mxu0 0.0
    %3981 = vmatpush2.msra.mxu0 0.0
    %3982 = vmatprep.subr.mxu0 0.0
    %3983 = vmatpush2.msra.mxu0 0.0
    %3984 = vmatprep.subr.mxu0 0.0
    %3985 = vmatpush2.msra.mxu0 0.0
    %3986 = vmatprep.subr.mxu0 0.0
    %3987 = vmatpush2.msra.mxu0 0.0
    %3988 = vmatprep.subr.mxu0 0.0
    %3989 = vmatpush2.msra.mxu0 0.0
    %3990 = vmatprep.subr.mxu0 0.0
    %3991 = vmatpush2.msra.mxu0 0.0
    %3992 = vmatprep.mubr.f32.mxu0 0.0
    %3993 = vmatmul.mubr.f32.gmra.mxu0 %v3917
    %v3994 = vpop.f32.mrf.mxu0
    %v3995 = vadd.f32 %v3914, %v3994
    %v3996 = vpop.f32.mrf.mxu0
    %3997 = vmatprep.mubr.f32.mxu0 0.0
    %3998 = vmatmul.mubr.f32.gmra.mxu0 %v3920
    %v3999 = vpop.f32.mrf.mxu0
    %v4000 = vadd.f32 %v3914, %v3999
    %v4001 = vpop.f32.mrf.mxu0
    %4002 = vmatprep.mubr.f32.mxu0 0.0
    %4003 = vmatmul.mubr.f32.gmra.mxu0 %v3923
    %v4004 = vpop.f32.mrf.mxu0
    %v4005 = vadd.f32 %v3914, %v4004
    %v4006 = vpop.f32.mrf.mxu0
    %4007 = vmatprep.mubr.f32.mxu0 0.0
    %4008 = vmatmul.mubr.f32.gmra.mxu0 %v3926
    %v4009 = vpop.f32.mrf.mxu0
    %v4010 = vadd.f32 %v3914, %v4009
    %v4011 = vpop.f32.mrf.mxu0
    %4012 = vdwg.mxu0
    %v4013 = vmax.f32 %v3995, 0.0
    %v4014 = vmax.f32 %v4000, 0.0
    %v4015 = vmax.f32 %v4005, 0.0
    %v4016 = vmax.f32 %v4010, 0.0
    %s4017 = scalar_lea.vmem %s12, 64
    %v4018 = vld [vmem:[%s4017] sm:$0xff]
    %v4019 = vld [vmem:[%s4017 + $0x8] sm:$0xff]
    %v4020 = vld [vmem:[%s4017 + $0x10] sm:$0xff]
    %v4021 = vld [vmem:[%s4017 + $0x18] sm:$0xff]
    %v4022 = vld [vmem:[%s4017 + $0x20] sm:$0xff]
    %v4023 = vld [vmem:[%s4017 + $0x28] sm:$0xff]
    %v4024 = vld [vmem:[%s4017 + $0x30] sm:$0xff]
    %v4025 = vld [vmem:[%s4017 + $0x38] sm:$0xff]
    %s4026 = scalar_lea.vmem %s13, 1
    %v4027 = vld [vmem:[%s4026] sm:$0x1]
    %v4029 = vlaneseq
    %v4030 = vshrl.u32 %v4029, 7
    %v4031 = vsub.s32 0, %v4030
    %v4032 = vrot.slane %v4027, %v4031
    %v4035 = vsel %vm1994, %v4013, 0
    %v4038 = vsel %vm1994, %v4014, 0
    %v4041 = vsel %vm1994, %v4015, 0
    %v4044 = vsel %vm1994, %v4016, 0
    %4046 = vmatprep.subr.mxu0 0.0
    %4047 = vmatpush1.msra.mxu0 0.0
    %4048 = vmatprep.subr.mxu0 0.0
    %4049 = vmatpush1.msra.mxu0 0.0
    %4050 = vmatprep.subr.mxu0 0.0
    %4051 = vmatpush1.msra.mxu0 0.0
    %4052 = vmatprep.subr.mxu0 0.0
    %4053 = vmatpush1.msra.mxu0 0.0
    %4054 = vmatprep.subr.mxu0 0.0
    %4055 = vmatpush1.msra.mxu0 0.0
    %4056 = vmatprep.subr.mxu0 0.0
    %4057 = vmatpush1.msra.mxu0 0.0
    %4058 = vmatprep.subr.mxu0 0.0
    %4059 = vmatpush1.msra.mxu0 0.0
    %4060 = vmatprep.subr.mxu0 0.0
    %4061 = vmatpush1.msra.mxu0 0.0
    %4062 = vmatprep.subr.mxu0 0.0
    %4063 = vmatpush1.msra.mxu0 %v4025
    %4064 = vmatprep.subr.mxu0 0.0
    %4065 = vmatpush1.msra.mxu0 %v4024
    %4066 = vmatprep.subr.mxu0 0.0
    %4067 = vmatpush1.msra.mxu0 %v4023
    %4068 = vmatprep.subr.mxu0 0.0
    %4069 = vmatpush1.msra.mxu0 %v4022
    %4070 = vmatprep.subr.mxu0 0.0
    %4071 = vmatpush1.msra.mxu0 %v4021
    %4072 = vmatprep.subr.mxu0 0.0
    %4073 = vmatpush1.msra.mxu0 %v4020
    %4074 = vmatprep.subr.mxu0 0.0
    %4075 = vmatpush1.msra.mxu0 %v4019
    %4076 = vmatprep.subr.mxu0 0.0
    %4077 = vmatpush1.msra.mxu0 %v4018
    %4078 = vmatprep.subr.mxu0 0.0
    %4079 = vmatpush2.msra.mxu0 0.0
    %4080 = vmatprep.subr.mxu0 0.0
    %4081 = vmatpush2.msra.mxu0 0.0
    %4082 = vmatprep.subr.mxu0 0.0
    %4083 = vmatpush2.msra.mxu0 0.0
    %4084 = vmatprep.subr.mxu0 0.0
    %4085 = vmatpush2.msra.mxu0 0.0
    %4086 = vmatprep.subr.mxu0 0.0
    %4087 = vmatpush2.msra.mxu0 0.0
    %4088 = vmatprep.subr.mxu0 0.0
    %4089 = vmatpush2.msra.mxu0 0.0
    %4090 = vmatprep.subr.mxu0 0.0
    %4091 = vmatpush2.msra.mxu0 0.0
    %4092 = vmatprep.subr.mxu0 0.0
    %4093 = vmatpush2.msra.mxu0 0.0
    %4094 = vmatprep.subr.mxu0 0.0
    %4095 = vmatpush2.msra.mxu0 0.0
    %4096 = vmatprep.subr.mxu0 0.0
    %4097 = vmatpush2.msra.mxu0 0.0
    %4098 = vmatprep.subr.mxu0 0.0
    %4099 = vmatpush2.msra.mxu0 0.0
    %4100 = vmatprep.subr.mxu0 0.0
    %4101 = vmatpush2.msra.mxu0 0.0
    %4102 = vmatprep.subr.mxu0 0.0
    %4103 = vmatpush2.msra.mxu0 0.0
    %4104 = vmatprep.subr.mxu0 0.0
    %4105 = vmatpush2.msra.mxu0 0.0
    %4106 = vmatprep.subr.mxu0 0.0
    %4107 = vmatpush2.msra.mxu0 0.0
    %4108 = vmatprep.subr.mxu0 0.0
    %4109 = vmatpush2.msra.mxu0 0.0
    %4110 = vmatprep.mubr.f32.mxu0 0.0
    %4111 = vmatmul.mubr.f32.gmra.mxu0 %v4035
    %v4112 = vpop.f32.mrf.mxu0
    %v4113 = vadd.f32 %v4032, %v4112
    %v4114 = vpop.f32.mrf.mxu0
    %4115 = vmatprep.mubr.f32.mxu0 0.0
    %4116 = vmatmul.mubr.f32.gmra.mxu0 %v4038
    %v4117 = vpop.f32.mrf.mxu0
    %v4118 = vadd.f32 %v4032, %v4117
    %v4119 = vpop.f32.mrf.mxu0
    %4120 = vmatprep.mubr.f32.mxu0 0.0
    %4121 = vmatmul.mubr.f32.gmra.mxu0 %v4041
    %v4122 = vpop.f32.mrf.mxu0
    %v4123 = vadd.f32 %v4032, %v4122
    %v4124 = vpop.f32.mrf.mxu0
    %4125 = vmatprep.mubr.f32.mxu0 0.0
    %4126 = vmatmul.mubr.f32.gmra.mxu0 %v4044
    %v4127 = vpop.f32.mrf.mxu0
    %v4128 = vadd.f32 %v4032, %v4127
    %v4129 = vpop.f32.mrf.mxu0
    %4130 = vdwg.mxu0
    %v4131 = vadd.f32 %v3823, %v4113
    %v4132 = vadd.f32 %v3824, %v4118
    %v4133 = vadd.f32 %v3825, %v4123
    %v4134 = vadd.f32 %v3826, %v4128
    %v4135 = vld [vmem:[%s14] sm:$0x1]
    %v4136 = vld [vmem:[%s15] sm:$0x1]
    %v4137 = vsel %vm67, %v4131, 0.0
    %4138 = vadd.xlane.f32.xlu0 %v4137
    %v4139 = vpop.xlane.xlu0 %4138
    %v4140 = vsel %vm67, %v4132, 0.0
    %4141 = vadd.xlane.f32.xlu0 %v4140
    %v4142 = vpop.xlane.xlu0 %4141
    %v4143 = vsel %vm67, %v4133, 0.0
    %4144 = vadd.xlane.f32.xlu0 %v4143
    %v4145 = vpop.xlane.xlu0 %4144
    %v4146 = vsel %vm67, %v4134, 0.0
    %4147 = vadd.xlane.f32.xlu0 %v4146
    %v4148 = vpop.xlane.xlu0 %4147
    %v4149 = vmul.f32 %v4139, %v80
    %v4150 = vmul.f32 %v4142, %v80
    %v4151 = vmul.f32 %v4145, %v80
    %v4152 = vmul.f32 %v4148, %v80
    %v4153 = vsub.f32 %v4131, %v4149
    %v4154 = vsub.f32 %v4132, %v4150
    %v4155 = vsub.f32 %v4133, %v4151
    %v4156 = vsub.f32 %v4134, %v4152
    %v4157 = vmul.f32 %v4153, %v4153
    %v4158 = vmul.f32 %v4154, %v4154
    %v4159 = vmul.f32 %v4155, %v4155
    %v4160 = vmul.f32 %v4156, %v4156
    %v4161 = vsel %vm67, %v4157, 0.0
    %4162 = vadd.xlane.f32.xlu0 %v4161
    %v4163 = vpop.xlane.xlu0 %4162
    %v4164 = vsel %vm67, %v4158, 0.0
    %4165 = vadd.xlane.f32.xlu0 %v4164
    %v4166 = vpop.xlane.xlu0 %4165
    %v4167 = vsel %vm67, %v4159, 0.0
    %4168 = vadd.xlane.f32.xlu0 %v4167
    %v4169 = vpop.xlane.xlu0 %4168
    %v4170 = vsel %vm67, %v4160, 0.0
    %4171 = vadd.xlane.f32.xlu0 %v4170
    %v4172 = vpop.xlane.xlu0 %4171
    %v4173 = vmul.f32 %v4163, %v80
    %v4174 = vmul.f32 %v4166, %v80
    %v4175 = vmul.f32 %v4169, %v80
    %v4176 = vmul.f32 %v4172, %v80
    %v4177 = vadd.f32 %v4173, 1e-05
    %v4178 = vadd.f32 %v4174, 1e-05
    %v4179 = vadd.f32 %v4175, 1e-05
    %v4180 = vadd.f32 %v4176, 1e-05
    %v4181 = vrsqrt.pop %v4177
    %v4182 = vrsqrt.pop %v4178
    %v4183 = vrsqrt.pop %v4179
    %v4184 = vrsqrt.pop %v4180
    %v4185 = vmul.f32 %v4153, %v4181
    %v4186 = vmul.f32 %v4154, %v4182
    %v4187 = vmul.f32 %v4155, %v4183
    %v4188 = vmul.f32 %v4156, %v4184
    %v4190 = vlaneseq
    %v4191 = vshrl.u32 %v4190, 7
    %v4192 = vsub.s32 0, %v4191
    %v4193 = vrot.slane %v4135, %v4192
    %v4195 = vmul.f32 %v4185, %v4193
    %v4196 = vmul.f32 %v4186, %v4193
    %v4197 = vmul.f32 %v4187, %v4193
    %v4198 = vmul.f32 %v4188, %v4193
    %v4200 = vlaneseq
    %v4201 = vshrl.u32 %v4200, 7
    %v4202 = vsub.s32 0, %v4201
    %v4203 = vrot.slane %v4136, %v4202
    %v4205 = vadd.f32 %v4195, %v4203
    %v4206 = vadd.f32 %v4196, %v4203
    %v4207 = vadd.f32 %v4197, %v4203
    %v4208 = vadd.f32 %v4198, %v4203
    %v4209 = vld [vmem:[%s16] sm:$0xff]
    %v4210 = vld [vmem:[%s16 + $0x8] sm:$0xff]
    %v4211 = vld [vmem:[%s16 + $0x10] sm:$0xff]
    %v4212 = vld [vmem:[%s16 + $0x18] sm:$0xff]
    %v4214 = vsel %vm67, %v4205, 0
    %v4217 = vsel %vm67, %v4206, 0
    %v4220 = vsel %vm67, %v4207, 0
    %v4223 = vsel %vm67, %v4208, 0
    %4225 = vmatprep.subr.mxu0 0.0
    %4226 = vmatpush1.msra.mxu0 0.0
    %4227 = vmatprep.subr.mxu0 0.0
    %4228 = vmatpush1.msra.mxu0 0.0
    %4229 = vmatprep.subr.mxu0 0.0
    %4230 = vmatpush1.msra.mxu0 0.0
    %4231 = vmatprep.subr.mxu0 0.0
    %4232 = vmatpush1.msra.mxu0 0.0
    %4233 = vmatprep.subr.mxu0 0.0
    %4234 = vmatpush1.msra.mxu0 0.0
    %4235 = vmatprep.subr.mxu0 0.0
    %4236 = vmatpush1.msra.mxu0 0.0
    %4237 = vmatprep.subr.mxu0 0.0
    %4238 = vmatpush1.msra.mxu0 0.0
    %4239 = vmatprep.subr.mxu0 0.0
    %4240 = vmatpush1.msra.mxu0 0.0
    %4241 = vmatprep.subr.mxu0 0.0
    %4242 = vmatpush1.msra.mxu0 0.0
    %4243 = vmatprep.subr.mxu0 0.0
    %4244 = vmatpush1.msra.mxu0 0.0
    %4245 = vmatprep.subr.mxu0 0.0
    %4246 = vmatpush1.msra.mxu0 0.0
    %4247 = vmatprep.subr.mxu0 0.0
    %4248 = vmatpush1.msra.mxu0 0.0
    %4249 = vmatprep.subr.mxu0 0.0
    %4250 = vmatpush1.msra.mxu0 %v4212
    %4251 = vmatprep.subr.mxu0 0.0
    %4252 = vmatpush1.msra.mxu0 %v4211
    %4253 = vmatprep.subr.mxu0 0.0
    %4254 = vmatpush1.msra.mxu0 %v4210
    %4255 = vmatprep.subr.mxu0 0.0
    %4256 = vmatpush1.msra.mxu0 %v4209
    %4257 = vmatprep.subr.mxu0 0.0
    %4258 = vmatpush2.msra.mxu0 0.0
    %4259 = vmatprep.subr.mxu0 0.0
    %4260 = vmatpush2.msra.mxu0 0.0
    %4261 = vmatprep.subr.mxu0 0.0
    %4262 = vmatpush2.msra.mxu0 0.0
    %4263 = vmatprep.subr.mxu0 0.0
    %4264 = vmatpush2.msra.mxu0 0.0
    %4265 = vmatprep.subr.mxu0 0.0
    %4266 = vmatpush2.msra.mxu0 0.0
    %4267 = vmatprep.subr.mxu0 0.0
    %4268 = vmatpush2.msra.mxu0 0.0
    %4269 = vmatprep.subr.mxu0 0.0
    %4270 = vmatpush2.msra.mxu0 0.0
    %4271 = vmatprep.subr.mxu0 0.0
    %4272 = vmatpush2.msra.mxu0 0.0
    %4273 = vmatprep.subr.mxu0 0.0
    %4274 = vmatpush2.msra.mxu0 0.0
    %4275 = vmatprep.subr.mxu0 0.0
    %4276 = vmatpush2.msra.mxu0 0.0
    %4277 = vmatprep.subr.mxu0 0.0
    %4278 = vmatpush2.msra.mxu0 0.0
    %4279 = vmatprep.subr.mxu0 0.0
    %4280 = vmatpush2.msra.mxu0 0.0
    %4281 = vmatprep.subr.mxu0 0.0
    %4282 = vmatpush2.msra.mxu0 0.0
    %4283 = vmatprep.subr.mxu0 0.0
    %4284 = vmatpush2.msra.mxu0 0.0
    %4285 = vmatprep.subr.mxu0 0.0
    %4286 = vmatpush2.msra.mxu0 0.0
    %4287 = vmatprep.subr.mxu0 0.0
    %4288 = vmatpush2.msra.mxu0 0.0
    %4289 = vmatprep.mubr.f32.mxu0 0.0
    %4290 = vmatmul.mubr.f32.gmra.mxu0 %v4214
    %v4291 = vpop.f32.mrf.mxu0
    %v4292 = vadd.f32 0.0, %v4291
    %v4293 = vpop.f32.mrf.mxu0
    %4294 = vmatprep.mubr.f32.mxu0 0.0
    %4295 = vmatmul.mubr.f32.gmra.mxu0 %v4217
    %v4296 = vpop.f32.mrf.mxu0
    %v4297 = vadd.f32 0.0, %v4296
    %v4298 = vpop.f32.mrf.mxu0
    %4299 = vmatprep.mubr.f32.mxu0 0.0
    %4300 = vmatmul.mubr.f32.gmra.mxu0 %v4220
    %v4301 = vpop.f32.mrf.mxu0
    %v4302 = vadd.f32 0.0, %v4301
    %v4303 = vpop.f32.mrf.mxu0
    %4304 = vmatprep.mubr.f32.mxu0 0.0
    %4305 = vmatmul.mubr.f32.gmra.mxu0 %v4223
    %v4306 = vpop.f32.mrf.mxu0
    %v4307 = vadd.f32 0.0, %v4306
    %v4308 = vpop.f32.mrf.mxu0
    %4309 = vdwg.mxu0
    %4310 = vst [vmem:[#allocation2] sm:$0xff] %v4292
    %4311 = vst [vmem:[#allocation2 + $0x8] sm:$0xff] %v4297
    %4312 = vst [vmem:[#allocation2 + $0x10] sm:$0xff] %v4302
    %4313 = vst [vmem:[#allocation2 + $0x18] sm:$0xff] %v4307
    // Predicated region
    $region70: #{transformer_forward.1} parent=1 // pred_check
      _
    $region71: #{transformer_forward.1} parent=1 // pred_check_branch
      %4315 = sbr.rel (0) target = $region73
    $region72: #{transformer_forward.1} parent=1 // pred_region
      %s4317 = ssub.s32 512, 512
      %4318 = vsyncadd [#allocation3], %s4317
      %s4319 = sshll.u32 [#allocation2], 4
      %s4320 = int_to_ptr.vmem [resolvable:$true] %s4319
      %4325 = dma.vmem_to_hbm [thread:$0]  %s4320, 512, %s17, [#allocation3], 128, 128, 8
    $region73: #{transformer_forward.1} parent=1 // pred_fallthru
      _
    // Predicated region
    $region74: #{transformer_forward.1} parent=1 // pred_check
      _
    $region75: #{transformer_forward.1} parent=1 // pred_check_branch
      %4327 = sbr.rel (0) target = $region77
    $region76: #{transformer_forward.1} parent=1 // pred_region
      %4328 = dma.done [#allocation3], 512
    $region77: #{transformer_forward.1} parent=1 // pred_fallthru
      _
    %4329 = vsyncpa [#allocation3], 1

</llo_original>
